<compile_context>
chip_gen: v6e
topology: v6e:2x2x1
jax: 0.10.0
libtpu: 0.0.40
codegen_flags: <defaults>
</compile_context>

<pallas_src>
import jax
import jax.numpy as jnp
from jax import lax
from jax.experimental import pallas as pl
from jax.experimental.pallas import tpu as pltpu

EPS = 1e-5  # RMSNorm eps


def _silu(x):
    return x * (1.0 / (1.0 + jnp.exp(-x)))


def _softplus(x):
    # torch.nn.functional.softplus (threshold=20); clamp the exp argument so the
    # dead branch never produces inf.
    return jnp.where(x > 20.0, x, jnp.log(1.0 + jnp.exp(jnp.minimum(x, 20.0))))


def mamba_kernel(x_ref, g_ref, win_ref, bin_ref, wcv_ref, bcv_ref,
                 wcl_ref, bcl_ref, w123_ref, b123_ref, wo_ref, bo_ref, o_ref):
    Bt, L, D = x_ref.shape
    D2 = 2 * D
    N = (w123_ref.shape[-1] - D2) // 2          # state_size
    n_layers = g_ref.shape[0]
    rows = Bt * L

    xb = x_ref[...].reshape(rows, D)            # (Bt*L, D) f32
    zc3 = jnp.zeros((Bt, L, 1), jnp.float32)    # shared zero column for conv padding

    for layer in range(n_layers):               # layers chained in-kernel (no HBM trip)
        g = g_ref[layer]                                    # (1, D)
        win, bin_b = win_ref[layer], bin_ref[layer]         # (D, 4D) bf16, (1, 4D) f32
        wcv, bcv = wcv_ref[layer], bcv_ref[layer]           # (L, 3L) bf16, (L, 1) f32
        wcl, bcl = wcl_ref[layer], bcl_ref[layer]           # (2D, 2D) bf16, (1, 2D)
        w123, b123 = w123_ref[layer], b123_ref[layer]       # (2D, 2D+2N) bf16
        wo, bo = wo_ref[layer], bo_ref[layer]               # (2D, D) bf16, (1, D)

        # ---- RMSNorm (f32 elementwise) ----
        ms = jnp.mean(xb * xb, axis=-1, keepdims=True)
        xn = xb * lax.rsqrt(ms + EPS) * g

        # ---- fused inp_proj | D : one (rows, D) @ (D, 4D) MXU pass ----
        proj = jnp.dot(xn.astype(jnp.bfloat16), win,
                       preferred_element_type=jnp.float32) + bin_b
        xp = proj[:, :D2]                 # inp_proj(x_norm)
        x_res_pre = proj[:, D2:]          # D(x_norm), pre-SiLU

        # ---- Conv1d(seq_len, seq_len, k=3, pad=1): channels = positions,
        #      width = features.  Zero padding via shifted copies; the three
        #      taps fuse into ONE batched (L, 3L) x (Bt, 3L, 2D) einsum.
        xp3 = xp.reshape(Bt, L, D2)
        xr3 = jnp.concatenate([zc3, xp3[:, :, :D2 - 1]], axis=2)   # x[:, :, w-1] (0 at w=0)
        xl3 = jnp.concatenate([xp3[:, :, 1:], zc3], axis=2)        # x[:, :, w+1] (0 at w=W-1)
        xcat = jnp.concatenate([xr3, xp3, xl3], axis=1).astype(jnp.bfloat16)   # (Bt, 3L, 2D)
        xc = (jnp.einsum("ok,bkd->bod", wcv, xcat,
                         preferred_element_type=jnp.float32)
              + bcv[None, :, :]).reshape(rows, D2)

        # ---- SiLU + conv_linear ----
        xca = _silu(xc)
        xco = jnp.dot(xca.astype(jnp.bfloat16), wcl,
                      preferred_element_type=jnp.float32) + bcl

        # ---- S6 with fused [fc1 | fc2 | fc3]; h==0 every forward so the
        #      exp(delta*A)*h term is exactly zero: y = xco * delta * sum_n(C*B)
        s6 = jnp.dot(xco.astype(jnp.bfloat16), w123,
                     preferred_element_type=jnp.float32) + b123
        delta = _softplus(s6[:, :D2])
        Bm = s6[:, D2:D2 + N]
        Cm = s6[:, D2 + N:]
        cb = jnp.sum(Cm * Bm, axis=-1, keepdims=True)
        y = xco * delta * cb

        # ---- gates + out_proj ----
        x_comb = _silu(y) * _silu(x_res_pre)
        xb = jnp.dot(x_comb.astype(jnp.bfloat16), wo,
                     preferred_element_type=jnp.float32) + bo        # (rows, D)

    o_ref[...] = xb.reshape(Bt, L, D)


def mamba_forward(x, packed, *, batch_tile=2):
    B, L, D = x.shape
    Bt = batch_tile if (B % batch_tile == 0) else 1
    D2 = 2 * D

    order = ["g", "win", "bin", "wcv", "bcv", "wcl", "bcl", "w123", "b123", "wo", "bo"]
    weights = [packed[k] for k in order]

    def w_spec(w):
        # Weights resident in VMEM (constant index map -> fetched once).
        # TODO(synk): at realistic d_model, mark these single-buffered
        # (pipeline_mode=pl.Buffered(1)) / K-tile wcl & w123 to fit v7x's 64 MiB.
        nd = w.ndim
        return pl.BlockSpec(w.shape, lambda i, _nd=nd: (0,) * _nd)

    in_specs = [pl.BlockSpec((Bt, L, D), lambda i: (i, 0, 0))] + [w_spec(w) for w in weights]
    out_spec = pl.BlockSpec((Bt, L, D), lambda i: (i, 0, 0))

    # Advisory cost estimate for XLA's scheduler.
    n_layers, _, four_d = packed["win"].shape
    s6_out = packed["w123"].shape[-1]
    rows = B * L
    flops = n_layers * (2 * rows * (D * four_d + D2 * D2 + D2 * s6_out + D2 * D)
                        + 2 * B * L * (3 * L) * D2)
    trans = n_layers * rows * (4 * D2 + 1)
    wbytes = sum(int(w.size) * w.dtype.itemsize for w in weights)
    bytes_accessed = int(2 * x.size * x.dtype.itemsize + wbytes)

    # TODO(synk): output last dim (D=8) < 128 lanes -> masked stores; at real
    # d_model present a lane-dense (B, L*D) slab at the call boundary instead.
    return pl.pallas_call(
        mamba_kernel,
        out_shape=jax.ShapeDtypeStruct((B, L, D), jnp.float32),
        grid=(B // Bt,),
        in_specs=in_specs,
        out_specs=out_spec,
        compiler_params=pltpu.CompilerParams(
            dimension_semantics=("parallel",),
            vmem_limit_bytes=32 * 1024 * 1024),
        cost_estimate=pl.CostEstimate(flops=int(flops),
                                      transcendentals=int(trans),
                                      bytes_accessed=bytes_accessed),
    )(x, *weights)


# ----------------------------------------------------------------------------
# Parameter construction (synthetic, deterministic) and packing
# ----------------------------------------------------------------------------

def init_block_params(key, d_model, state_size, seq_len):
    """Per-block params; Linear weights stored pre-transposed (in, out), f32."""
    d2 = 2 * d_model
    ks = jax.random.split(key, 16)
    nrm = lambda k, shape: (0.25 * jax.random.normal(k, shape)).astype(jnp.float32)
    p = {}
    p["g"] = jnp.ones((1, d_model), jnp.float32)             # RMSNorm weight (ones)
    p["winp"] = nrm(ks[0], (d_model, d2)); p["binp"] = nrm(ks[1], (1, d2))   # inp_proj
    wc = nrm(ks[2], (seq_len, seq_len, 3))                    # Conv1d weight (out_c, in_c, k)
    p["wc0"], p["wc1"], p["wc2"] = wc[:, :, 0], wc[:, :, 1], wc[:, :, 2]
    p["bc"] = nrm(ks[3], (seq_len, 1))                        # Conv1d bias (per out-channel)
    p["wcl"] = nrm(ks[4], (d2, d2)); p["bcl"] = nrm(ks[5], (1, d2))          # conv_linear
    p["w1"] = nrm(ks[6], (d2, d2)); p["b1"] = nrm(ks[7], (1, d2))            # S6.fc1
    p["w2"] = nrm(ks[8], (d2, state_size)); p["b2"] = nrm(ks[9], (1, state_size))   # S6.fc2
    p["w3"] = nrm(ks[10], (d2, state_size)); p["b3"] = nrm(ks[11], (1, state_size))  # S6.fc3
    p["wd"] = nrm(ks[12], (d_model, d2)); p["bd"] = nrm(ks[13], (1, d2))     # D
    p["wo"] = nrm(ks[14], (d2, d_model))                      # out_proj
    p["bo"] = jnp.ones((1, d_model), jnp.float32)             # out_proj.bias = 1.0
    # TODO(synk): S6.A intentionally omitted — h is re-zeroed every forward, so
    # the exp(delta*A)*h term is identically zero and A never reaches the output.
    return p


def pack_params(params_list):
    """Stack the layers and pre-fuse weights: [winp|wd], [wc0|wc1|wc2], [w1|w2|w3].
    Matmul weights are stored bf16 (MXU inputs); gains/biases stay f32."""
    bf = jnp.bfloat16
    stk = lambda fn: jnp.stack([fn(p) for p in params_list], axis=0)
    cat = lambda *a: jnp.concatenate(a, axis=1)
    return {
        "g":    stk(lambda p: p["g"]),
        "win":  stk(lambda p: cat(p["winp"], p["wd"])).astype(bf),
        "bin":  stk(lambda p: cat(p["binp"], p["bd"])),
        "wcv":  stk(lambda p: cat(p["wc0"], p["wc1"], p["wc2"])).astype(bf),
        "bcv":  stk(lambda p: p["bc"]),
        "wcl":  stk(lambda p: p["wcl"]).astype(bf),
        "bcl":  stk(lambda p: p["bcl"]),
        "w123": stk(lambda p: cat(p["w1"], p["w2"], p["w3"])).astype(bf),
        "b123": stk(lambda p: cat(p["b1"], p["b2"], p["b3"])),
        "wo":   stk(lambda p: p["wo"]).astype(bf),
        "bo":   stk(lambda p: p["bo"]),
    }


# ----------------------------------------------------------------------------
# Pure-JAX reference (mirrors PyTorch math; bf16 matmul inputs, f32 accumulate)
# ----------------------------------------------------------------------------

def _mm(a, w):
    return jnp.dot(a.astype(jnp.bfloat16), w.astype(jnp.bfloat16),
                   preferred_element_type=jnp.float32)


def block_ref(x, p):
    ms = jnp.mean(x * x, axis=-1, keepdims=True)
    xn = x * lax.rsqrt(ms + EPS) * p["g"]
    xp = _mm(xn, p["winp"]) + p["binp"]
    W = xp.shape[-1]
    xpad = jnp.pad(xp, ((0, 0), (0, 0), (1, 1)))

    def cmm(w, s):
        return jnp.einsum("oc,bcw->bow", w.astype(jnp.bfloat16), s.astype(jnp.bfloat16),
                          preferred_element_type=jnp.float32)

    xc = (cmm(p["wc0"], xpad[:, :, 0:W]) + cmm(p["wc1"], xpad[:, :, 1:1 + W])
          + cmm(p["wc2"], xpad[:, :, 2:2 + W]) + p["bc"][None, :, :])
    xca = _silu(xc)
    xco = _mm(xca, p["wcl"]) + p["bcl"]
    Bm = _mm(xco, p["w2"]) + p["b2"]
    Cm = _mm(xco, p["w3"]) + p["b3"]
    delta = _softplus(_mm(xco, p["w1"]) + p["b1"])
    cb = jnp.sum(Cm * Bm, axis=-1, keepdims=True)
    y = xco * delta * cb
    x_act = _silu(y)
    x_res = _silu(_mm(xn, p["wd"]) + p["bd"])
    return _mm(x_act * x_res, p["wo"]) + p["bo"]


if __name__ == "__main__":
    batch, seq_len, d_model, state_size = 4, 16, 8, 32

    key = jax.random.PRNGKey(0)
    kx, k1, k2, k3 = jax.random.split(key, 4)
    x = jax.random.normal(kx, (batch, seq_len, d_model), dtype=jnp.float32)
    params = [init_block_params(k, d_model, state_size, seq_len) for k in (k1, k2, k3)]
    packed = pack_params(params)

    out = mamba_forward(x, packed, batch_tile=2)
    out = jax.block_until_ready(out)

    # correctness vs pure-JAX reference (same bf16 matmul inputs, f32 accumulate)
    ref = x
    for p in params:
        ref = block_ref(ref, p)
    assert out.shape == (batch, seq_len, d_model)
    max_err = float(jnp.max(jnp.abs(out - ref)))
    assert bool(jnp.allclose(out, ref, rtol=1e-2, atol=1e-2)), (
        f"mismatch vs reference (max abs err {max_err})")

    print("KERNEL_OK")
</pallas_src>

<mosaic_0001>
module attributes {stable_mosaic.version = 11 : i64} {
  func.func @mamba_kernel(%arg0: i32, %arg1: memref<2x16x8xf32, #tpu.memory_space<vmem>>, %arg2: memref<3x1x8xf32, #tpu.memory_space<vmem>>, %arg3: memref<3x8x32xbf16, #tpu.memory_space<vmem>>, %arg4: memref<3x1x32xf32, #tpu.memory_space<vmem>>, %arg5: memref<3x16x48xbf16, #tpu.memory_space<vmem>>, %arg6: memref<3x16x1xf32, #tpu.memory_space<vmem>>, %arg7: memref<3x16x16xbf16, #tpu.memory_space<vmem>>, %arg8: memref<3x1x16xf32, #tpu.memory_space<vmem>>, %arg9: memref<3x16x80xbf16, #tpu.memory_space<vmem>>, %arg10: memref<3x1x80xf32, #tpu.memory_space<vmem>>, %arg11: memref<3x16x8xbf16, #tpu.memory_space<vmem>>, %arg12: memref<3x1x8xf32, #tpu.memory_space<vmem>>, %arg13: memref<2x16x8xf32, #tpu.memory_space<vmem>>) attributes {dimension_semantics = [#tpu.dimension_semantics<parallel>], iteration_bounds = array<i64: 2>, scalar_prefetch = 0 : i64, scratch_operands = 0 : i64, tpu.core_type = #tpu.core_type<tc>, window_params = [{transform_indices = @transform_0, window_bounds = array<i64: 2, 16, 8>}, {pipeline_mode = #tpu.pipeline_mode<synchronous>, transform_indices = @transform_1, window_bounds = array<i64: 3, 1, 8>}, {pipeline_mode = #tpu.pipeline_mode<synchronous>, transform_indices = @transform_2, window_bounds = array<i64: 3, 8, 32>}, {pipeline_mode = #tpu.pipeline_mode<synchronous>, transform_indices = @transform_3, window_bounds = array<i64: 3, 1, 32>}, {pipeline_mode = #tpu.pipeline_mode<synchronous>, transform_indices = @transform_4, window_bounds = array<i64: 3, 16, 48>}, {pipeline_mode = #tpu.pipeline_mode<synchronous>, transform_indices = @transform_5, window_bounds = array<i64: 3, 16, 1>}, {pipeline_mode = #tpu.pipeline_mode<synchronous>, transform_indices = @transform_6, window_bounds = array<i64: 3, 16, 16>}, {pipeline_mode = #tpu.pipeline_mode<synchronous>, transform_indices = @transform_7, window_bounds = array<i64: 3, 1, 16>}, {pipeline_mode = #tpu.pipeline_mode<synchronous>, transform_indices = @transform_8, window_bounds = array<i64: 3, 16, 80>}, {pipeline_mode = #tpu.pipeline_mode<synchronous>, transform_indices = @transform_9, window_bounds = array<i64: 3, 1, 80>}, {pipeline_mode = #tpu.pipeline_mode<synchronous>, transform_indices = @transform_10, window_bounds = array<i64: 3, 16, 8>}, {pipeline_mode = #tpu.pipeline_mode<synchronous>, transform_indices = @transform_11, window_bounds = array<i64: 3, 1, 8>}, {transform_indices = @transform_12, window_bounds = array<i64: 2, 16, 8>}]} {
    %c0 = arith.constant 0 : index
    %c0_0 = arith.constant 0 : index
    %c0_1 = arith.constant 0 : index
    %0 = vector.load %arg1[%c0, %c0_0, %c0_1] : memref<2x16x8xf32, #tpu.memory_space<vmem>>, vector<2x16x8xf32>
    %1 = vector.shape_cast %0 : vector<2x16x8xf32> to vector<32x8xf32>
    %cst = arith.constant 0.000000e+00 : f32
    %2 = vector.broadcast %cst : f32 to vector<2x16x1xf32>
    %c0_2 = arith.constant 0 : index
    %c0_3 = arith.constant 0 : index
    %c0_4 = arith.constant 0 : index
    %3 = vector.load %arg2[%c0_2, %c0_3, %c0_4] : memref<3x1x8xf32, #tpu.memory_space<vmem>>, vector<1x1x8xf32>
    %4 = vector.shape_cast %3 : vector<1x1x8xf32> to vector<1x8xf32>
    %c0_5 = arith.constant 0 : index
    %c0_6 = arith.constant 0 : index
    %c0_7 = arith.constant 0 : index
    %5 = vector.load %arg3[%c0_5, %c0_6, %c0_7] : memref<3x8x32xbf16, #tpu.memory_space<vmem>>, vector<1x8x32xbf16>
    %6 = vector.shape_cast %5 : vector<1x8x32xbf16> to vector<8x32xbf16>
    %c0_8 = arith.constant 0 : index
    %c0_9 = arith.constant 0 : index
    %c0_10 = arith.constant 0 : index
    %7 = vector.load %arg4[%c0_8, %c0_9, %c0_10] : memref<3x1x32xf32, #tpu.memory_space<vmem>>, vector<1x1x32xf32>
    %8 = vector.shape_cast %7 : vector<1x1x32xf32> to vector<1x32xf32>
    %c0_11 = arith.constant 0 : index
    %c0_12 = arith.constant 0 : index
    %c0_13 = arith.constant 0 : index
    %9 = vector.load %arg5[%c0_11, %c0_12, %c0_13] : memref<3x16x48xbf16, #tpu.memory_space<vmem>>, vector<1x16x48xbf16>
    %10 = vector.shape_cast %9 : vector<1x16x48xbf16> to vector<16x48xbf16>
    %c0_14 = arith.constant 0 : index
    %c0_15 = arith.constant 0 : index
    %c0_16 = arith.constant 0 : index
    %11 = vector.load %arg6[%c0_14, %c0_15, %c0_16] : memref<3x16x1xf32, #tpu.memory_space<vmem>>, vector<1x16x1xf32>
    %12 = vector.shape_cast %11 : vector<1x16x1xf32> to vector<16x1xf32>
    %c0_17 = arith.constant 0 : index
    %c0_18 = arith.constant 0 : index
    %c0_19 = arith.constant 0 : index
    %13 = vector.load %arg7[%c0_17, %c0_18, %c0_19] : memref<3x16x16xbf16, #tpu.memory_space<vmem>>, vector<1x16x16xbf16>
    %14 = vector.shape_cast %13 : vector<1x16x16xbf16> to vector<16x16xbf16>
    %c0_20 = arith.constant 0 : index
    %c0_21 = arith.constant 0 : index
    %c0_22 = arith.constant 0 : index
    %15 = vector.load %arg8[%c0_20, %c0_21, %c0_22] : memref<3x1x16xf32, #tpu.memory_space<vmem>>, vector<1x1x16xf32>
    %16 = vector.shape_cast %15 : vector<1x1x16xf32> to vector<1x16xf32>
    %c0_23 = arith.constant 0 : index
    %c0_24 = arith.constant 0 : index
    %c0_25 = arith.constant 0 : index
    %17 = vector.load %arg9[%c0_23, %c0_24, %c0_25] : memref<3x16x80xbf16, #tpu.memory_space<vmem>>, vector<1x16x80xbf16>
    %18 = vector.shape_cast %17 : vector<1x16x80xbf16> to vector<16x80xbf16>
    %c0_26 = arith.constant 0 : index
    %c0_27 = arith.constant 0 : index
    %c0_28 = arith.constant 0 : index
    %19 = vector.load %arg10[%c0_26, %c0_27, %c0_28] : memref<3x1x80xf32, #tpu.memory_space<vmem>>, vector<1x1x80xf32>
    %20 = vector.shape_cast %19 : vector<1x1x80xf32> to vector<1x80xf32>
    %c0_29 = arith.constant 0 : index
    %c0_30 = arith.constant 0 : index
    %c0_31 = arith.constant 0 : index
    %21 = vector.load %arg11[%c0_29, %c0_30, %c0_31] : memref<3x16x8xbf16, #tpu.memory_space<vmem>>, vector<1x16x8xbf16>
    %22 = vector.shape_cast %21 : vector<1x16x8xbf16> to vector<16x8xbf16>
    %c0_32 = arith.constant 0 : index
    %c0_33 = arith.constant 0 : index
    %c0_34 = arith.constant 0 : index
    %23 = vector.load %arg12[%c0_32, %c0_33, %c0_34] : memref<3x1x8xf32, #tpu.memory_space<vmem>>, vector<1x1x8xf32>
    %24 = vector.shape_cast %23 : vector<1x1x8xf32> to vector<1x8xf32>
    %25 = arith.mulf %1, %1 : vector<32x8xf32>
    %cst_35 = arith.constant dense<0.000000e+00> : vector<32xf32>
    %26 = vector.multi_reduction <add>, %25, %cst_35 [1] : vector<32x8xf32> to vector<32xf32>
    %27 = vector.shape_cast %26 : vector<32xf32> to vector<32x1xf32>
    %cst_36 = arith.constant 8.000000e+00 : f32
    %28 = vector.broadcast %cst_36 : f32 to vector<32x1xf32>
    %29 = arith.divf %27, %28 : vector<32x1xf32>
    %cst_37 = arith.constant 9.99999974E-6 : f32
    %30 = vector.broadcast %cst_37 : f32 to vector<32x1xf32>
    %31 = arith.addf %29, %30 : vector<32x1xf32>
    %32 = math.rsqrt %31 : vector<32x1xf32>
    %33 = vector.broadcast %32 : vector<32x1xf32> to vector<32x8xf32>
    %34 = arith.mulf %1, %33 : vector<32x8xf32>
    %35 = vector.broadcast %4 : vector<1x8xf32> to vector<32x8xf32>
    %36 = arith.mulf %34, %35 : vector<32x8xf32>
    %37 = arith.truncf %36 : vector<32x8xf32> to vector<32x8xbf16>
    %cst_38 = arith.constant dense<0.000000e+00> : vector<32x32xf32>
    %38 = tpu.matmul %37, %6, %cst_38 {dimension_numbers = #tpu.dot_dimension_numbers<[1], [0], [0], [1], [0, 0, 1, 1], [], []>} : vector<32x8xbf16>, vector<8x32xbf16>, vector<32x32xf32> -> vector<32x32xf32>
    %39 = vector.broadcast %8 : vector<1x32xf32> to vector<32x32xf32>
    %40 = arith.addf %38, %39 : vector<32x32xf32>
    %41 = vector.extract_strided_slice %40 {offsets = [0, 0], sizes = [32, 16], strides = [1, 1]} : vector<32x32xf32> to vector<32x16xf32>
    %42 = vector.extract_strided_slice %40 {offsets = [0, 16], sizes = [32, 16], strides = [1, 1]} : vector<32x32xf32> to vector<32x16xf32>
    %43 = vector.shape_cast %41 : vector<32x16xf32> to vector<2x16x16xf32>
    %44 = vector.extract_strided_slice %43 {offsets = [0, 0, 0], sizes = [2, 16, 15], strides = [1, 1, 1]} : vector<2x16x16xf32> to vector<2x16x15xf32>
    %45 = tpu.concatenate %2, %44 in 2 : vector<2x16x1xf32>, vector<2x16x15xf32> -> vector<2x16x16xf32>
    %46 = vector.extract_strided_slice %43 {offsets = [0, 0, 1], sizes = [2, 16, 15], strides = [1, 1, 1]} : vector<2x16x16xf32> to vector<2x16x15xf32>
    %47 = tpu.concatenate %46, %2 in 2 : vector<2x16x15xf32>, vector<2x16x1xf32> -> vector<2x16x16xf32>
    %48 = tpu.concatenate %45, %43, %47 in 1 : vector<2x16x16xf32>, vector<2x16x16xf32>, vector<2x16x16xf32> -> vector<2x48x16xf32>
    %49 = arith.truncf %48 : vector<2x48x16xf32> to vector<2x48x16xbf16>
    "tpu.trace_start"() <{level = 10 : i32, message = "ok,bkd->bod"}> : () -> ()
    %cst_39 = arith.constant dense<0.000000e+00> : vector<2x16x16xf32>
    %50 = tpu.matmul %49, %10, %cst_39 {dimension_numbers = #tpu.dot_dimension_numbers<[1], [1], [0, 2], [0], [0, 0, 0, 2, 1, 0], [], []>} : vector<2x48x16xbf16>, vector<16x48xbf16>, vector<2x16x16xf32> -> vector<2x16x16xf32>
    %51 = tpu.transpose %50, [0, 2, 1] : vector<2x16x16xf32> -> vector<2x16x16xf32>
    "tpu.trace_stop"() : () -> ()
    %52 = vector.shape_cast %12 : vector<16x1xf32> to vector<1x16x1xf32>
    %53 = vector.broadcast %52 : vector<1x16x1xf32> to vector<2x16x16xf32>
    %54 = arith.addf %51, %53 : vector<2x16x16xf32>
    %55 = vector.shape_cast %54 : vector<2x16x16xf32> to vector<32x16xf32>
    %cst_40 = arith.constant 0.000000e+00 : f32
    %56 = vector.broadcast %cst_40 : f32 to vector<32x16xf32>
    %57 = arith.subf %56, %55 : vector<32x16xf32>
    %58 = math.exp %57 : vector<32x16xf32>
    %cst_41 = arith.constant 1.000000e+00 : f32
    %59 = vector.broadcast %cst_41 : f32 to vector<32x16xf32>
    %60 = arith.addf %59, %58 : vector<32x16xf32>
    %cst_42 = arith.constant 1.000000e+00 : f32
    %61 = vector.broadcast %cst_42 : f32 to vector<32x16xf32>
    %62 = arith.divf %61, %60 : vector<32x16xf32>
    %63 = arith.mulf %55, %62 : vector<32x16xf32>
    %64 = arith.truncf %63 : vector<32x16xf32> to vector<32x16xbf16>
    %cst_43 = arith.constant dense<0.000000e+00> : vector<32x16xf32>
    %65 = tpu.matmul %64, %14, %cst_43 {dimension_numbers = #tpu.dot_dimension_numbers<[1], [0], [0], [1], [0, 0, 1, 1], [], []>} : vector<32x16xbf16>, vector<16x16xbf16>, vector<32x16xf32> -> vector<32x16xf32>
    %66 = vector.broadcast %16 : vector<1x16xf32> to vector<32x16xf32>
    %67 = arith.addf %65, %66 : vector<32x16xf32>
    %68 = arith.truncf %67 : vector<32x16xf32> to vector<32x16xbf16>
    %cst_44 = arith.constant dense<0.000000e+00> : vector<32x80xf32>
    %69 = tpu.matmul %68, %18, %cst_44 {dimension_numbers = #tpu.dot_dimension_numbers<[1], [0], [0], [1], [0, 0, 1, 1], [], []>} : vector<32x16xbf16>, vector<16x80xbf16>, vector<32x80xf32> -> vector<32x80xf32>
    %70 = vector.broadcast %20 : vector<1x80xf32> to vector<32x80xf32>
    %71 = arith.addf %69, %70 : vector<32x80xf32>
    %72 = vector.extract_strided_slice %71 {offsets = [0, 0], sizes = [32, 16], strides = [1, 1]} : vector<32x80xf32> to vector<32x16xf32>
    %cst_45 = arith.constant 2.000000e+01 : f32
    %73 = vector.broadcast %cst_45 : f32 to vector<32x16xf32>
    %74 = arith.cmpf ogt, %72, %73 : vector<32x16xf32>
    %cst_46 = arith.constant 2.000000e+01 : f32
    %75 = vector.broadcast %cst_46 : f32 to vector<32x16xf32>
    %76 = arith.minimumf %72, %75 : vector<32x16xf32>
    %77 = math.exp %76 : vector<32x16xf32>
    %cst_47 = arith.constant 1.000000e+00 : f32
    %78 = vector.broadcast %cst_47 : f32 to vector<32x16xf32>
    %79 = arith.addf %78, %77 : vector<32x16xf32>
    %80 = math.log %79 : vector<32x16xf32>
    %81 = arith.select %74, %72, %80 : vector<32x16xi1>, vector<32x16xf32>
    %82 = vector.extract_strided_slice %71 {offsets = [0, 16], sizes = [32, 32], strides = [1, 1]} : vector<32x80xf32> to vector<32x32xf32>
    %83 = vector.extract_strided_slice %71 {offsets = [0, 48], sizes = [32, 32], strides = [1, 1]} : vector<32x80xf32> to vector<32x32xf32>
    %84 = arith.mulf %83, %82 : vector<32x32xf32>
    %cst_48 = arith.constant dense<0.000000e+00> : vector<32xf32>
    %85 = vector.multi_reduction <add>, %84, %cst_48 [1] : vector<32x32xf32> to vector<32xf32>
    %86 = vector.shape_cast %85 : vector<32xf32> to vector<32x1xf32>
    %87 = arith.mulf %67, %81 : vector<32x16xf32>
    %88 = vector.broadcast %86 : vector<32x1xf32> to vector<32x16xf32>
    %89 = arith.mulf %87, %88 : vector<32x16xf32>
    %cst_49 = arith.constant 0.000000e+00 : f32
    %90 = vector.broadcast %cst_49 : f32 to vector<32x16xf32>
    %91 = arith.subf %90, %89 : vector<32x16xf32>
    %92 = math.exp %91 : vector<32x16xf32>
    %cst_50 = arith.constant 1.000000e+00 : f32
    %93 = vector.broadcast %cst_50 : f32 to vector<32x16xf32>
    %94 = arith.addf %93, %92 : vector<32x16xf32>
    %cst_51 = arith.constant 1.000000e+00 : f32
    %95 = vector.broadcast %cst_51 : f32 to vector<32x16xf32>
    %96 = arith.divf %95, %94 : vector<32x16xf32>
    %97 = arith.mulf %89, %96 : vector<32x16xf32>
    %cst_52 = arith.constant 0.000000e+00 : f32
    %98 = vector.broadcast %cst_52 : f32 to vector<32x16xf32>
    %99 = arith.subf %98, %42 : vector<32x16xf32>
    %100 = math.exp %99 : vector<32x16xf32>
    %cst_53 = arith.constant 1.000000e+00 : f32
    %101 = vector.broadcast %cst_53 : f32 to vector<32x16xf32>
    %102 = arith.addf %101, %100 : vector<32x16xf32>
    %cst_54 = arith.constant 1.000000e+00 : f32
    %103 = vector.broadcast %cst_54 : f32 to vector<32x16xf32>
    %104 = arith.divf %103, %102 : vector<32x16xf32>
    %105 = arith.mulf %42, %104 : vector<32x16xf32>
    %106 = arith.mulf %97, %105 : vector<32x16xf32>
    %107 = arith.truncf %106 : vector<32x16xf32> to vector<32x16xbf16>
    %cst_55 = arith.constant dense<0.000000e+00> : vector<32x8xf32>
    %108 = tpu.matmul %107, %22, %cst_55 {dimension_numbers = #tpu.dot_dimension_numbers<[1], [0], [0], [1], [0, 0, 1, 1], [], []>} : vector<32x16xbf16>, vector<16x8xbf16>, vector<32x8xf32> -> vector<32x8xf32>
    %109 = vector.broadcast %24 : vector<1x8xf32> to vector<32x8xf32>
    %110 = arith.addf %108, %109 : vector<32x8xf32>
    %c1 = arith.constant 1 : index
    %c0_56 = arith.constant 0 : index
    %c0_57 = arith.constant 0 : index
    %111 = vector.load %arg2[%c1, %c0_56, %c0_57] : memref<3x1x8xf32, #tpu.memory_space<vmem>>, vector<1x1x8xf32>
    %112 = vector.shape_cast %111 : vector<1x1x8xf32> to vector<1x8xf32>
    %c1_58 = arith.constant 1 : index
    %c0_59 = arith.constant 0 : index
    %c0_60 = arith.constant 0 : index
    %113 = vector.load %arg3[%c1_58, %c0_59, %c0_60] : memref<3x8x32xbf16, #tpu.memory_space<vmem>>, vector<1x8x32xbf16>
    %114 = vector.shape_cast %113 : vector<1x8x32xbf16> to vector<8x32xbf16>
    %c1_61 = arith.constant 1 : index
    %c0_62 = arith.constant 0 : index
    %c0_63 = arith.constant 0 : index
    %115 = vector.load %arg4[%c1_61, %c0_62, %c0_63] : memref<3x1x32xf32, #tpu.memory_space<vmem>>, vector<1x1x32xf32>
    %116 = vector.shape_cast %115 : vector<1x1x32xf32> to vector<1x32xf32>
    %c1_64 = arith.constant 1 : index
    %c0_65 = arith.constant 0 : index
    %c0_66 = arith.constant 0 : index
    %117 = vector.load %arg5[%c1_64, %c0_65, %c0_66] : memref<3x16x48xbf16, #tpu.memory_space<vmem>>, vector<1x16x48xbf16>
    %118 = vector.shape_cast %117 : vector<1x16x48xbf16> to vector<16x48xbf16>
    %c1_67 = arith.constant 1 : index
    %c0_68 = arith.constant 0 : index
    %c0_69 = arith.constant 0 : index
    %119 = vector.load %arg6[%c1_67, %c0_68, %c0_69] : memref<3x16x1xf32, #tpu.memory_space<vmem>>, vector<1x16x1xf32>
    %120 = vector.shape_cast %119 : vector<1x16x1xf32> to vector<16x1xf32>
    %c1_70 = arith.constant 1 : index
    %c0_71 = arith.constant 0 : index
    %c0_72 = arith.constant 0 : index
    %121 = vector.load %arg7[%c1_70, %c0_71, %c0_72] : memref<3x16x16xbf16, #tpu.memory_space<vmem>>, vector<1x16x16xbf16>
    %122 = vector.shape_cast %121 : vector<1x16x16xbf16> to vector<16x16xbf16>
    %c1_73 = arith.constant 1 : index
    %c0_74 = arith.constant 0 : index
    %c0_75 = arith.constant 0 : index
    %123 = vector.load %arg8[%c1_73, %c0_74, %c0_75] : memref<3x1x16xf32, #tpu.memory_space<vmem>>, vector<1x1x16xf32>
    %124 = vector.shape_cast %123 : vector<1x1x16xf32> to vector<1x16xf32>
    %c1_76 = arith.constant 1 : index
    %c0_77 = arith.constant 0 : index
    %c0_78 = arith.constant 0 : index
    %125 = vector.load %arg9[%c1_76, %c0_77, %c0_78] : memref<3x16x80xbf16, #tpu.memory_space<vmem>>, vector<1x16x80xbf16>
    %126 = vector.shape_cast %125 : vector<1x16x80xbf16> to vector<16x80xbf16>
    %c1_79 = arith.constant 1 : index
    %c0_80 = arith.constant 0 : index
    %c0_81 = arith.constant 0 : index
    %127 = vector.load %arg10[%c1_79, %c0_80, %c0_81] : memref<3x1x80xf32, #tpu.memory_space<vmem>>, vector<1x1x80xf32>
    %128 = vector.shape_cast %127 : vector<1x1x80xf32> to vector<1x80xf32>
    %c1_82 = arith.constant 1 : index
    %c0_83 = arith.constant 0 : index
    %c0_84 = arith.constant 0 : index
    %129 = vector.load %arg11[%c1_82, %c0_83, %c0_84] : memref<3x16x8xbf16, #tpu.memory_space<vmem>>, vector<1x16x8xbf16>
    %130 = vector.shape_cast %129 : vector<1x16x8xbf16> to vector<16x8xbf16>
    %c1_85 = arith.constant 1 : index
    %c0_86 = arith.constant 0 : index
    %c0_87 = arith.constant 0 : index
    %131 = vector.load %arg12[%c1_85, %c0_86, %c0_87] : memref<3x1x8xf32, #tpu.memory_space<vmem>>, vector<1x1x8xf32>
    %132 = vector.shape_cast %131 : vector<1x1x8xf32> to vector<1x8xf32>
    %133 = arith.mulf %110, %110 : vector<32x8xf32>
    %cst_88 = arith.constant dense<0.000000e+00> : vector<32xf32>
    %134 = vector.multi_reduction <add>, %133, %cst_88 [1] : vector<32x8xf32> to vector<32xf32>
    %135 = vector.shape_cast %134 : vector<32xf32> to vector<32x1xf32>
    %cst_89 = arith.constant 8.000000e+00 : f32
    %136 = vector.broadcast %cst_89 : f32 to vector<32x1xf32>
    %137 = arith.divf %135, %136 : vector<32x1xf32>
    %cst_90 = arith.constant 9.99999974E-6 : f32
    %138 = vector.broadcast %cst_90 : f32 to vector<32x1xf32>
    %139 = arith.addf %137, %138 : vector<32x1xf32>
    %140 = math.rsqrt %139 : vector<32x1xf32>
    %141 = vector.broadcast %140 : vector<32x1xf32> to vector<32x8xf32>
    %142 = arith.mulf %110, %141 : vector<32x8xf32>
    %143 = vector.broadcast %112 : vector<1x8xf32> to vector<32x8xf32>
    %144 = arith.mulf %142, %143 : vector<32x8xf32>
    %145 = arith.truncf %144 : vector<32x8xf32> to vector<32x8xbf16>
    %cst_91 = arith.constant dense<0.000000e+00> : vector<32x32xf32>
    %146 = tpu.matmul %145, %114, %cst_91 {dimension_numbers = #tpu.dot_dimension_numbers<[1], [0], [0], [1], [0, 0, 1, 1], [], []>} : vector<32x8xbf16>, vector<8x32xbf16>, vector<32x32xf32> -> vector<32x32xf32>
    %147 = vector.broadcast %116 : vector<1x32xf32> to vector<32x32xf32>
    %148 = arith.addf %146, %147 : vector<32x32xf32>
    %149 = vector.extract_strided_slice %148 {offsets = [0, 0], sizes = [32, 16], strides = [1, 1]} : vector<32x32xf32> to vector<32x16xf32>
    %150 = vector.extract_strided_slice %148 {offsets = [0, 16], sizes = [32, 16], strides = [1, 1]} : vector<32x32xf32> to vector<32x16xf32>
    %151 = vector.shape_cast %149 : vector<32x16xf32> to vector<2x16x16xf32>
    %152 = vector.extract_strided_slice %151 {offsets = [0, 0, 0], sizes = [2, 16, 15], strides = [1, 1, 1]} : vector<2x16x16xf32> to vector<2x16x15xf32>
    %153 = tpu.concatenate %2, %152 in 2 : vector<2x16x1xf32>, vector<2x16x15xf32> -> vector<2x16x16xf32>
    %154 = vector.extract_strided_slice %151 {offsets = [0, 0, 1], sizes = [2, 16, 15], strides = [1, 1, 1]} : vector<2x16x16xf32> to vector<2x16x15xf32>
    %155 = tpu.concatenate %154, %2 in 2 : vector<2x16x15xf32>, vector<2x16x1xf32> -> vector<2x16x16xf32>
    %156 = tpu.concatenate %153, %151, %155 in 1 : vector<2x16x16xf32>, vector<2x16x16xf32>, vector<2x16x16xf32> -> vector<2x48x16xf32>
    %157 = arith.truncf %156 : vector<2x48x16xf32> to vector<2x48x16xbf16>
    "tpu.trace_start"() <{level = 10 : i32, message = "ok,bkd->bod"}> : () -> ()
    %cst_92 = arith.constant dense<0.000000e+00> : vector<2x16x16xf32>
    %158 = tpu.matmul %157, %118, %cst_92 {dimension_numbers = #tpu.dot_dimension_numbers<[1], [1], [0, 2], [0], [0, 0, 0, 2, 1, 0], [], []>} : vector<2x48x16xbf16>, vector<16x48xbf16>, vector<2x16x16xf32> -> vector<2x16x16xf32>
    %159 = tpu.transpose %158, [0, 2, 1] : vector<2x16x16xf32> -> vector<2x16x16xf32>
    "tpu.trace_stop"() : () -> ()
    %160 = vector.shape_cast %120 : vector<16x1xf32> to vector<1x16x1xf32>
    %161 = vector.broadcast %160 : vector<1x16x1xf32> to vector<2x16x16xf32>
    %162 = arith.addf %159, %161 : vector<2x16x16xf32>
    %163 = vector.shape_cast %162 : vector<2x16x16xf32> to vector<32x16xf32>
    %cst_93 = arith.constant 0.000000e+00 : f32
    %164 = vector.broadcast %cst_93 : f32 to vector<32x16xf32>
    %165 = arith.subf %164, %163 : vector<32x16xf32>
    %166 = math.exp %165 : vector<32x16xf32>
    %cst_94 = arith.constant 1.000000e+00 : f32
    %167 = vector.broadcast %cst_94 : f32 to vector<32x16xf32>
    %168 = arith.addf %167, %166 : vector<32x16xf32>
    %cst_95 = arith.constant 1.000000e+00 : f32
    %169 = vector.broadcast %cst_95 : f32 to vector<32x16xf32>
    %170 = arith.divf %169, %168 : vector<32x16xf32>
    %171 = arith.mulf %163, %170 : vector<32x16xf32>
    %172 = arith.truncf %171 : vector<32x16xf32> to vector<32x16xbf16>
    %cst_96 = arith.constant dense<0.000000e+00> : vector<32x16xf32>
    %173 = tpu.matmul %172, %122, %cst_96 {dimension_numbers = #tpu.dot_dimension_numbers<[1], [0], [0], [1], [0, 0, 1, 1], [], []>} : vector<32x16xbf16>, vector<16x16xbf16>, vector<32x16xf32> -> vector<32x16xf32>
    %174 = vector.broadcast %124 : vector<1x16xf32> to vector<32x16xf32>
    %175 = arith.addf %173, %174 : vector<32x16xf32>
    %176 = arith.truncf %175 : vector<32x16xf32> to vector<32x16xbf16>
    %cst_97 = arith.constant dense<0.000000e+00> : vector<32x80xf32>
    %177 = tpu.matmul %176, %126, %cst_97 {dimension_numbers = #tpu.dot_dimension_numbers<[1], [0], [0], [1], [0, 0, 1, 1], [], []>} : vector<32x16xbf16>, vector<16x80xbf16>, vector<32x80xf32> -> vector<32x80xf32>
    %178 = vector.broadcast %128 : vector<1x80xf32> to vector<32x80xf32>
    %179 = arith.addf %177, %178 : vector<32x80xf32>
    %180 = vector.extract_strided_slice %179 {offsets = [0, 0], sizes = [32, 16], strides = [1, 1]} : vector<32x80xf32> to vector<32x16xf32>
    %cst_98 = arith.constant 2.000000e+01 : f32
    %181 = vector.broadcast %cst_98 : f32 to vector<32x16xf32>
    %182 = arith.cmpf ogt, %180, %181 : vector<32x16xf32>
    %cst_99 = arith.constant 2.000000e+01 : f32
    %183 = vector.broadcast %cst_99 : f32 to vector<32x16xf32>
    %184 = arith.minimumf %180, %183 : vector<32x16xf32>
    %185 = math.exp %184 : vector<32x16xf32>
    %cst_100 = arith.constant 1.000000e+00 : f32
    %186 = vector.broadcast %cst_100 : f32 to vector<32x16xf32>
    %187 = arith.addf %186, %185 : vector<32x16xf32>
    %188 = math.log %187 : vector<32x16xf32>
    %189 = arith.select %182, %180, %188 : vector<32x16xi1>, vector<32x16xf32>
    %190 = vector.extract_strided_slice %179 {offsets = [0, 16], sizes = [32, 32], strides = [1, 1]} : vector<32x80xf32> to vector<32x32xf32>
    %191 = vector.extract_strided_slice %179 {offsets = [0, 48], sizes = [32, 32], strides = [1, 1]} : vector<32x80xf32> to vector<32x32xf32>
    %192 = arith.mulf %191, %190 : vector<32x32xf32>
    %cst_101 = arith.constant dense<0.000000e+00> : vector<32xf32>
    %193 = vector.multi_reduction <add>, %192, %cst_101 [1] : vector<32x32xf32> to vector<32xf32>
    %194 = vector.shape_cast %193 : vector<32xf32> to vector<32x1xf32>
    %195 = arith.mulf %175, %189 : vector<32x16xf32>
    %196 = vector.broadcast %194 : vector<32x1xf32> to vector<32x16xf32>
    %197 = arith.mulf %195, %196 : vector<32x16xf32>
    %cst_102 = arith.constant 0.000000e+00 : f32
    %198 = vector.broadcast %cst_102 : f32 to vector<32x16xf32>
    %199 = arith.subf %198, %197 : vector<32x16xf32>
    %200 = math.exp %199 : vector<32x16xf32>
    %cst_103 = arith.constant 1.000000e+00 : f32
    %201 = vector.broadcast %cst_103 : f32 to vector<32x16xf32>
    %202 = arith.addf %201, %200 : vector<32x16xf32>
    %cst_104 = arith.constant 1.000000e+00 : f32
    %203 = vector.broadcast %cst_104 : f32 to vector<32x16xf32>
    %204 = arith.divf %203, %202 : vector<32x16xf32>
    %205 = arith.mulf %197, %204 : vector<32x16xf32>
    %cst_105 = arith.constant 0.000000e+00 : f32
    %206 = vector.broadcast %cst_105 : f32 to vector<32x16xf32>
    %207 = arith.subf %206, %150 : vector<32x16xf32>
    %208 = math.exp %207 : vector<32x16xf32>
    %cst_106 = arith.constant 1.000000e+00 : f32
    %209 = vector.broadcast %cst_106 : f32 to vector<32x16xf32>
    %210 = arith.addf %209, %208 : vector<32x16xf32>
    %cst_107 = arith.constant 1.000000e+00 : f32
    %211 = vector.broadcast %cst_107 : f32 to vector<32x16xf32>
    %212 = arith.divf %211, %210 : vector<32x16xf32>
    %213 = arith.mulf %150, %212 : vector<32x16xf32>
    %214 = arith.mulf %205, %213 : vector<32x16xf32>
    %215 = arith.truncf %214 : vector<32x16xf32> to vector<32x16xbf16>
    %cst_108 = arith.constant dense<0.000000e+00> : vector<32x8xf32>
    %216 = tpu.matmul %215, %130, %cst_108 {dimension_numbers = #tpu.dot_dimension_numbers<[1], [0], [0], [1], [0, 0, 1, 1], [], []>} : vector<32x16xbf16>, vector<16x8xbf16>, vector<32x8xf32> -> vector<32x8xf32>
    %217 = vector.broadcast %132 : vector<1x8xf32> to vector<32x8xf32>
    %218 = arith.addf %216, %217 : vector<32x8xf32>
    %c2 = arith.constant 2 : index
    %c0_109 = arith.constant 0 : index
    %c0_110 = arith.constant 0 : index
    %219 = vector.load %arg2[%c2, %c0_109, %c0_110] : memref<3x1x8xf32, #tpu.memory_space<vmem>>, vector<1x1x8xf32>
    %220 = vector.shape_cast %219 : vector<1x1x8xf32> to vector<1x8xf32>
    %c2_111 = arith.constant 2 : index
    %c0_112 = arith.constant 0 : index
    %c0_113 = arith.constant 0 : index
    %221 = vector.load %arg3[%c2_111, %c0_112, %c0_113] : memref<3x8x32xbf16, #tpu.memory_space<vmem>>, vector<1x8x32xbf16>
    %222 = vector.shape_cast %221 : vector<1x8x32xbf16> to vector<8x32xbf16>
    %c2_114 = arith.constant 2 : index
    %c0_115 = arith.constant 0 : index
    %c0_116 = arith.constant 0 : index
    %223 = vector.load %arg4[%c2_114, %c0_115, %c0_116] : memref<3x1x32xf32, #tpu.memory_space<vmem>>, vector<1x1x32xf32>
    %224 = vector.shape_cast %223 : vector<1x1x32xf32> to vector<1x32xf32>
    %c2_117 = arith.constant 2 : index
    %c0_118 = arith.constant 0 : index
    %c0_119 = arith.constant 0 : index
    %225 = vector.load %arg5[%c2_117, %c0_118, %c0_119] : memref<3x16x48xbf16, #tpu.memory_space<vmem>>, vector<1x16x48xbf16>
    %226 = vector.shape_cast %225 : vector<1x16x48xbf16> to vector<16x48xbf16>
    %c2_120 = arith.constant 2 : index
    %c0_121 = arith.constant 0 : index
    %c0_122 = arith.constant 0 : index
    %227 = vector.load %arg6[%c2_120, %c0_121, %c0_122] : memref<3x16x1xf32, #tpu.memory_space<vmem>>, vector<1x16x1xf32>
    %228 = vector.shape_cast %227 : vector<1x16x1xf32> to vector<16x1xf32>
    %c2_123 = arith.constant 2 : index
    %c0_124 = arith.constant 0 : index
    %c0_125 = arith.constant 0 : index
    %229 = vector.load %arg7[%c2_123, %c0_124, %c0_125] : memref<3x16x16xbf16, #tpu.memory_space<vmem>>, vector<1x16x16xbf16>
    %230 = vector.shape_cast %229 : vector<1x16x16xbf16> to vector<16x16xbf16>
    %c2_126 = arith.constant 2 : index
    %c0_127 = arith.constant 0 : index
    %c0_128 = arith.constant 0 : index
    %231 = vector.load %arg8[%c2_126, %c0_127, %c0_128] : memref<3x1x16xf32, #tpu.memory_space<vmem>>, vector<1x1x16xf32>
    %232 = vector.shape_cast %231 : vector<1x1x16xf32> to vector<1x16xf32>
    %c2_129 = arith.constant 2 : index
    %c0_130 = arith.constant 0 : index
    %c0_131 = arith.constant 0 : index
    %233 = vector.load %arg9[%c2_129, %c0_130, %c0_131] : memref<3x16x80xbf16, #tpu.memory_space<vmem>>, vector<1x16x80xbf16>
    %234 = vector.shape_cast %233 : vector<1x16x80xbf16> to vector<16x80xbf16>
    %c2_132 = arith.constant 2 : index
    %c0_133 = arith.constant 0 : index
    %c0_134 = arith.constant 0 : index
    %235 = vector.load %arg10[%c2_132, %c0_133, %c0_134] : memref<3x1x80xf32, #tpu.memory_space<vmem>>, vector<1x1x80xf32>
    %236 = vector.shape_cast %235 : vector<1x1x80xf32> to vector<1x80xf32>
    %c2_135 = arith.constant 2 : index
    %c0_136 = arith.constant 0 : index
    %c0_137 = arith.constant 0 : index
    %237 = vector.load %arg11[%c2_135, %c0_136, %c0_137] : memref<3x16x8xbf16, #tpu.memory_space<vmem>>, vector<1x16x8xbf16>
    %238 = vector.shape_cast %237 : vector<1x16x8xbf16> to vector<16x8xbf16>
    %c2_138 = arith.constant 2 : index
    %c0_139 = arith.constant 0 : index
    %c0_140 = arith.constant 0 : index
    %239 = vector.load %arg12[%c2_138, %c0_139, %c0_140] : memref<3x1x8xf32, #tpu.memory_space<vmem>>, vector<1x1x8xf32>
    %240 = vector.shape_cast %239 : vector<1x1x8xf32> to vector<1x8xf32>
    %241 = arith.mulf %218, %218 : vector<32x8xf32>
    %cst_141 = arith.constant dense<0.000000e+00> : vector<32xf32>
    %242 = vector.multi_reduction <add>, %241, %cst_141 [1] : vector<32x8xf32> to vector<32xf32>
    %243 = vector.shape_cast %242 : vector<32xf32> to vector<32x1xf32>
    %cst_142 = arith.constant 8.000000e+00 : f32
    %244 = vector.broadcast %cst_142 : f32 to vector<32x1xf32>
    %245 = arith.divf %243, %244 : vector<32x1xf32>
    %cst_143 = arith.constant 9.99999974E-6 : f32
    %246 = vector.broadcast %cst_143 : f32 to vector<32x1xf32>
    %247 = arith.addf %245, %246 : vector<32x1xf32>
    %248 = math.rsqrt %247 : vector<32x1xf32>
    %249 = vector.broadcast %248 : vector<32x1xf32> to vector<32x8xf32>
    %250 = arith.mulf %218, %249 : vector<32x8xf32>
    %251 = vector.broadcast %220 : vector<1x8xf32> to vector<32x8xf32>
    %252 = arith.mulf %250, %251 : vector<32x8xf32>
    %253 = arith.truncf %252 : vector<32x8xf32> to vector<32x8xbf16>
    %cst_144 = arith.constant dense<0.000000e+00> : vector<32x32xf32>
    %254 = tpu.matmul %253, %222, %cst_144 {dimension_numbers = #tpu.dot_dimension_numbers<[1], [0], [0], [1], [0, 0, 1, 1], [], []>} : vector<32x8xbf16>, vector<8x32xbf16>, vector<32x32xf32> -> vector<32x32xf32>
    %255 = vector.broadcast %224 : vector<1x32xf32> to vector<32x32xf32>
    %256 = arith.addf %254, %255 : vector<32x32xf32>
    %257 = vector.extract_strided_slice %256 {offsets = [0, 0], sizes = [32, 16], strides = [1, 1]} : vector<32x32xf32> to vector<32x16xf32>
    %258 = vector.extract_strided_slice %256 {offsets = [0, 16], sizes = [32, 16], strides = [1, 1]} : vector<32x32xf32> to vector<32x16xf32>
    %259 = vector.shape_cast %257 : vector<32x16xf32> to vector<2x16x16xf32>
    %260 = vector.extract_strided_slice %259 {offsets = [0, 0, 0], sizes = [2, 16, 15], strides = [1, 1, 1]} : vector<2x16x16xf32> to vector<2x16x15xf32>
    %261 = tpu.concatenate %2, %260 in 2 : vector<2x16x1xf32>, vector<2x16x15xf32> -> vector<2x16x16xf32>
    %262 = vector.extract_strided_slice %259 {offsets = [0, 0, 1], sizes = [2, 16, 15], strides = [1, 1, 1]} : vector<2x16x16xf32> to vector<2x16x15xf32>
    %263 = tpu.concatenate %262, %2 in 2 : vector<2x16x15xf32>, vector<2x16x1xf32> -> vector<2x16x16xf32>
    %264 = tpu.concatenate %261, %259, %263 in 1 : vector<2x16x16xf32>, vector<2x16x16xf32>, vector<2x16x16xf32> -> vector<2x48x16xf32>
    %265 = arith.truncf %264 : vector<2x48x16xf32> to vector<2x48x16xbf16>
    "tpu.trace_start"() <{level = 10 : i32, message = "ok,bkd->bod"}> : () -> ()
    %cst_145 = arith.constant dense<0.000000e+00> : vector<2x16x16xf32>
    %266 = tpu.matmul %265, %226, %cst_145 {dimension_numbers = #tpu.dot_dimension_numbers<[1], [1], [0, 2], [0], [0, 0, 0, 2, 1, 0], [], []>} : vector<2x48x16xbf16>, vector<16x48xbf16>, vector<2x16x16xf32> -> vector<2x16x16xf32>
    %267 = tpu.transpose %266, [0, 2, 1] : vector<2x16x16xf32> -> vector<2x16x16xf32>
    "tpu.trace_stop"() : () -> ()
    %268 = vector.shape_cast %228 : vector<16x1xf32> to vector<1x16x1xf32>
    %269 = vector.broadcast %268 : vector<1x16x1xf32> to vector<2x16x16xf32>
    %270 = arith.addf %267, %269 : vector<2x16x16xf32>
    %271 = vector.shape_cast %270 : vector<2x16x16xf32> to vector<32x16xf32>
    %cst_146 = arith.constant 0.000000e+00 : f32
    %272 = vector.broadcast %cst_146 : f32 to vector<32x16xf32>
    %273 = arith.subf %272, %271 : vector<32x16xf32>
    %274 = math.exp %273 : vector<32x16xf32>
    %cst_147 = arith.constant 1.000000e+00 : f32
    %275 = vector.broadcast %cst_147 : f32 to vector<32x16xf32>
    %276 = arith.addf %275, %274 : vector<32x16xf32>
    %cst_148 = arith.constant 1.000000e+00 : f32
    %277 = vector.broadcast %cst_148 : f32 to vector<32x16xf32>
    %278 = arith.divf %277, %276 : vector<32x16xf32>
    %279 = arith.mulf %271, %278 : vector<32x16xf32>
    %280 = arith.truncf %279 : vector<32x16xf32> to vector<32x16xbf16>
    %cst_149 = arith.constant dense<0.000000e+00> : vector<32x16xf32>
    %281 = tpu.matmul %280, %230, %cst_149 {dimension_numbers = #tpu.dot_dimension_numbers<[1], [0], [0], [1], [0, 0, 1, 1], [], []>} : vector<32x16xbf16>, vector<16x16xbf16>, vector<32x16xf32> -> vector<32x16xf32>
    %282 = vector.broadcast %232 : vector<1x16xf32> to vector<32x16xf32>
    %283 = arith.addf %281, %282 : vector<32x16xf32>
    %284 = arith.truncf %283 : vector<32x16xf32> to vector<32x16xbf16>
    %cst_150 = arith.constant dense<0.000000e+00> : vector<32x80xf32>
    %285 = tpu.matmul %284, %234, %cst_150 {dimension_numbers = #tpu.dot_dimension_numbers<[1], [0], [0], [1], [0, 0, 1, 1], [], []>} : vector<32x16xbf16>, vector<16x80xbf16>, vector<32x80xf32> -> vector<32x80xf32>
    %286 = vector.broadcast %236 : vector<1x80xf32> to vector<32x80xf32>
    %287 = arith.addf %285, %286 : vector<32x80xf32>
    %288 = vector.extract_strided_slice %287 {offsets = [0, 0], sizes = [32, 16], strides = [1, 1]} : vector<32x80xf32> to vector<32x16xf32>
    %cst_151 = arith.constant 2.000000e+01 : f32
    %289 = vector.broadcast %cst_151 : f32 to vector<32x16xf32>
    %290 = arith.cmpf ogt, %288, %289 : vector<32x16xf32>
    %cst_152 = arith.constant 2.000000e+01 : f32
    %291 = vector.broadcast %cst_152 : f32 to vector<32x16xf32>
    %292 = arith.minimumf %288, %291 : vector<32x16xf32>
    %293 = math.exp %292 : vector<32x16xf32>
    %cst_153 = arith.constant 1.000000e+00 : f32
    %294 = vector.broadcast %cst_153 : f32 to vector<32x16xf32>
    %295 = arith.addf %294, %293 : vector<32x16xf32>
    %296 = math.log %295 : vector<32x16xf32>
    %297 = arith.select %290, %288, %296 : vector<32x16xi1>, vector<32x16xf32>
    %298 = vector.extract_strided_slice %287 {offsets = [0, 16], sizes = [32, 32], strides = [1, 1]} : vector<32x80xf32> to vector<32x32xf32>
    %299 = vector.extract_strided_slice %287 {offsets = [0, 48], sizes = [32, 32], strides = [1, 1]} : vector<32x80xf32> to vector<32x32xf32>
    %300 = arith.mulf %299, %298 : vector<32x32xf32>
    %cst_154 = arith.constant dense<0.000000e+00> : vector<32xf32>
    %301 = vector.multi_reduction <add>, %300, %cst_154 [1] : vector<32x32xf32> to vector<32xf32>
    %302 = vector.shape_cast %301 : vector<32xf32> to vector<32x1xf32>
    %303 = arith.mulf %283, %297 : vector<32x16xf32>
    %304 = vector.broadcast %302 : vector<32x1xf32> to vector<32x16xf32>
    %305 = arith.mulf %303, %304 : vector<32x16xf32>
    %cst_155 = arith.constant 0.000000e+00 : f32
    %306 = vector.broadcast %cst_155 : f32 to vector<32x16xf32>
    %307 = arith.subf %306, %305 : vector<32x16xf32>
    %308 = math.exp %307 : vector<32x16xf32>
    %cst_156 = arith.constant 1.000000e+00 : f32
    %309 = vector.broadcast %cst_156 : f32 to vector<32x16xf32>
    %310 = arith.addf %309, %308 : vector<32x16xf32>
    %cst_157 = arith.constant 1.000000e+00 : f32
    %311 = vector.broadcast %cst_157 : f32 to vector<32x16xf32>
    %312 = arith.divf %311, %310 : vector<32x16xf32>
    %313 = arith.mulf %305, %312 : vector<32x16xf32>
    %cst_158 = arith.constant 0.000000e+00 : f32
    %314 = vector.broadcast %cst_158 : f32 to vector<32x16xf32>
    %315 = arith.subf %314, %258 : vector<32x16xf32>
    %316 = math.exp %315 : vector<32x16xf32>
    %cst_159 = arith.constant 1.000000e+00 : f32
    %317 = vector.broadcast %cst_159 : f32 to vector<32x16xf32>
    %318 = arith.addf %317, %316 : vector<32x16xf32>
    %cst_160 = arith.constant 1.000000e+00 : f32
    %319 = vector.broadcast %cst_160 : f32 to vector<32x16xf32>
    %320 = arith.divf %319, %318 : vector<32x16xf32>
    %321 = arith.mulf %258, %320 : vector<32x16xf32>
    %322 = arith.mulf %313, %321 : vector<32x16xf32>
    %323 = arith.truncf %322 : vector<32x16xf32> to vector<32x16xbf16>
    %cst_161 = arith.constant dense<0.000000e+00> : vector<32x8xf32>
    %324 = tpu.matmul %323, %238, %cst_161 {dimension_numbers = #tpu.dot_dimension_numbers<[1], [0], [0], [1], [0, 0, 1, 1], [], []>} : vector<32x16xbf16>, vector<16x8xbf16>, vector<32x8xf32> -> vector<32x8xf32>
    %325 = vector.broadcast %240 : vector<1x8xf32> to vector<32x8xf32>
    %326 = arith.addf %324, %325 : vector<32x8xf32>
    %327 = vector.shape_cast %326 : vector<32x8xf32> to vector<2x16x8xf32>
    %c0_162 = arith.constant 0 : index
    %c0_163 = arith.constant 0 : index
    %c0_164 = arith.constant 0 : index
    %328 = vector.load %arg13[%c0_162, %c0_163, %c0_164] : memref<2x16x8xf32, #tpu.memory_space<vmem>>, vector<2x16x8xf32>
    tpu.vector_store %arg13[%c0_162, %c0_163, %c0_164], %327 {strides = array<i32>} : memref<2x16x8xf32, #tpu.memory_space<vmem>>, vector<2x16x8xf32>,
    return
  }
  func.func @transform_0(%arg0: i32) -> (i32, i32, i32) {
    %c0_i32 = arith.constant 0 : i32
    %c0_i32_0 = arith.constant 0 : i32
    %c0_i32_1 = arith.constant 0 : i32
    return %arg0, %c0_i32, %c0_i32_0 : i32, i32, i32
  }
  func.func @transform_1(%arg0: i32) -> (i32, i32, i32) {
    %c0_i32 = arith.constant 0 : i32
    %c0_i32_0 = arith.constant 0 : i32
    %c0_i32_1 = arith.constant 0 : i32
    %c0_i32_2 = arith.constant 0 : i32
    return %c0_i32, %c0_i32_0, %c0_i32_1 : i32, i32, i32
  }
  func.func @transform_2(%arg0: i32) -> (i32, i32, i32) {
    %c0_i32 = arith.constant 0 : i32
    %c0_i32_0 = arith.constant 0 : i32
    %c0_i32_1 = arith.constant 0 : i32
    %c0_i32_2 = arith.constant 0 : i32
    return %c0_i32, %c0_i32_0, %c0_i32_1 : i32, i32, i32
  }
  func.func @transform_3(%arg0: i32) -> (i32, i32, i32) {
    %c0_i32 = arith.constant 0 : i32
    %c0_i32_0 = arith.constant 0 : i32
    %c0_i32_1 = arith.constant 0 : i32
    %c0_i32_2 = arith.constant 0 : i32
    return %c0_i32, %c0_i32_0, %c0_i32_1 : i32, i32, i32
  }
  func.func @transform_4(%arg0: i32) -> (i32, i32, i32) {
    %c0_i32 = arith.constant 0 : i32
    %c0_i32_0 = arith.constant 0 : i32
    %c0_i32_1 = arith.constant 0 : i32
    %c0_i32_2 = arith.constant 0 : i32
    return %c0_i32, %c0_i32_0, %c0_i32_1 : i32, i32, i32
  }
  func.func @transform_5(%arg0: i32) -> (i32, i32, i32) {
    %c0_i32 = arith.constant 0 : i32
    %c0_i32_0 = arith.constant 0 : i32
    %c0_i32_1 = arith.constant 0 : i32
    %c0_i32_2 = arith.constant 0 : i32
    return %c0_i32, %c0_i32_0, %c0_i32_1 : i32, i32, i32
  }
  func.func @transform_6(%arg0: i32) -> (i32, i32, i32) {
    %c0_i32 = arith.constant 0 : i32
    %c0_i32_0 = arith.constant 0 : i32
    %c0_i32_1 = arith.constant 0 : i32
    %c0_i32_2 = arith.constant 0 : i32
    return %c0_i32, %c0_i32_0, %c0_i32_1 : i32, i32, i32
  }
  func.func @transform_7(%arg0: i32) -> (i32, i32, i32) {
    %c0_i32 = arith.constant 0 : i32
    %c0_i32_0 = arith.constant 0 : i32
    %c0_i32_1 = arith.constant 0 : i32
    %c0_i32_2 = arith.constant 0 : i32
    return %c0_i32, %c0_i32_0, %c0_i32_1 : i32, i32, i32
  }
  func.func @transform_8(%arg0: i32) -> (i32, i32, i32) {
    %c0_i32 = arith.constant 0 : i32
    %c0_i32_0 = arith.constant 0 : i32
    %c0_i32_1 = arith.constant 0 : i32
    %c0_i32_2 = arith.constant 0 : i32
    return %c0_i32, %c0_i32_0, %c0_i32_1 : i32, i32, i32
  }
  func.func @transform_9(%arg0: i32) -> (i32, i32, i32) {
    %c0_i32 = arith.constant 0 : i32
    %c0_i32_0 = arith.constant 0 : i32
    %c0_i32_1 = arith.constant 0 : i32
    %c0_i32_2 = arith.constant 0 : i32
    return %c0_i32, %c0_i32_0, %c0_i32_1 : i32, i32, i32
  }
  func.func @transform_10(%arg0: i32) -> (i32, i32, i32) {
    %c0_i32 = arith.constant 0 : i32
    %c0_i32_0 = arith.constant 0 : i32
    %c0_i32_1 = arith.constant 0 : i32
    %c0_i32_2 = arith.constant 0 : i32
    return %c0_i32, %c0_i32_0, %c0_i32_1 : i32, i32, i32
  }
  func.func @transform_11(%arg0: i32) -> (i32, i32, i32) {
    %c0_i32 = arith.constant 0 : i32
    %c0_i32_0 = arith.constant 0 : i32
    %c0_i32_1 = arith.constant 0 : i32
    %c0_i32_2 = arith.constant 0 : i32
    return %c0_i32, %c0_i32_0, %c0_i32_1 : i32, i32, i32
  }
  func.func @transform_12(%arg0: i32) -> (i32, i32, i32) {
    %c0_i32 = arith.constant 0 : i32
    %c0_i32_0 = arith.constant 0 : i32
    %c0_i32_1 = arith.constant 0 : i32
    return %arg0, %c0_i32, %c0_i32_0 : i32, i32, i32
  }
}

</mosaic_0001>

<llo_original>
// kernel: tpu_custom_call.1
$region0: #{tpu_custom_call.1}
  #allocation0 [shape = 'u32[]', space=smem, size = 0x4, offset = 0x4, fixed_abs, tag = 'smem constant byte address 0x4 - core index']
  #allocation1 [shape = 'u32[144,128]{1,0:T(1,128)}', space=vmem, size = 0x12000, scoped, tag = 'internal scratch']
  %s0 = inlined_call_operand.vmem [shape: f32[4,16,8], index: 0, kind: input, shape index: {}]
  %s1 = inlined_call_operand.vmem [shape: f32[3,1,8], index: 1, kind: input, shape index: {}]
  %s2 = inlined_call_operand.vmem [shape: bf16[3,8,32], index: 2, kind: input, shape index: {}]
  %s3 = inlined_call_operand.vmem [shape: f32[3,1,32], index: 3, kind: input, shape index: {}]
  %s4 = inlined_call_operand.vmem [shape: bf16[3,16,48], index: 4, kind: input, shape index: {}]
  %s5 = inlined_call_operand.vmem [shape: f32[3,16,1], index: 5, kind: input, shape index: {}]
  %s6 = inlined_call_operand.vmem [shape: bf16[3,16,16], index: 6, kind: input, shape index: {}]
  %s7 = inlined_call_operand.vmem [shape: f32[3,1,16], index: 7, kind: input, shape index: {}]
  %s8 = inlined_call_operand.vmem [shape: bf16[3,16,80], index: 8, kind: input, shape index: {}]
  %s9 = inlined_call_operand.vmem [shape: f32[3,1,80], index: 9, kind: input, shape index: {}]
  %s10 = inlined_call_operand.vmem [shape: bf16[3,16,8], index: 10, kind: input, shape index: {}]
  %s11 = inlined_call_operand.vmem [shape: f32[3,1,8], index: 11, kind: input, shape index: {}]
  %s12 = inlined_call_operand.vmem [shape: f32[4,16,8], index: 12, kind: output, shape index: {}]
  %s13 = sld [smem:[#allocation0]]
  $region81: #{tpu_custom_call.1} parent=0
    _
  %s15 = ssub.s32 1, %s13
  %s16 = scalar_select 0, %s15, %s13
  loop: start=0, step=1, limit=4
  $region2: #{tpu_custom_call.1} parent=0 // loop_pre_header
    _
  $region3: #{tpu_custom_call.1} parent=0 // loop_header
    %s18 = sphi 0, %s22
    %p19 = scmp.ge.s32.totalorder %s18, 4
    %s28 = sphi 0, %s30
    %s31 = sphi 0, %s28
    %s32 = sphi 0, %s31
    %s48 = sphi 0, %s32
    %s52 = sphi 0, %s52
    %s54 = sphi 0, %s52
    %s55 = sphi 0, %s54
    %s69 = sphi 0, %s55
    %s73 = sphi 0, %s73
    %s75 = sphi 0, %s73
    %s76 = sphi 0, %s75
    %s90 = sphi 0, %s76
    %s94 = sphi 0, %s94
    %s96 = sphi 0, %s94
    %s97 = sphi 0, %s96
    %s111 = sphi 0, %s97
    %s115 = sphi 0, %s115
    %s117 = sphi 0, %s115
    %s118 = sphi 0, %s117
    %s132 = sphi 0, %s118
    %s136 = sphi 0, %s136
    %s138 = sphi 0, %s136
    %s139 = sphi 0, %s138
    %s153 = sphi 0, %s139
    %s157 = sphi 0, %s157
    %s159 = sphi 0, %s157
    %s160 = sphi 0, %s159
    %s174 = sphi 0, %s160
    %s178 = sphi 0, %s178
    %s180 = sphi 0, %s178
    %s181 = sphi 0, %s180
    %s195 = sphi 0, %s181
    %s199 = sphi 0, %s199
    %s201 = sphi 0, %s199
    %s202 = sphi 0, %s201
    %s216 = sphi 0, %s202
    %s220 = sphi 0, %s220
    %s222 = sphi 0, %s220
    %s223 = sphi 0, %s222
    %s237 = sphi 0, %s223
    %s241 = sphi 0, %s241
    %s243 = sphi 0, %s241
    %s244 = sphi 0, %s243
    %s258 = sphi 0, %s244
    %s262 = sphi 0, %s262
    %s264 = sphi 0, %s262
    %s265 = sphi 0, %s264
    %s279 = sphi 0, %s265
    %s285 = sphi 0, %s287
    %s288 = sphi 0, %s285
    %s289 = sphi 0, %s288
    %s305 = sphi 0, %s289
  $region4: #{tpu_custom_call.1} parent=0 // loop_header_branch
    %21 = sbr.rel (%p19) target = $region8
  $region5: #{tpu_custom_call.1} parent=0 // loop_body
    %s23 = ssub.s32 %s18, 1
    %s24 = ssub.s32 %s18, 2
    %s25 = sadd.s32 %s18, 1
    %s26 = ssub.s32 %s18, %s25
    %p27 = scmp.eq.s32.totalorder %s26, 0
    %s29 = sadd.s32 %s28, 1
    %s30 = scalar_select %p27, %s28, %s29
    %p33 = pneg %p27
    %p34 = scmp.eq.s32.totalorder %s18, 1
    %p35 = por %p33, %p34
    %p36 = scmp.ne.s32.totalorder %s28, %s31
    %p37 = scmp.eq.s32.totalorder %s18, 0
    %p38 = por %p36, %p37
    %p39 = scmp.ne.s32.totalorder %s28, %s31
    %p40 = scmp.eq.s32.totalorder %s23, 1
    %p41 = por %p39, %p40
    %p42 = scmp.ne.s32.totalorder %s31, %s32
    %p43 = scmp.eq.s32.totalorder %s23, 0
    %p44 = por %p42, %p43
    %p45 = scmp.ne.s32.totalorder %s31, %s32
    %p46 = scmp.eq.s32.totalorder %s24, 1
    %p47 = por %p45, %p46
    %p49 = scmp.ne.s32.totalorder %s32, %s48
    %p50 = scmp.eq.s32.totalorder %s24, 0
    %p51 = por %p49, %p50
    %s53 = sadd.s32 %s52, 1
    %p56 = scmp.eq.s32.totalorder %s18, 1
    %p57 = scmp.ne.s32.totalorder %s52, %s54
    %p58 = scmp.eq.s32.totalorder %s18, 0
    %p59 = por %p57, %p58
    %p60 = scmp.ne.s32.totalorder %s52, %s54
    %p61 = scmp.eq.s32.totalorder %s23, 1
    %p62 = por %p60, %p61
    %p63 = scmp.ne.s32.totalorder %s54, %s55
    %p64 = scmp.eq.s32.totalorder %s23, 0
    %p65 = por %p63, %p64
    %p66 = scmp.ne.s32.totalorder %s54, %s55
    %p67 = scmp.eq.s32.totalorder %s24, 1
    %p68 = por %p66, %p67
    %p70 = scmp.ne.s32.totalorder %s55, %s69
    %p71 = scmp.eq.s32.totalorder %s24, 0
    %p72 = por %p70, %p71
    %s74 = sadd.s32 %s73, 1
    %p77 = scmp.eq.s32.totalorder %s18, 1
    %p78 = scmp.ne.s32.totalorder %s73, %s75
    %p79 = scmp.eq.s32.totalorder %s18, 0
    %p80 = por %p78, %p79
    %p81 = scmp.ne.s32.totalorder %s73, %s75
    %p82 = scmp.eq.s32.totalorder %s23, 1
    %p83 = por %p81, %p82
    %p84 = scmp.ne.s32.totalorder %s75, %s76
    %p85 = scmp.eq.s32.totalorder %s23, 0
    %p86 = por %p84, %p85
    %p87 = scmp.ne.s32.totalorder %s75, %s76
    %p88 = scmp.eq.s32.totalorder %s24, 1
    %p89 = por %p87, %p88
    %p91 = scmp.ne.s32.totalorder %s76, %s90
    %p92 = scmp.eq.s32.totalorder %s24, 0
    %p93 = por %p91, %p92
    %s95 = sadd.s32 %s94, 1
    %p98 = scmp.eq.s32.totalorder %s18, 1
    %p99 = scmp.ne.s32.totalorder %s94, %s96
    %p100 = scmp.eq.s32.totalorder %s18, 0
    %p101 = por %p99, %p100
    %p102 = scmp.ne.s32.totalorder %s94, %s96
    %p103 = scmp.eq.s32.totalorder %s23, 1
    %p104 = por %p102, %p103
    %p105 = scmp.ne.s32.totalorder %s96, %s97
    %p106 = scmp.eq.s32.totalorder %s23, 0
    %p107 = por %p105, %p106
    %p108 = scmp.ne.s32.totalorder %s96, %s97
    %p109 = scmp.eq.s32.totalorder %s24, 1
    %p110 = por %p108, %p109
    %p112 = scmp.ne.s32.totalorder %s97, %s111
    %p113 = scmp.eq.s32.totalorder %s24, 0
    %p114 = por %p112, %p113
    %s116 = sadd.s32 %s115, 1
    %p119 = scmp.eq.s32.totalorder %s18, 1
    %p120 = scmp.ne.s32.totalorder %s115, %s117
    %p121 = scmp.eq.s32.totalorder %s18, 0
    %p122 = por %p120, %p121
    %p123 = scmp.ne.s32.totalorder %s115, %s117
    %p124 = scmp.eq.s32.totalorder %s23, 1
    %p125 = por %p123, %p124
    %p126 = scmp.ne.s32.totalorder %s117, %s118
    %p127 = scmp.eq.s32.totalorder %s23, 0
    %p128 = por %p126, %p127
    %p129 = scmp.ne.s32.totalorder %s117, %s118
    %p130 = scmp.eq.s32.totalorder %s24, 1
    %p131 = por %p129, %p130
    %p133 = scmp.ne.s32.totalorder %s118, %s132
    %p134 = scmp.eq.s32.totalorder %s24, 0
    %p135 = por %p133, %p134
    %s137 = sadd.s32 %s136, 1
    %p140 = scmp.eq.s32.totalorder %s18, 1
    %p141 = scmp.ne.s32.totalorder %s136, %s138
    %p142 = scmp.eq.s32.totalorder %s18, 0
    %p143 = por %p141, %p142
    %p144 = scmp.ne.s32.totalorder %s136, %s138
    %p145 = scmp.eq.s32.totalorder %s23, 1
    %p146 = por %p144, %p145
    %p147 = scmp.ne.s32.totalorder %s138, %s139
    %p148 = scmp.eq.s32.totalorder %s23, 0
    %p149 = por %p147, %p148
    %p150 = scmp.ne.s32.totalorder %s138, %s139
    %p151 = scmp.eq.s32.totalorder %s24, 1
    %p152 = por %p150, %p151
    %p154 = scmp.ne.s32.totalorder %s139, %s153
    %p155 = scmp.eq.s32.totalorder %s24, 0
    %p156 = por %p154, %p155
    %s158 = sadd.s32 %s157, 1
    %p161 = scmp.eq.s32.totalorder %s18, 1
    %p162 = scmp.ne.s32.totalorder %s157, %s159
    %p163 = scmp.eq.s32.totalorder %s18, 0
    %p164 = por %p162, %p163
    %p165 = scmp.ne.s32.totalorder %s157, %s159
    %p166 = scmp.eq.s32.totalorder %s23, 1
    %p167 = por %p165, %p166
    %p168 = scmp.ne.s32.totalorder %s159, %s160
    %p169 = scmp.eq.s32.totalorder %s23, 0
    %p170 = por %p168, %p169
    %p171 = scmp.ne.s32.totalorder %s159, %s160
    %p172 = scmp.eq.s32.totalorder %s24, 1
    %p173 = por %p171, %p172
    %p175 = scmp.ne.s32.totalorder %s160, %s174
    %p176 = scmp.eq.s32.totalorder %s24, 0
    %p177 = por %p175, %p176
    %s179 = sadd.s32 %s178, 1
    %p182 = scmp.eq.s32.totalorder %s18, 1
    %p183 = scmp.ne.s32.totalorder %s178, %s180
    %p184 = scmp.eq.s32.totalorder %s18, 0
    %p185 = por %p183, %p184
    %p186 = scmp.ne.s32.totalorder %s178, %s180
    %p187 = scmp.eq.s32.totalorder %s23, 1
    %p188 = por %p186, %p187
    %p189 = scmp.ne.s32.totalorder %s180, %s181
    %p190 = scmp.eq.s32.totalorder %s23, 0
    %p191 = por %p189, %p190
    %p192 = scmp.ne.s32.totalorder %s180, %s181
    %p193 = scmp.eq.s32.totalorder %s24, 1
    %p194 = por %p192, %p193
    %p196 = scmp.ne.s32.totalorder %s181, %s195
    %p197 = scmp.eq.s32.totalorder %s24, 0
    %p198 = por %p196, %p197
    %s200 = sadd.s32 %s199, 1
    %p203 = scmp.eq.s32.totalorder %s18, 1
    %p204 = scmp.ne.s32.totalorder %s199, %s201
    %p205 = scmp.eq.s32.totalorder %s18, 0
    %p206 = por %p204, %p205
    %p207 = scmp.ne.s32.totalorder %s199, %s201
    %p208 = scmp.eq.s32.totalorder %s23, 1
    %p209 = por %p207, %p208
    %p210 = scmp.ne.s32.totalorder %s201, %s202
    %p211 = scmp.eq.s32.totalorder %s23, 0
    %p212 = por %p210, %p211
    %p213 = scmp.ne.s32.totalorder %s201, %s202
    %p214 = scmp.eq.s32.totalorder %s24, 1
    %p215 = por %p213, %p214
    %p217 = scmp.ne.s32.totalorder %s202, %s216
    %p218 = scmp.eq.s32.totalorder %s24, 0
    %p219 = por %p217, %p218
    %s221 = sadd.s32 %s220, 1
    %p224 = scmp.eq.s32.totalorder %s18, 1
    %p225 = scmp.ne.s32.totalorder %s220, %s222
    %p226 = scmp.eq.s32.totalorder %s18, 0
    %p227 = por %p225, %p226
    %p228 = scmp.ne.s32.totalorder %s220, %s222
    %p229 = scmp.eq.s32.totalorder %s23, 1
    %p230 = por %p228, %p229
    %p231 = scmp.ne.s32.totalorder %s222, %s223
    %p232 = scmp.eq.s32.totalorder %s23, 0
    %p233 = por %p231, %p232
    %p234 = scmp.ne.s32.totalorder %s222, %s223
    %p235 = scmp.eq.s32.totalorder %s24, 1
    %p236 = por %p234, %p235
    %p238 = scmp.ne.s32.totalorder %s223, %s237
    %p239 = scmp.eq.s32.totalorder %s24, 0
    %p240 = por %p238, %p239
    %s242 = sadd.s32 %s241, 1
    %p245 = scmp.eq.s32.totalorder %s18, 1
    %p246 = scmp.ne.s32.totalorder %s241, %s243
    %p247 = scmp.eq.s32.totalorder %s18, 0
    %p248 = por %p246, %p247
    %p249 = scmp.ne.s32.totalorder %s241, %s243
    %p250 = scmp.eq.s32.totalorder %s23, 1
    %p251 = por %p249, %p250
    %p252 = scmp.ne.s32.totalorder %s243, %s244
    %p253 = scmp.eq.s32.totalorder %s23, 0
    %p254 = por %p252, %p253
    %p255 = scmp.ne.s32.totalorder %s243, %s244
    %p256 = scmp.eq.s32.totalorder %s24, 1
    %p257 = por %p255, %p256
    %p259 = scmp.ne.s32.totalorder %s244, %s258
    %p260 = scmp.eq.s32.totalorder %s24, 0
    %p261 = por %p259, %p260
    %s263 = sadd.s32 %s262, 1
    %p266 = scmp.eq.s32.totalorder %s18, 1
    %p267 = scmp.ne.s32.totalorder %s262, %s264
    %p268 = scmp.eq.s32.totalorder %s18, 0
    %p269 = por %p267, %p268
    %p270 = scmp.ne.s32.totalorder %s262, %s264
    %p271 = scmp.eq.s32.totalorder %s23, 1
    %p272 = por %p270, %p271
    %p273 = scmp.ne.s32.totalorder %s264, %s265
    %p274 = scmp.eq.s32.totalorder %s23, 0
    %p275 = por %p273, %p274
    %p276 = scmp.ne.s32.totalorder %s264, %s265
    %p277 = scmp.eq.s32.totalorder %s24, 1
    %p278 = por %p276, %p277
    %p280 = scmp.ne.s32.totalorder %s265, %s279
    %p281 = scmp.eq.s32.totalorder %s24, 0
    %p282 = por %p280, %p281
    %s283 = ssub.s32 %s18, %s25
    %p284 = scmp.eq.s32.totalorder %s283, 0
    %s286 = sadd.s32 %s285, 1
    %s287 = scalar_select %p284, %s285, %s286
    %p290 = pneg %p284
    %p291 = scmp.eq.s32.totalorder %s18, 1
    %p292 = por %p290, %p291
    %p293 = scmp.ne.s32.totalorder %s285, %s288
    %p294 = scmp.eq.s32.totalorder %s18, 0
    %p295 = por %p293, %p294
    %p296 = scmp.ne.s32.totalorder %s285, %s288
    %p297 = scmp.eq.s32.totalorder %s23, 1
    %p298 = por %p296, %p297
    %p299 = scmp.ne.s32.totalorder %s288, %s289
    %p300 = scmp.eq.s32.totalorder %s23, 0
    %p301 = por %p299, %p300
    %p302 = scmp.ne.s32.totalorder %s288, %s289
    %p303 = scmp.eq.s32.totalorder %s24, 1
    %p304 = por %p302, %p303
    %p306 = scmp.ne.s32.totalorder %s289, %s305
    %p307 = scmp.eq.s32.totalorder %s24, 0
    %p308 = por %p306, %p307
    %p309 = scmp.le.s32.totalorder 1, %s18
    %p310 = scmp.lt.s32.totalorder %s18, 3
    %p311 = pnand %p309, %p310
    %p312 = pneg %p311
    // Predicated region
    $region9: #{tpu_custom_call.1} parent=5 // pred_check
      _
    $region10: #{tpu_custom_call.1} parent=5 // pred_check_branch
      %314 = sbr.rel (%p311) target = $region12
    $region11: #{tpu_custom_call.1} parent=5 // pred_region
      %s315 = ssub.s32 %s18, 1
      // Predicated region
      $region13: #{tpu_custom_call.1} parent=11 // pred_check
        %p316 = pneg %p65
      $region14: #{tpu_custom_call.1} parent=11 // pred_check_branch
        %318 = sbr.rel (%p316) target = $region16
      $region15: #{tpu_custom_call.1} parent=11 // pred_region
        _
      $region16: #{tpu_custom_call.1} parent=11 // pred_fallthru
        _
      // Predicated region
      $region17: #{tpu_custom_call.1} parent=11 // pred_check
        %p319 = pneg %p86
      $region18: #{tpu_custom_call.1} parent=11 // pred_check_branch
        %321 = sbr.rel (%p319) target = $region20
      $region19: #{tpu_custom_call.1} parent=11 // pred_region
        _
      $region20: #{tpu_custom_call.1} parent=11 // pred_fallthru
        _
      // Predicated region
      $region21: #{tpu_custom_call.1} parent=11 // pred_check
        %p322 = pneg %p107
      $region22: #{tpu_custom_call.1} parent=11 // pred_check_branch
        %324 = sbr.rel (%p322) target = $region24
      $region23: #{tpu_custom_call.1} parent=11 // pred_region
        _
      $region24: #{tpu_custom_call.1} parent=11 // pred_fallthru
        _
      // Predicated region
      $region25: #{tpu_custom_call.1} parent=11 // pred_check
        %p325 = pneg %p128
      $region26: #{tpu_custom_call.1} parent=11 // pred_check_branch
        %327 = sbr.rel (%p325) target = $region28
      $region27: #{tpu_custom_call.1} parent=11 // pred_region
        _
      $region28: #{tpu_custom_call.1} parent=11 // pred_fallthru
        _
      // Predicated region
      $region29: #{tpu_custom_call.1} parent=11 // pred_check
        %p328 = pneg %p149
      $region30: #{tpu_custom_call.1} parent=11 // pred_check_branch
        %330 = sbr.rel (%p328) target = $region32
      $region31: #{tpu_custom_call.1} parent=11 // pred_region
        _
      $region32: #{tpu_custom_call.1} parent=11 // pred_fallthru
        _
      // Predicated region
      $region33: #{tpu_custom_call.1} parent=11 // pred_check
        %p331 = pneg %p170
      $region34: #{tpu_custom_call.1} parent=11 // pred_check_branch
        %333 = sbr.rel (%p331) target = $region36
      $region35: #{tpu_custom_call.1} parent=11 // pred_region
        _
      $region36: #{tpu_custom_call.1} parent=11 // pred_fallthru
        _
      // Predicated region
      $region37: #{tpu_custom_call.1} parent=11 // pred_check
        %p334 = pneg %p191
      $region38: #{tpu_custom_call.1} parent=11 // pred_check_branch
        %336 = sbr.rel (%p334) target = $region40
      $region39: #{tpu_custom_call.1} parent=11 // pred_region
        _
      $region40: #{tpu_custom_call.1} parent=11 // pred_fallthru
        _
      // Predicated region
      $region41: #{tpu_custom_call.1} parent=11 // pred_check
        %p337 = pneg %p212
      $region42: #{tpu_custom_call.1} parent=11 // pred_check_branch
        %339 = sbr.rel (%p337) target = $region44
      $region43: #{tpu_custom_call.1} parent=11 // pred_region
        _
      $region44: #{tpu_custom_call.1} parent=11 // pred_fallthru
        _
      // Predicated region
      $region45: #{tpu_custom_call.1} parent=11 // pred_check
        %p340 = pneg %p233
      $region46: #{tpu_custom_call.1} parent=11 // pred_check_branch
        %342 = sbr.rel (%p340) target = $region48
      $region47: #{tpu_custom_call.1} parent=11 // pred_region
        _
      $region48: #{tpu_custom_call.1} parent=11 // pred_fallthru
        _
      // Predicated region
      $region49: #{tpu_custom_call.1} parent=11 // pred_check
        %p343 = pneg %p254
      $region50: #{tpu_custom_call.1} parent=11 // pred_check_branch
        %345 = sbr.rel (%p343) target = $region52
      $region51: #{tpu_custom_call.1} parent=11 // pred_region
        _
      $region52: #{tpu_custom_call.1} parent=11 // pred_fallthru
        _
      // Predicated region
      $region53: #{tpu_custom_call.1} parent=11 // pred_check
        %p346 = pneg %p275
      $region54: #{tpu_custom_call.1} parent=11 // pred_check_branch
        %348 = sbr.rel (%p346) target = $region56
      $region55: #{tpu_custom_call.1} parent=11 // pred_region
        _
      $region56: #{tpu_custom_call.1} parent=11 // pred_fallthru
        _
    $region12: #{tpu_custom_call.1} parent=5 // pred_fallthru
      _
    %p349 = scmp.lt.s32.totalorder %s18, 2
    // Predicated region
    $region57: #{tpu_custom_call.1} parent=5 // pred_check
      %p350 = pneg %p349
    $region58: #{tpu_custom_call.1} parent=5 // pred_check_branch
      %352 = sbr.rel (%p350) target = $region60
    $region59: #{tpu_custom_call.1} parent=5 // pred_region
      // Predicated region
      $region61: #{tpu_custom_call.1} parent=59 // pred_check
        %p353 = pneg %p38
      $region62: #{tpu_custom_call.1} parent=59 // pred_check_branch
        %355 = sbr.rel (%p353) target = $region64
      $region63: #{tpu_custom_call.1} parent=59 // pred_region
        %s356 = smul.u32 2, %s18
        %p357 = scmp.lt.s32.totalorder %s356, 3
        %s358 = scalar_select %p357, %s356, 3
        %s359 = smul.addr %s358, 2
        %s360 = smul.addr %s359, 8
        %s361 = scalar_lea.vmem %s0, %s360
        %s362 = smul.u32 2, %s18
      $region64: #{tpu_custom_call.1} parent=59 // pred_fallthru
        _
    $region60: #{tpu_custom_call.1} parent=5 // pred_fallthru
      _
    %p363 = scmp.le.s32.totalorder 1, %s18
    %p364 = scmp.lt.s32.totalorder %s18, 3
    %p365 = pnand %p363, %p364
    %p366 = pneg %p365
    // Predicated region
    $region65: #{tpu_custom_call.1} parent=5 // pred_check
      _
    $region66: #{tpu_custom_call.1} parent=5 // pred_check_branch
      %368 = sbr.rel (%p365) target = $region68
    $region67: #{tpu_custom_call.1} parent=5 // pred_region
      %s369 = ssub.s32 %s18, 1
      %s370 = smul.u32 2, %s23
      %p371 = scmp.lt.s32.totalorder %s370, 3
      %s372 = scalar_select %p371, %s370, 3
      %s373 = smul.addr %s372, 2
      %s374 = smul.addr %s373, 8
      %s375 = scalar_lea.vmem %s0, %s374
      %p376 = pneg %p44
      %p377 = pneg %p41
      %p378 = pneg %p65
      %p379 = pneg %p62
      %p380 = pneg %p86
      %p381 = pneg %p83
      %p382 = pneg %p107
      %p383 = pneg %p104
      %p384 = pneg %p128
      %p385 = pneg %p125
      %p386 = pneg %p149
      %p387 = pneg %p146
      %p388 = pneg %p170
      %p389 = pneg %p167
      %p390 = pneg %p191
      %p391 = pneg %p188
      %p392 = pneg %p212
      %p393 = pneg %p209
      %p394 = pneg %p233
      %p395 = pneg %p230
      %p396 = pneg %p254
      %p397 = pneg %p251
      %p398 = pneg %p275
      %p399 = pneg %p272
      %p400 = pneg %p301
      %p401 = pneg %p298
      %s402 = smul.u32 2, %s23
      %p403 = scmp.lt.s32.totalorder %s402, 3
      %s404 = scalar_select %p403, %s402, 3
      %s405 = smul.addr %s404, 2
      %s406 = smul.addr %s405, 8
      %s407 = scalar_lea.vmem %s12, %s406
      %s408 = smul.u32 2, %s23
      %p409 = scmp.lt.s32.totalorder %s408, 3
      %s410 = scalar_select %p409, %s408, 3
      %s411 = smul.addr %s410, 2
      %s412 = smul.addr %s411, 8
      %s413 = scalar_lea.vmem %s0, %s412
      %s414 = smul.u32 2, %s23
      %s415 = smul.u32 2, %s23
      %p416 = scmp.lt.s32.totalorder %s415, 3
      %s417 = scalar_select %p416, %s415, 3
      %s418 = smul.addr %s417, 2
      %s419 = smul.addr %s418, 8
      %s420 = scalar_lea.vmem %s12, %s419
      %s421 = smul.u32 2, %s23
      %v423 = vld [vmem:[%s413] sm:$0xff]
      %v424 = vld [vmem:[%s413 + $0x8] sm:$0xff]
      %v425 = vld [vmem:[%s413 + $0x10] sm:$0xff]
      %v426 = vld [vmem:[%s413 + $0x18] sm:$0xff]
      %v427 = vld [vmem:[%s1] sm:$0x1]
      %v428 = vld [vmem:[%s2] sm:$0xf]
      %v429 = vld [vmem:[%s3] sm:$0x1]
      %v430 = vld [vmem:[%s4] sm:$0xf]
      %v431 = vld [vmem:[%s4 + $0x4] sm:$0xf]
      %v432 = vld [vmem:[%s5] sm:$0xff]
      %v433 = vld [vmem:[%s5 + $0x8] sm:$0xff]
      %v434 = vld [vmem:[%s6] sm:$0xf]
      %v435 = vld [vmem:[%s6 + $0x4] sm:$0xf]
      %v436 = vld [vmem:[%s7] sm:$0x1]
      %v437 = vld [vmem:[%s8] sm:$0xf]
      %v438 = vld [vmem:[%s8 + $0x4] sm:$0xf]
      %v439 = vld [vmem:[%s9] sm:$0x1]
      %v440 = vld [vmem:[%s10] sm:$0xf]
      %v441 = vld [vmem:[%s10 + $0x4] sm:$0xf]
      %v442 = vld [vmem:[%s11] sm:$0x1]
      %v443 = vmul.f32 %v423, %v423
      %v444 = vmul.f32 %v424, %v424
      %v445 = vmul.f32 %v425, %v425
      %v446 = vmul.f32 %v426, %v426
      %vm447 = vcmask 64512
      %v448 = vsel %vm447, %v443, 0.0
      %449 = vadd.xlane.f32.xlu0 %v448
      %v450 = vpop.xlane.xlu0 %449
      %v451 = vsel %vm447, %v444, 0.0
      %452 = vadd.xlane.f32.xlu0 %v451
      %v453 = vpop.xlane.xlu0 %452
      %v454 = vsel %vm447, %v445, 0.0
      %455 = vadd.xlane.f32.xlu0 %v454
      %v456 = vpop.xlane.xlu0 %455
      %v457 = vsel %vm447, %v446, 0.0
      %458 = vadd.xlane.f32.xlu0 %v457
      %v459 = vpop.xlane.xlu0 %458
      %v460 = vrcp.pop 8.0
      %v461 = vmul.f32 %v450, %v460
      %v462 = vmul.f32 %v453, %v460
      %v463 = vmul.f32 %v456, %v460
      %v464 = vmul.f32 %v459, %v460
      %v465 = vadd.f32 %v461, 1e-05
      %v466 = vadd.f32 %v462, 1e-05
      %v467 = vadd.f32 %v463, 1e-05
      %v468 = vadd.f32 %v464, 1e-05
      %v469 = vrsqrt.pop %v465
      %v470 = vrsqrt.pop %v466
      %v471 = vrsqrt.pop %v467
      %v472 = vrsqrt.pop %v468
      %v473 = vmul.f32 %v423, %v469
      %v474 = vmul.f32 %v424, %v470
      %v475 = vmul.f32 %v425, %v471
      %v476 = vmul.f32 %v426, %v472
      %v478 = vlaneseq
      %v479 = vshrl.u32 %v478, 7
      %v480 = vsub.s32 0, %v479
      %v481 = vrot.slane %v427, %v480
      %v483 = vmul.f32 %v473, %v481
      %v484 = vmul.f32 %v474, %v481
      %v485 = vmul.f32 %v475, %v481
      %v486 = vmul.f32 %v476, %v481
      %v487 = vpack.c.bf16 %v484, %v483
      %v488 = vpack.c.bf16 %v486, %v485
      %v490 = vlaneseq
      %v491 = vshrl.u32 %v490, 7
      %v492 = vsub.s32 0, %v491
      %v493 = vrot.slane %v429, %v492
      %v496 = vsel %vm447, %v487, 0
      %v499 = vsel %vm447, %v488, 0
      %vm501 = vcmask 1043456
      %v503 = vsel %vm501, %v428, 0
      %505 = vmatprep.subr.bf16.mxu0 0
      %506 = vmatpush1.bf16.msra.mxu0 0
      %507 = vmatprep.subr.bf16.mxu0 0
      %508 = vmatpush1.bf16.msra.mxu0 0
      %509 = vmatprep.subr.bf16.mxu0 0
      %510 = vmatpush1.bf16.msra.mxu0 0
      %511 = vmatprep.subr.bf16.mxu0 0
      %512 = vmatpush1.bf16.msra.mxu0 0
      %513 = vmatprep.subr.bf16.mxu0 0
      %514 = vmatpush1.bf16.msra.mxu0 0
      %515 = vmatprep.subr.bf16.mxu0 0
      %516 = vmatpush1.bf16.msra.mxu0 0
      %517 = vmatprep.subr.bf16.mxu0 0
      %518 = vmatpush1.bf16.msra.mxu0 0
      %519 = vmatprep.subr.bf16.mxu0 0
      %520 = vmatpush1.bf16.msra.mxu0 %v503
      %521 = vmatprep.subr.bf16.mxu0 0
      %522 = vmatpush2.bf16.msra.mxu0 0
      %523 = vmatprep.subr.bf16.mxu0 0
      %524 = vmatpush2.bf16.msra.mxu0 0
      %525 = vmatprep.subr.bf16.mxu0 0
      %526 = vmatpush2.bf16.msra.mxu0 0
      %527 = vmatprep.subr.bf16.mxu0 0
      %528 = vmatpush2.bf16.msra.mxu0 0
      %529 = vmatprep.subr.bf16.mxu0 0
      %530 = vmatpush2.bf16.msra.mxu0 0
      %531 = vmatprep.subr.bf16.mxu0 0
      %532 = vmatpush2.bf16.msra.mxu0 0
      %533 = vmatprep.subr.bf16.mxu0 0
      %534 = vmatpush2.bf16.msra.mxu0 0
      %535 = vmatprep.subr.bf16.mxu0 0
      %536 = vmatpush2.bf16.msra.mxu0 0
      %537 = vmatprep.mubr.bf16.mxu0 0
      %538 = vmatmul.mubr.bf16.gmra.mxu0 %v496
      %v539 = vpop.f32.mrf.mxu0
      %v540 = vadd.f32 %v493, %v539
      %v541 = vpop.f32.mrf.mxu0
      %v542 = vpop.f32.mrf.mxu0
      %v543 = vadd.f32 %v493, %v542
      %v544 = vpop.f32.mrf.mxu0
      %545 = vmatprep.mubr.bf16.mxu0 0
      %546 = vmatmul.mubr.bf16.gmra.mxu0 %v499
      %v547 = vpop.f32.mrf.mxu0
      %v548 = vadd.f32 %v493, %v547
      %v549 = vpop.f32.mrf.mxu0
      %v550 = vpop.f32.mrf.mxu0
      %v551 = vadd.f32 %v493, %v550
      %v552 = vpop.f32.mrf.mxu0
      %553 = vdwg.mxu0
      %558 = vrot.lane.b32.xlu0 %v540, 1
      %v559 = vpop.permute.xlu0 %558
      %560 = vrot.lane.b32.xlu0 %v543, 1
      %v561 = vpop.permute.xlu0 %560
      %562 = vrot.lane.b32.xlu0 %v548, 1
      %v563 = vpop.permute.xlu0 %562
      %564 = vrot.lane.b32.xlu0 %v551, 1
      %v565 = vpop.permute.xlu0 %564
      %vm570 = vcmask 7168
      %v571 = vsel %vm570, 0.0, %v559
      %v572 = vsel %vm570, 0.0, %v561
      %v573 = vsel %vm570, 0.0, %v563
      %v574 = vsel %vm570, 0.0, %v565
      %575 = vrot.lane.b32.xlu0 %v540, 127
      %v576 = vpop.permute.xlu0 %575
      %577 = vrot.lane.b32.xlu0 %v543, 127
      %v578 = vpop.permute.xlu0 %577
      %579 = vrot.lane.b32.xlu0 %v548, 127
      %v580 = vpop.permute.xlu0 %579
      %581 = vrot.lane.b32.xlu0 %v551, 127
      %v582 = vpop.permute.xlu0 %581
      %vm587 = vcmask 121856
      %v588 = vsel %vm587, %v576, 0.0
      %v589 = vsel %vm587, %v578, 0.0
      %v590 = vsel %vm587, %v580, 0.0
      %v591 = vsel %vm587, %v582, 0.0
      %v592 = vpack.c.bf16 %v572, %v571
      %v593 = vpack.c.bf16 %v543, %v540
      %v594 = vpack.c.bf16 %v589, %v588
      %v595 = vpack.c.bf16 %v574, %v573
      %v596 = vpack.c.bf16 %v551, %v548
      %v597 = vpack.c.bf16 %v591, %v590
      %598 = vxpose.xlu0.c.b16.start [1/8] %v592, 128
      %599 = vxpose.xlu0.c.b16.cont [2/8] %v593, 128
      %600 = vxpose.xlu0.c.b16.cont [3/8] %v594, 128
      %601 = vxpose.xlu0.c.b16.cont [4/8] 0, 128
      %602 = vxpose.xlu0.c.b16.cont [5/8] 0, 128
      %603 = vxpose.xlu0.c.b16.cont [6/8] 0, 128
      %604 = vxpose.xlu0.c.b16.cont [7/8] 0, 128
      %605 = vxpose.xlu0.c.b16.end [8/8] 0, 128
      %v606 = vpop.trf.xlu0
      %v607 = vpop.trf.xlu0
      %v608 = vpop.trf.xlu0
      %v609 = vpop.trf.xlu0
      %v610 = vpop.trf.xlu0
      %v611 = vpop.trf.xlu0
      %v612 = vpop.trf.xlu0
      %v613 = vpop.trf.xlu0
      %614 = vxpose.xlu0.c.b16.start [1/8] %v595, 128
      %615 = vxpose.xlu0.c.b16.cont [2/8] %v596, 128
      %616 = vxpose.xlu0.c.b16.cont [3/8] %v597, 128
      %617 = vxpose.xlu0.c.b16.cont [4/8] 0, 128
      %618 = vxpose.xlu0.c.b16.cont [5/8] 0, 128
      %619 = vxpose.xlu0.c.b16.cont [6/8] 0, 128
      %620 = vxpose.xlu0.c.b16.cont [7/8] 0, 128
      %621 = vxpose.xlu0.c.b16.end [8/8] 0, 128
      %v622 = vpop.trf.xlu0
      %v623 = vpop.trf.xlu0
      %v624 = vpop.trf.xlu0
      %v625 = vpop.trf.xlu0
      %v626 = vpop.trf.xlu0
      %v627 = vpop.trf.xlu0
      %v628 = vpop.trf.xlu0
      %v629 = vpop.trf.xlu0
      %v632 = vunpack.c.l.b16 %v430
      %v633 = vunpack.c.l.b16 %v431
      %v634 = vpack.c.b16 %v633, %v632
      %vm635 = vcmask 392192
      %v637 = vsel %vm635, %v606, 0
      %v640 = vsel %vm635, %v622, 0
      %v643 = vsel %vm635, %v634, 0
      %645 = vmatprep.subr.bf16.mxu0 0
      %646 = vmatpush1.bf16.xpose.msra.mxu0 0
      %647 = vmatprep.subr.bf16.mxu0 0
      %648 = vmatpush1.bf16.xpose.msra.mxu0 0
      %649 = vmatprep.subr.bf16.mxu0 0
      %650 = vmatpush1.bf16.xpose.msra.mxu0 0
      %651 = vmatprep.subr.bf16.mxu0 0
      %652 = vmatpush1.bf16.xpose.msra.mxu0 0
      %653 = vmatprep.subr.bf16.mxu0 0
      %654 = vmatpush1.bf16.xpose.msra.mxu0 0
      %655 = vmatprep.subr.bf16.mxu0 0
      %656 = vmatpush1.bf16.xpose.msra.mxu0 0
      %657 = vmatprep.subr.bf16.mxu0 0
      %658 = vmatpush1.bf16.xpose.msra.mxu0 0
      %659 = vmatprep.subr.bf16.mxu0 0
      %660 = vmatpush1.bf16.xpose.msra.mxu0 %v643
      %661 = vmatprep.subr.bf16.mxu0 0
      %662 = vmatpush2.bf16.xpose.msra.mxu0 0
      %663 = vmatprep.subr.bf16.mxu0 0
      %664 = vmatpush2.bf16.xpose.msra.mxu0 0
      %665 = vmatprep.subr.bf16.mxu0 0
      %666 = vmatpush2.bf16.xpose.msra.mxu0 0
      %667 = vmatprep.subr.bf16.mxu0 0
      %668 = vmatpush2.bf16.xpose.msra.mxu0 0
      %669 = vmatprep.subr.bf16.mxu0 0
      %670 = vmatpush2.bf16.xpose.msra.mxu0 0
      %671 = vmatprep.subr.bf16.mxu0 0
      %672 = vmatpush2.bf16.xpose.msra.mxu0 0
      %673 = vmatprep.subr.bf16.mxu0 0
      %674 = vmatpush2.bf16.xpose.msra.mxu0 0
      %675 = vmatprep.subr.bf16.mxu0 0
      %676 = vmatpush2.bf16.xpose.msra.mxu0 0
      %677 = vmatprep.mubr.bf16.mxu0 0
      %678 = vmatmul.mubr.bf16.gmra.mxu0 %v637
      %v679 = vpop.f32.mrf.mxu0
      %v680 = vadd.f32 0.0, %v679
      %v681 = vpop.f32.mrf.mxu0
      %v682 = vpop.f32.mrf.mxu0
      %v683 = vadd.f32 0.0, %v682
      %v684 = vpop.f32.mrf.mxu0
      %685 = vmatprep.mubr.bf16.mxu0 0
      %686 = vmatmul.mubr.bf16.gmra.mxu0 %v640
      %v687 = vpop.f32.mrf.mxu0
      %v688 = vadd.f32 0.0, %v687
      %v689 = vpop.f32.mrf.mxu0
      %v690 = vpop.f32.mrf.mxu0
      %v691 = vadd.f32 0.0, %v690
      %v692 = vpop.f32.mrf.mxu0
      %693 = vdwg.mxu0
      %694 = vxpose.xlu0.b32.start [1/16] %v680, 128
      %695 = vxpose.xlu0.b32.cont [2/16] %v683, 128
      %696 = vxpose.xlu0.b32.cont [3/16] 0.0, 128
      %697 = vxpose.xlu0.b32.cont [4/16] 0.0, 128
      %698 = vxpose.xlu0.b32.cont [5/16] 0.0, 128
      %699 = vxpose.xlu0.b32.cont [6/16] 0.0, 128
      %700 = vxpose.xlu0.b32.cont [7/16] 0.0, 128
      %701 = vxpose.xlu0.b32.cont [8/16] 0.0, 128
      %702 = vxpose.xlu0.b32.cont [9/16] 0.0, 128
      %703 = vxpose.xlu0.b32.cont [10/16] 0.0, 128
      %704 = vxpose.xlu0.b32.cont [11/16] 0.0, 128
      %705 = vxpose.xlu0.b32.cont [12/16] 0.0, 128
      %706 = vxpose.xlu0.b32.cont [13/16] 0.0, 128
      %707 = vxpose.xlu0.b32.cont [14/16] 0.0, 128
      %708 = vxpose.xlu0.b32.cont [15/16] 0.0, 128
      %709 = vxpose.xlu0.b32.end [16/16] 0.0, 128
      %v710 = vpop.trf.xlu0
      %v711 = vpop.trf.xlu0
      %v712 = vpop.trf.xlu0
      %v713 = vpop.trf.xlu0
      %v714 = vpop.trf.xlu0
      %v715 = vpop.trf.xlu0
      %v716 = vpop.trf.xlu0
      %v717 = vpop.trf.xlu0
      %v718 = vpop.trf.xlu0
      %v719 = vpop.trf.xlu0
      %v720 = vpop.trf.xlu0
      %v721 = vpop.trf.xlu0
      %v722 = vpop.trf.xlu0
      %v723 = vpop.trf.xlu0
      %v724 = vpop.trf.xlu0
      %v725 = vpop.trf.xlu0
      %726 = vxpose.xlu0.b32.start [1/16] %v688, 128
      %727 = vxpose.xlu0.b32.cont [2/16] %v691, 128
      %728 = vxpose.xlu0.b32.cont [3/16] 0.0, 128
      %729 = vxpose.xlu0.b32.cont [4/16] 0.0, 128
      %730 = vxpose.xlu0.b32.cont [5/16] 0.0, 128
      %731 = vxpose.xlu0.b32.cont [6/16] 0.0, 128
      %732 = vxpose.xlu0.b32.cont [7/16] 0.0, 128
      %733 = vxpose.xlu0.b32.cont [8/16] 0.0, 128
      %734 = vxpose.xlu0.b32.cont [9/16] 0.0, 128
      %735 = vxpose.xlu0.b32.cont [10/16] 0.0, 128
      %736 = vxpose.xlu0.b32.cont [11/16] 0.0, 128
      %737 = vxpose.xlu0.b32.cont [12/16] 0.0, 128
      %738 = vxpose.xlu0.b32.cont [13/16] 0.0, 128
      %739 = vxpose.xlu0.b32.cont [14/16] 0.0, 128
      %740 = vxpose.xlu0.b32.cont [15/16] 0.0, 128
      %741 = vxpose.xlu0.b32.end [16/16] 0.0, 128
      %v742 = vpop.trf.xlu0
      %v743 = vpop.trf.xlu0
      %v744 = vpop.trf.xlu0
      %v745 = vpop.trf.xlu0
      %v746 = vpop.trf.xlu0
      %v747 = vpop.trf.xlu0
      %v748 = vpop.trf.xlu0
      %v749 = vpop.trf.xlu0
      %v750 = vpop.trf.xlu0
      %v751 = vpop.trf.xlu0
      %v752 = vpop.trf.xlu0
      %v753 = vpop.trf.xlu0
      %v754 = vpop.trf.xlu0
      %v755 = vpop.trf.xlu0
      %v756 = vpop.trf.xlu0
      %v757 = vpop.trf.xlu0
      %759 = vset.pattern.permute.xlu0 0
      %760 = vperm.xlu0 %759, %v432
      %v761 = vpop.permute.xlu0 %760
      %764 = vset.pattern.permute.xlu0 0
      %765 = vperm.xlu0 %764, %v433
      %v766 = vpop.permute.xlu0 %765
      %v768 = vadd.f32 %v710, %v761
      %v769 = vadd.f32 %v711, %v766
      %v770 = vadd.f32 %v742, %v761
      %v771 = vadd.f32 %v743, %v766
      %v772 = vsub.f32 0.0, %v768
      %v773 = vsub.f32 0.0, %v769
      %v774 = vsub.f32 0.0, %v770
      %v775 = vsub.f32 0.0, %v771
      %v776 = vmul.f32 %v772, 1.442695
      %v777 = vpow.pop %v776
      %v778 = vmul.f32 %v773, 1.442695
      %v779 = vpow.pop %v778
      %v780 = vmul.f32 %v774, 1.442695
      %v781 = vpow.pop %v780
      %v782 = vmul.f32 %v775, 1.442695
      %v783 = vpow.pop %v782
      %v784 = vadd.f32 %v777, 1.0
      %v785 = vadd.f32 %v779, 1.0
      %v786 = vadd.f32 %v781, 1.0
      %v787 = vadd.f32 %v783, 1.0
      %v788 = vrcp.pop %v784
      %v789 = vmul.f32 1.0, %v788
      %v790 = vrcp.pop %v785
      %v791 = vmul.f32 1.0, %v790
      %v792 = vrcp.pop %v786
      %v793 = vmul.f32 1.0, %v792
      %v794 = vrcp.pop %v787
      %v795 = vmul.f32 1.0, %v794
      %v796 = vmul.f32 %v768, %v789
      %v797 = vmul.f32 %v769, %v791
      %v798 = vmul.f32 %v770, %v793
      %v799 = vmul.f32 %v771, %v795
      %v800 = vpack.c.bf16 %v797, %v796
      %v801 = vpack.c.bf16 %v799, %v798
      %v803 = vlaneseq
      %v804 = vshrl.u32 %v803, 7
      %v805 = vsub.s32 0, %v804
      %v806 = vrot.slane %v436, %v805
      %v810 = vunpack.c.l.b16 %v434
      %v811 = vunpack.c.l.b16 %v435
      %v812 = vpack.c.b16 %v811, %v810
      %vm814 = vcmask 130048
      %v816 = vsel %vm814, %v800, 0
      %v819 = vsel %vm814, %v801, 0
      %821 = vmatprep.subr.bf16.mxu0 0
      %822 = vmatpush1.bf16.msra.mxu0 0
      %823 = vmatprep.subr.bf16.mxu0 0
      %824 = vmatpush1.bf16.msra.mxu0 0
      %825 = vmatprep.subr.bf16.mxu0 0
      %826 = vmatpush1.bf16.msra.mxu0 0
      %827 = vmatprep.subr.bf16.mxu0 0
      %828 = vmatpush1.bf16.msra.mxu0 0
      %829 = vmatprep.subr.bf16.mxu0 0
      %830 = vmatpush1.bf16.msra.mxu0 0
      %831 = vmatprep.subr.bf16.mxu0 0
      %832 = vmatpush1.bf16.msra.mxu0 0
      %833 = vmatprep.subr.bf16.mxu0 0
      %834 = vmatpush1.bf16.msra.mxu0 0
      %835 = vmatprep.subr.bf16.mxu0 0
      %836 = vmatpush1.bf16.msra.mxu0 %v812
      %837 = vmatprep.subr.bf16.mxu0 0
      %838 = vmatpush2.bf16.msra.mxu0 0
      %839 = vmatprep.subr.bf16.mxu0 0
      %840 = vmatpush2.bf16.msra.mxu0 0
      %841 = vmatprep.subr.bf16.mxu0 0
      %842 = vmatpush2.bf16.msra.mxu0 0
      %843 = vmatprep.subr.bf16.mxu0 0
      %844 = vmatpush2.bf16.msra.mxu0 0
      %845 = vmatprep.subr.bf16.mxu0 0
      %846 = vmatpush2.bf16.msra.mxu0 0
      %847 = vmatprep.subr.bf16.mxu0 0
      %848 = vmatpush2.bf16.msra.mxu0 0
      %849 = vmatprep.subr.bf16.mxu0 0
      %850 = vmatpush2.bf16.msra.mxu0 0
      %851 = vmatprep.subr.bf16.mxu0 0
      %852 = vmatpush2.bf16.msra.mxu0 0
      %853 = vmatprep.mubr.bf16.mxu0 0
      %854 = vmatmul.mubr.bf16.gmra.mxu0 %v816
      %v855 = vpop.f32.mrf.mxu0
      %v856 = vadd.f32 %v806, %v855
      %v857 = vpop.f32.mrf.mxu0
      %v858 = vpop.f32.mrf.mxu0
      %v859 = vadd.f32 %v806, %v858
      %v860 = vpop.f32.mrf.mxu0
      %861 = vmatprep.mubr.bf16.mxu0 0
      %862 = vmatmul.mubr.bf16.gmra.mxu0 %v819
      %v863 = vpop.f32.mrf.mxu0
      %v864 = vadd.f32 %v806, %v863
      %v865 = vpop.f32.mrf.mxu0
      %v866 = vpop.f32.mrf.mxu0
      %v867 = vadd.f32 %v806, %v866
      %v868 = vpop.f32.mrf.mxu0
      %869 = vdwg.mxu0
      %v870 = vpack.c.bf16 %v859, %v856
      %v871 = vpack.c.bf16 %v867, %v864
      %v873 = vlaneseq
      %v874 = vshrl.u32 %v873, 7
      %v875 = vsub.s32 0, %v874
      %v876 = vrot.slane %v439, %v875
      %v880 = vunpack.c.l.b16 %v437
      %v881 = vunpack.c.l.b16 %v438
      %v882 = vpack.c.b16 %v881, %v880
      %v885 = vsel %vm814, %v870, 0
      %v888 = vsel %vm814, %v871, 0
      %890 = vmatprep.subr.bf16.mxu0 0
      %891 = vmatpush1.bf16.msra.mxu0 0
      %892 = vmatprep.subr.bf16.mxu0 0
      %893 = vmatpush1.bf16.msra.mxu0 0
      %894 = vmatprep.subr.bf16.mxu0 0
      %895 = vmatpush1.bf16.msra.mxu0 0
      %896 = vmatprep.subr.bf16.mxu0 0
      %897 = vmatpush1.bf16.msra.mxu0 0
      %898 = vmatprep.subr.bf16.mxu0 0
      %899 = vmatpush1.bf16.msra.mxu0 0
      %900 = vmatprep.subr.bf16.mxu0 0
      %901 = vmatpush1.bf16.msra.mxu0 0
      %902 = vmatprep.subr.bf16.mxu0 0
      %903 = vmatpush1.bf16.msra.mxu0 0
      %904 = vmatprep.subr.bf16.mxu0 0
      %905 = vmatpush1.bf16.msra.mxu0 %v882
      %906 = vmatprep.subr.bf16.mxu0 0
      %907 = vmatpush2.bf16.msra.mxu0 0
      %908 = vmatprep.subr.bf16.mxu0 0
      %909 = vmatpush2.bf16.msra.mxu0 0
      %910 = vmatprep.subr.bf16.mxu0 0
      %911 = vmatpush2.bf16.msra.mxu0 0
      %912 = vmatprep.subr.bf16.mxu0 0
      %913 = vmatpush2.bf16.msra.mxu0 0
      %914 = vmatprep.subr.bf16.mxu0 0
      %915 = vmatpush2.bf16.msra.mxu0 0
      %916 = vmatprep.subr.bf16.mxu0 0
      %917 = vmatpush2.bf16.msra.mxu0 0
      %918 = vmatprep.subr.bf16.mxu0 0
      %919 = vmatpush2.bf16.msra.mxu0 0
      %920 = vmatprep.subr.bf16.mxu0 0
      %921 = vmatpush2.bf16.msra.mxu0 0
      %922 = vmatprep.mubr.bf16.mxu0 0
      %923 = vmatmul.mubr.bf16.gmra.mxu0 %v885
      %v924 = vpop.f32.mrf.mxu0
      %v925 = vadd.f32 %v876, %v924
      %v926 = vpop.f32.mrf.mxu0
      %v927 = vpop.f32.mrf.mxu0
      %v928 = vadd.f32 %v876, %v927
      %v929 = vpop.f32.mrf.mxu0
      %930 = vmatprep.mubr.bf16.mxu0 0
      %931 = vmatmul.mubr.bf16.gmra.mxu0 %v888
      %v932 = vpop.f32.mrf.mxu0
      %v933 = vadd.f32 %v876, %v932
      %v934 = vpop.f32.mrf.mxu0
      %v935 = vpop.f32.mrf.mxu0
      %v936 = vadd.f32 %v876, %v935
      %v937 = vpop.f32.mrf.mxu0
      %938 = vdwg.mxu0
      %vm939 = vcmp.gt.f32.partialorder %v925, 20.0
      %vm940 = vcmp.gt.f32.partialorder %v928, 20.0
      %vm941 = vcmp.gt.f32.partialorder %v933, 20.0
      %vm942 = vcmp.gt.f32.partialorder %v936, 20.0
      %v943 = vmin.f32 %v925, 20.0
      %v944 = vmin.f32 %v928, 20.0
      %v945 = vmin.f32 %v933, 20.0
      %v946 = vmin.f32 %v936, 20.0
      %v947 = vmul.f32 %v943, 1.442695
      %v948 = vpow.pop %v947
      %v949 = vmul.f32 %v944, 1.442695
      %v950 = vpow.pop %v949
      %v951 = vmul.f32 %v945, 1.442695
      %v952 = vpow.pop %v951
      %v953 = vmul.f32 %v946, 1.442695
      %v954 = vpow.pop %v953
      %v955 = vadd.f32 %v948, 1.0
      %v956 = vadd.f32 %v950, 1.0
      %v957 = vadd.f32 %v952, 1.0
      %v958 = vadd.f32 %v954, 1.0
      %v959 = vlog2.pop %v955
      %v960 = vmul.f32 %v959, 0.6931472
      %v961 = vlog2.pop %v956
      %v962 = vmul.f32 %v961, 0.6931472
      %v963 = vlog2.pop %v957
      %v964 = vmul.f32 %v963, 0.6931472
      %v965 = vlog2.pop %v958
      %v966 = vmul.f32 %v965, 0.6931472
      %v967 = vsel %vm939, %v925, %v960
      %v968 = vsel %vm940, %v928, %v962
      %v969 = vsel %vm941, %v933, %v964
      %v970 = vsel %vm942, %v936, %v966
      %975 = vrot.lane.b32.xlu0 %v925, 32
      %v976 = vpop.permute.xlu0 %975
      %977 = vrot.lane.b32.xlu0 %v928, 32
      %v978 = vpop.permute.xlu0 %977
      %979 = vrot.lane.b32.xlu0 %v933, 32
      %v980 = vpop.permute.xlu0 %979
      %981 = vrot.lane.b32.xlu0 %v936, 32
      %v982 = vpop.permute.xlu0 %981
      %v987 = vmul.f32 %v925, %v976
      %v988 = vmul.f32 %v928, %v978
      %v989 = vmul.f32 %v933, %v980
      %v990 = vmul.f32 %v936, %v982
      %995 = vrot.lane.b32.xlu0 %v987, 80
      %v996 = vpop.permute.xlu0 %995
      %997 = vrot.lane.b32.xlu0 %v988, 80
      %v998 = vpop.permute.xlu0 %997
      %999 = vrot.lane.b32.xlu0 %v989, 80
      %v1000 = vpop.permute.xlu0 %999
      %1001 = vrot.lane.b32.xlu0 %v990, 80
      %v1002 = vpop.permute.xlu0 %1001
      %vm1007 = vcmask 261120
      %v1008 = vsel %vm1007, %v996, 0.0
      %1009 = vadd.xlane.f32.xlu0 %v1008
      %v1010 = vpop.xlane.xlu0 %1009
      %v1011 = vsel %vm1007, %v998, 0.0
      %1012 = vadd.xlane.f32.xlu0 %v1011
      %v1013 = vpop.xlane.xlu0 %1012
      %v1014 = vsel %vm1007, %v1000, 0.0
      %1015 = vadd.xlane.f32.xlu0 %v1014
      %v1016 = vpop.xlane.xlu0 %1015
      %v1017 = vsel %vm1007, %v1002, 0.0
      %1018 = vadd.xlane.f32.xlu0 %v1017
      %v1019 = vpop.xlane.xlu0 %1018
      %v1020 = vmul.f32 %v856, %v967
      %v1021 = vmul.f32 %v859, %v968
      %v1022 = vmul.f32 %v864, %v969
      %v1023 = vmul.f32 %v867, %v970
      %v1024 = vmul.f32 %v1020, %v1010
      %v1025 = vmul.f32 %v1021, %v1013
      %v1026 = vmul.f32 %v1022, %v1016
      %v1027 = vmul.f32 %v1023, %v1019
      %v1028 = vsub.f32 0.0, %v1024
      %v1029 = vsub.f32 0.0, %v1025
      %v1030 = vsub.f32 0.0, %v1026
      %v1031 = vsub.f32 0.0, %v1027
      %v1032 = vmul.f32 %v1028, 1.442695
      %v1033 = vpow.pop %v1032
      %v1034 = vmul.f32 %v1029, 1.442695
      %v1035 = vpow.pop %v1034
      %v1036 = vmul.f32 %v1030, 1.442695
      %v1037 = vpow.pop %v1036
      %v1038 = vmul.f32 %v1031, 1.442695
      %v1039 = vpow.pop %v1038
      %v1040 = vadd.f32 %v1033, 1.0
      %v1041 = vadd.f32 %v1035, 1.0
      %v1042 = vadd.f32 %v1037, 1.0
      %v1043 = vadd.f32 %v1039, 1.0
      %v1044 = vrcp.pop %v1040
      %v1045 = vmul.f32 1.0, %v1044
      %v1046 = vrcp.pop %v1041
      %v1047 = vmul.f32 1.0, %v1046
      %v1048 = vrcp.pop %v1042
      %v1049 = vmul.f32 1.0, %v1048
      %v1050 = vrcp.pop %v1043
      %v1051 = vmul.f32 1.0, %v1050
      %v1052 = vmul.f32 %v1024, %v1045
      %v1053 = vmul.f32 %v1025, %v1047
      %v1054 = vmul.f32 %v1026, %v1049
      %v1055 = vmul.f32 %v1027, %v1051
      %v1056 = vsub.f32 0.0, %v540
      %v1057 = vsub.f32 0.0, %v543
      %v1058 = vsub.f32 0.0, %v548
      %v1059 = vsub.f32 0.0, %v551
      %v1060 = vmul.f32 %v1056, 1.442695
      %v1061 = vpow.pop %v1060
      %v1062 = vmul.f32 %v1057, 1.442695
      %v1063 = vpow.pop %v1062
      %v1064 = vmul.f32 %v1058, 1.442695
      %v1065 = vpow.pop %v1064
      %v1066 = vmul.f32 %v1059, 1.442695
      %v1067 = vpow.pop %v1066
      %v1068 = vadd.f32 %v1061, 1.0
      %v1069 = vadd.f32 %v1063, 1.0
      %v1070 = vadd.f32 %v1065, 1.0
      %v1071 = vadd.f32 %v1067, 1.0
      %v1072 = vrcp.pop %v1068
      %v1073 = vmul.f32 1.0, %v1072
      %v1074 = vrcp.pop %v1069
      %v1075 = vmul.f32 1.0, %v1074
      %v1076 = vrcp.pop %v1070
      %v1077 = vmul.f32 1.0, %v1076
      %v1078 = vrcp.pop %v1071
      %v1079 = vmul.f32 1.0, %v1078
      %v1080 = vmul.f32 %v540, %v1073
      %v1081 = vmul.f32 %v543, %v1075
      %v1082 = vmul.f32 %v548, %v1077
      %v1083 = vmul.f32 %v551, %v1079
      %1088 = vrot.lane.b32.xlu0 %v1080, 112
      %v1089 = vpop.permute.xlu0 %1088
      %1090 = vrot.lane.b32.xlu0 %v1081, 112
      %v1091 = vpop.permute.xlu0 %1090
      %1092 = vrot.lane.b32.xlu0 %v1082, 112
      %v1093 = vpop.permute.xlu0 %1092
      %1094 = vrot.lane.b32.xlu0 %v1083, 112
      %v1095 = vpop.permute.xlu0 %1094
      %v1100 = vmul.f32 %v1052, %v1089
      %v1101 = vmul.f32 %v1053, %v1091
      %v1102 = vmul.f32 %v1054, %v1093
      %v1103 = vmul.f32 %v1055, %v1095
      %v1104 = vpack.c.bf16 %v1101, %v1100
      %v1105 = vpack.c.bf16 %v1103, %v1102
      %v1107 = vlaneseq
      %v1108 = vshrl.u32 %v1107, 7
      %v1109 = vsub.s32 0, %v1108
      %v1110 = vrot.slane %v442, %v1109
      %v1114 = vunpack.c.l.b16 %v440
      %v1115 = vunpack.c.l.b16 %v441
      %v1116 = vpack.c.b16 %v1115, %v1114
      %v1119 = vsel %vm814, %v1104, 0
      %v1122 = vsel %vm814, %v1105, 0
      %1124 = vmatprep.subr.bf16.mxu0 0
      %1125 = vmatpush1.bf16.msra.mxu0 0
      %1126 = vmatprep.subr.bf16.mxu0 0
      %1127 = vmatpush1.bf16.msra.mxu0 0
      %1128 = vmatprep.subr.bf16.mxu0 0
      %1129 = vmatpush1.bf16.msra.mxu0 0
      %1130 = vmatprep.subr.bf16.mxu0 0
      %1131 = vmatpush1.bf16.msra.mxu0 0
      %1132 = vmatprep.subr.bf16.mxu0 0
      %1133 = vmatpush1.bf16.msra.mxu0 0
      %1134 = vmatprep.subr.bf16.mxu0 0
      %1135 = vmatpush1.bf16.msra.mxu0 0
      %1136 = vmatprep.subr.bf16.mxu0 0
      %1137 = vmatpush1.bf16.msra.mxu0 0
      %1138 = vmatprep.subr.bf16.mxu0 0
      %1139 = vmatpush1.bf16.msra.mxu0 %v1116
      %1140 = vmatprep.subr.bf16.mxu0 0
      %1141 = vmatpush2.bf16.msra.mxu0 0
      %1142 = vmatprep.subr.bf16.mxu0 0
      %1143 = vmatpush2.bf16.msra.mxu0 0
      %1144 = vmatprep.subr.bf16.mxu0 0
      %1145 = vmatpush2.bf16.msra.mxu0 0
      %1146 = vmatprep.subr.bf16.mxu0 0
      %1147 = vmatpush2.bf16.msra.mxu0 0
      %1148 = vmatprep.subr.bf16.mxu0 0
      %1149 = vmatpush2.bf16.msra.mxu0 0
      %1150 = vmatprep.subr.bf16.mxu0 0
      %1151 = vmatpush2.bf16.msra.mxu0 0
      %1152 = vmatprep.subr.bf16.mxu0 0
      %1153 = vmatpush2.bf16.msra.mxu0 0
      %1154 = vmatprep.subr.bf16.mxu0 0
      %1155 = vmatpush2.bf16.msra.mxu0 0
      %1156 = vmatprep.mubr.bf16.mxu0 0
      %1157 = vmatmul.mubr.bf16.gmra.mxu0 %v1119
      %v1158 = vpop.f32.mrf.mxu0
      %v1159 = vadd.f32 %v1110, %v1158
      %v1160 = vpop.f32.mrf.mxu0
      %v1161 = vpop.f32.mrf.mxu0
      %v1162 = vadd.f32 %v1110, %v1161
      %v1163 = vpop.f32.mrf.mxu0
      %1164 = vmatprep.mubr.bf16.mxu0 0
      %1165 = vmatmul.mubr.bf16.gmra.mxu0 %v1122
      %v1166 = vpop.f32.mrf.mxu0
      %v1167 = vadd.f32 %v1110, %v1166
      %v1168 = vpop.f32.mrf.mxu0
      %v1169 = vpop.f32.mrf.mxu0
      %v1170 = vadd.f32 %v1110, %v1169
      %v1171 = vpop.f32.mrf.mxu0
      %1172 = vdwg.mxu0
      %s1173 = scalar_lea.vmem %s1, 1
      %v1174 = vld [vmem:[%s1173] sm:$0x1]
      %s1175 = scalar_lea.vmem %s2, 4
      %v1176 = vld [vmem:[%s1175] sm:$0xf]
      %s1177 = scalar_lea.vmem %s3, 1
      %v1178 = vld [vmem:[%s1177] sm:$0x1]
      %s1179 = scalar_lea.vmem %s4, 8
      %v1180 = vld [vmem:[%s1179] sm:$0xf]
      %v1181 = vld [vmem:[%s1179 + $0x4] sm:$0xf]
      %s1182 = scalar_lea.vmem %s5, 16
      %v1183 = vld [vmem:[%s1182] sm:$0xff]
      %v1184 = vld [vmem:[%s1182 + $0x8] sm:$0xff]
      %s1185 = scalar_lea.vmem %s6, 8
      %v1186 = vld [vmem:[%s1185] sm:$0xf]
      %v1187 = vld [vmem:[%s1185 + $0x4] sm:$0xf]
      %s1188 = scalar_lea.vmem %s7, 1
      %v1189 = vld [vmem:[%s1188] sm:$0x1]
      %s1190 = scalar_lea.vmem %s8, 8
      %v1191 = vld [vmem:[%s1190] sm:$0xf]
      %v1192 = vld [vmem:[%s1190 + $0x4] sm:$0xf]
      %s1193 = scalar_lea.vmem %s9, 1
      %v1194 = vld [vmem:[%s1193] sm:$0x1]
      %s1195 = scalar_lea.vmem %s10, 8
      %v1196 = vld [vmem:[%s1195] sm:$0xf]
      %v1197 = vld [vmem:[%s1195 + $0x4] sm:$0xf]
      %s1198 = scalar_lea.vmem %s11, 1
      %v1199 = vld [vmem:[%s1198] sm:$0x1]
      %v1200 = vmul.f32 %v1159, %v1159
      %v1201 = vmul.f32 %v1162, %v1162
      %v1202 = vmul.f32 %v1167, %v1167
      %v1203 = vmul.f32 %v1170, %v1170
      %v1204 = vsel %vm447, %v1200, 0.0
      %1205 = vadd.xlane.f32.xlu0 %v1204
      %v1206 = vpop.xlane.xlu0 %1205
      %v1207 = vsel %vm447, %v1201, 0.0
      %1208 = vadd.xlane.f32.xlu0 %v1207
      %v1209 = vpop.xlane.xlu0 %1208
      %v1210 = vsel %vm447, %v1202, 0.0
      %1211 = vadd.xlane.f32.xlu0 %v1210
      %v1212 = vpop.xlane.xlu0 %1211
      %v1213 = vsel %vm447, %v1203, 0.0
      %1214 = vadd.xlane.f32.xlu0 %v1213
      %v1215 = vpop.xlane.xlu0 %1214
      %v1216 = vmul.f32 %v1206, %v460
      %v1217 = vmul.f32 %v1209, %v460
      %v1218 = vmul.f32 %v1212, %v460
      %v1219 = vmul.f32 %v1215, %v460
      %v1220 = vadd.f32 %v1216, 1e-05
      %v1221 = vadd.f32 %v1217, 1e-05
      %v1222 = vadd.f32 %v1218, 1e-05
      %v1223 = vadd.f32 %v1219, 1e-05
      %v1224 = vrsqrt.pop %v1220
      %v1225 = vrsqrt.pop %v1221
      %v1226 = vrsqrt.pop %v1222
      %v1227 = vrsqrt.pop %v1223
      %v1228 = vmul.f32 %v1159, %v1224
      %v1229 = vmul.f32 %v1162, %v1225
      %v1230 = vmul.f32 %v1167, %v1226
      %v1231 = vmul.f32 %v1170, %v1227
      %v1233 = vlaneseq
      %v1234 = vshrl.u32 %v1233, 7
      %v1235 = vsub.s32 0, %v1234
      %v1236 = vrot.slane %v1174, %v1235
      %v1238 = vmul.f32 %v1228, %v1236
      %v1239 = vmul.f32 %v1229, %v1236
      %v1240 = vmul.f32 %v1230, %v1236
      %v1241 = vmul.f32 %v1231, %v1236
      %v1242 = vpack.c.bf16 %v1239, %v1238
      %v1243 = vpack.c.bf16 %v1241, %v1240
      %v1245 = vlaneseq
      %v1246 = vshrl.u32 %v1245, 7
      %v1247 = vsub.s32 0, %v1246
      %v1248 = vrot.slane %v1178, %v1247
      %v1251 = vsel %vm447, %v1242, 0
      %v1254 = vsel %vm447, %v1243, 0
      %v1257 = vsel %vm501, %v1176, 0
      %1259 = vmatprep.subr.bf16.mxu0 0
      %1260 = vmatpush1.bf16.msra.mxu0 0
      %1261 = vmatprep.subr.bf16.mxu0 0
      %1262 = vmatpush1.bf16.msra.mxu0 0
      %1263 = vmatprep.subr.bf16.mxu0 0
      %1264 = vmatpush1.bf16.msra.mxu0 0
      %1265 = vmatprep.subr.bf16.mxu0 0
      %1266 = vmatpush1.bf16.msra.mxu0 0
      %1267 = vmatprep.subr.bf16.mxu0 0
      %1268 = vmatpush1.bf16.msra.mxu0 0
      %1269 = vmatprep.subr.bf16.mxu0 0
      %1270 = vmatpush1.bf16.msra.mxu0 0
      %1271 = vmatprep.subr.bf16.mxu0 0
      %1272 = vmatpush1.bf16.msra.mxu0 0
      %1273 = vmatprep.subr.bf16.mxu0 0
      %1274 = vmatpush1.bf16.msra.mxu0 %v1257
      %1275 = vmatprep.subr.bf16.mxu0 0
      %1276 = vmatpush2.bf16.msra.mxu0 0
      %1277 = vmatprep.subr.bf16.mxu0 0
      %1278 = vmatpush2.bf16.msra.mxu0 0
      %1279 = vmatprep.subr.bf16.mxu0 0
      %1280 = vmatpush2.bf16.msra.mxu0 0
      %1281 = vmatprep.subr.bf16.mxu0 0
      %1282 = vmatpush2.bf16.msra.mxu0 0
      %1283 = vmatprep.subr.bf16.mxu0 0
      %1284 = vmatpush2.bf16.msra.mxu0 0
      %1285 = vmatprep.subr.bf16.mxu0 0
      %1286 = vmatpush2.bf16.msra.mxu0 0
      %1287 = vmatprep.subr.bf16.mxu0 0
      %1288 = vmatpush2.bf16.msra.mxu0 0
      %1289 = vmatprep.subr.bf16.mxu0 0
      %1290 = vmatpush2.bf16.msra.mxu0 0
      %1291 = vmatprep.mubr.bf16.mxu0 0
      %1292 = vmatmul.mubr.bf16.gmra.mxu0 %v1251
      %v1293 = vpop.f32.mrf.mxu0
      %v1294 = vadd.f32 %v1248, %v1293
      %v1295 = vpop.f32.mrf.mxu0
      %v1296 = vpop.f32.mrf.mxu0
      %v1297 = vadd.f32 %v1248, %v1296
      %v1298 = vpop.f32.mrf.mxu0
      %1299 = vmatprep.mubr.bf16.mxu0 0
      %1300 = vmatmul.mubr.bf16.gmra.mxu0 %v1254
      %v1301 = vpop.f32.mrf.mxu0
      %v1302 = vadd.f32 %v1248, %v1301
      %v1303 = vpop.f32.mrf.mxu0
      %v1304 = vpop.f32.mrf.mxu0
      %v1305 = vadd.f32 %v1248, %v1304
      %v1306 = vpop.f32.mrf.mxu0
      %1307 = vdwg.mxu0
      %1312 = vrot.lane.b32.xlu0 %v1294, 1
      %v1313 = vpop.permute.xlu0 %1312
      %1314 = vrot.lane.b32.xlu0 %v1297, 1
      %v1315 = vpop.permute.xlu0 %1314
      %1316 = vrot.lane.b32.xlu0 %v1302, 1
      %v1317 = vpop.permute.xlu0 %1316
      %1318 = vrot.lane.b32.xlu0 %v1305, 1
      %v1319 = vpop.permute.xlu0 %1318
      %v1324 = vsel %vm570, 0.0, %v1313
      %v1325 = vsel %vm570, 0.0, %v1315
      %v1326 = vsel %vm570, 0.0, %v1317
      %v1327 = vsel %vm570, 0.0, %v1319
      %1328 = vrot.lane.b32.xlu0 %v1294, 127
      %v1329 = vpop.permute.xlu0 %1328
      %1330 = vrot.lane.b32.xlu0 %v1297, 127
      %v1331 = vpop.permute.xlu0 %1330
      %1332 = vrot.lane.b32.xlu0 %v1302, 127
      %v1333 = vpop.permute.xlu0 %1332
      %1334 = vrot.lane.b32.xlu0 %v1305, 127
      %v1335 = vpop.permute.xlu0 %1334
      %v1340 = vsel %vm587, %v1329, 0.0
      %v1341 = vsel %vm587, %v1331, 0.0
      %v1342 = vsel %vm587, %v1333, 0.0
      %v1343 = vsel %vm587, %v1335, 0.0
      %v1344 = vpack.c.bf16 %v1325, %v1324
      %v1345 = vpack.c.bf16 %v1297, %v1294
      %v1346 = vpack.c.bf16 %v1341, %v1340
      %v1347 = vpack.c.bf16 %v1327, %v1326
      %v1348 = vpack.c.bf16 %v1305, %v1302
      %v1349 = vpack.c.bf16 %v1343, %v1342
      %1350 = vxpose.xlu0.c.b16.start [1/8] %v1344, 128
      %1351 = vxpose.xlu0.c.b16.cont [2/8] %v1345, 128
      %1352 = vxpose.xlu0.c.b16.cont [3/8] %v1346, 128
      %1353 = vxpose.xlu0.c.b16.cont [4/8] 0, 128
      %1354 = vxpose.xlu0.c.b16.cont [5/8] 0, 128
      %1355 = vxpose.xlu0.c.b16.cont [6/8] 0, 128
      %1356 = vxpose.xlu0.c.b16.cont [7/8] 0, 128
      %1357 = vxpose.xlu0.c.b16.end [8/8] 0, 128
      %v1358 = vpop.trf.xlu0
      %v1359 = vpop.trf.xlu0
      %v1360 = vpop.trf.xlu0
      %v1361 = vpop.trf.xlu0
      %v1362 = vpop.trf.xlu0
      %v1363 = vpop.trf.xlu0
      %v1364 = vpop.trf.xlu0
      %v1365 = vpop.trf.xlu0
      %1366 = vxpose.xlu0.c.b16.start [1/8] %v1347, 128
      %1367 = vxpose.xlu0.c.b16.cont [2/8] %v1348, 128
      %1368 = vxpose.xlu0.c.b16.cont [3/8] %v1349, 128
      %1369 = vxpose.xlu0.c.b16.cont [4/8] 0, 128
      %1370 = vxpose.xlu0.c.b16.cont [5/8] 0, 128
      %1371 = vxpose.xlu0.c.b16.cont [6/8] 0, 128
      %1372 = vxpose.xlu0.c.b16.cont [7/8] 0, 128
      %1373 = vxpose.xlu0.c.b16.end [8/8] 0, 128
      %v1374 = vpop.trf.xlu0
      %v1375 = vpop.trf.xlu0
      %v1376 = vpop.trf.xlu0
      %v1377 = vpop.trf.xlu0
      %v1378 = vpop.trf.xlu0
      %v1379 = vpop.trf.xlu0
      %v1380 = vpop.trf.xlu0
      %v1381 = vpop.trf.xlu0
      %v1384 = vunpack.c.l.b16 %v1180
      %v1385 = vunpack.c.l.b16 %v1181
      %v1386 = vpack.c.b16 %v1385, %v1384
      %v1388 = vsel %vm635, %v1358, 0
      %v1391 = vsel %vm635, %v1374, 0
      %v1394 = vsel %vm635, %v1386, 0
      %1396 = vmatprep.subr.bf16.mxu0 0
      %1397 = vmatpush1.bf16.xpose.msra.mxu0 0
      %1398 = vmatprep.subr.bf16.mxu0 0
      %1399 = vmatpush1.bf16.xpose.msra.mxu0 0
      %1400 = vmatprep.subr.bf16.mxu0 0
      %1401 = vmatpush1.bf16.xpose.msra.mxu0 0
      %1402 = vmatprep.subr.bf16.mxu0 0
      %1403 = vmatpush1.bf16.xpose.msra.mxu0 0
      %1404 = vmatprep.subr.bf16.mxu0 0
      %1405 = vmatpush1.bf16.xpose.msra.mxu0 0
      %1406 = vmatprep.subr.bf16.mxu0 0
      %1407 = vmatpush1.bf16.xpose.msra.mxu0 0
      %1408 = vmatprep.subr.bf16.mxu0 0
      %1409 = vmatpush1.bf16.xpose.msra.mxu0 0
      %1410 = vmatprep.subr.bf16.mxu0 0
      %1411 = vmatpush1.bf16.xpose.msra.mxu0 %v1394
      %1412 = vmatprep.subr.bf16.mxu0 0
      %1413 = vmatpush2.bf16.xpose.msra.mxu0 0
      %1414 = vmatprep.subr.bf16.mxu0 0
      %1415 = vmatpush2.bf16.xpose.msra.mxu0 0
      %1416 = vmatprep.subr.bf16.mxu0 0
      %1417 = vmatpush2.bf16.xpose.msra.mxu0 0
      %1418 = vmatprep.subr.bf16.mxu0 0
      %1419 = vmatpush2.bf16.xpose.msra.mxu0 0
      %1420 = vmatprep.subr.bf16.mxu0 0
      %1421 = vmatpush2.bf16.xpose.msra.mxu0 0
      %1422 = vmatprep.subr.bf16.mxu0 0
      %1423 = vmatpush2.bf16.xpose.msra.mxu0 0
      %1424 = vmatprep.subr.bf16.mxu0 0
      %1425 = vmatpush2.bf16.xpose.msra.mxu0 0
      %1426 = vmatprep.subr.bf16.mxu0 0
      %1427 = vmatpush2.bf16.xpose.msra.mxu0 0
      %1428 = vmatprep.mubr.bf16.mxu0 0
      %1429 = vmatmul.mubr.bf16.gmra.mxu0 %v1388
      %v1430 = vpop.f32.mrf.mxu0
      %v1431 = vadd.f32 0.0, %v1430
      %v1432 = vpop.f32.mrf.mxu0
      %v1433 = vpop.f32.mrf.mxu0
      %v1434 = vadd.f32 0.0, %v1433
      %v1435 = vpop.f32.mrf.mxu0
      %1436 = vmatprep.mubr.bf16.mxu0 0
      %1437 = vmatmul.mubr.bf16.gmra.mxu0 %v1391
      %v1438 = vpop.f32.mrf.mxu0
      %v1439 = vadd.f32 0.0, %v1438
      %v1440 = vpop.f32.mrf.mxu0
      %v1441 = vpop.f32.mrf.mxu0
      %v1442 = vadd.f32 0.0, %v1441
      %v1443 = vpop.f32.mrf.mxu0
      %1444 = vdwg.mxu0
      %1445 = vxpose.xlu0.b32.start [1/16] %v1431, 128
      %1446 = vxpose.xlu0.b32.cont [2/16] %v1434, 128
      %1447 = vxpose.xlu0.b32.cont [3/16] 0.0, 128
      %1448 = vxpose.xlu0.b32.cont [4/16] 0.0, 128
      %1449 = vxpose.xlu0.b32.cont [5/16] 0.0, 128
      %1450 = vxpose.xlu0.b32.cont [6/16] 0.0, 128
      %1451 = vxpose.xlu0.b32.cont [7/16] 0.0, 128
      %1452 = vxpose.xlu0.b32.cont [8/16] 0.0, 128
      %1453 = vxpose.xlu0.b32.cont [9/16] 0.0, 128
      %1454 = vxpose.xlu0.b32.cont [10/16] 0.0, 128
      %1455 = vxpose.xlu0.b32.cont [11/16] 0.0, 128
      %1456 = vxpose.xlu0.b32.cont [12/16] 0.0, 128
      %1457 = vxpose.xlu0.b32.cont [13/16] 0.0, 128
      %1458 = vxpose.xlu0.b32.cont [14/16] 0.0, 128
      %1459 = vxpose.xlu0.b32.cont [15/16] 0.0, 128
      %1460 = vxpose.xlu0.b32.end [16/16] 0.0, 128
      %v1461 = vpop.trf.xlu0
      %v1462 = vpop.trf.xlu0
      %v1463 = vpop.trf.xlu0
      %v1464 = vpop.trf.xlu0
      %v1465 = vpop.trf.xlu0
      %v1466 = vpop.trf.xlu0
      %v1467 = vpop.trf.xlu0
      %v1468 = vpop.trf.xlu0
      %v1469 = vpop.trf.xlu0
      %v1470 = vpop.trf.xlu0
      %v1471 = vpop.trf.xlu0
      %v1472 = vpop.trf.xlu0
      %v1473 = vpop.trf.xlu0
      %v1474 = vpop.trf.xlu0
      %v1475 = vpop.trf.xlu0
      %v1476 = vpop.trf.xlu0
      %1477 = vxpose.xlu0.b32.start [1/16] %v1439, 128
      %1478 = vxpose.xlu0.b32.cont [2/16] %v1442, 128
      %1479 = vxpose.xlu0.b32.cont [3/16] 0.0, 128
      %1480 = vxpose.xlu0.b32.cont [4/16] 0.0, 128
      %1481 = vxpose.xlu0.b32.cont [5/16] 0.0, 128
      %1482 = vxpose.xlu0.b32.cont [6/16] 0.0, 128
      %1483 = vxpose.xlu0.b32.cont [7/16] 0.0, 128
      %1484 = vxpose.xlu0.b32.cont [8/16] 0.0, 128
      %1485 = vxpose.xlu0.b32.cont [9/16] 0.0, 128
      %1486 = vxpose.xlu0.b32.cont [10/16] 0.0, 128
      %1487 = vxpose.xlu0.b32.cont [11/16] 0.0, 128
      %1488 = vxpose.xlu0.b32.cont [12/16] 0.0, 128
      %1489 = vxpose.xlu0.b32.cont [13/16] 0.0, 128
      %1490 = vxpose.xlu0.b32.cont [14/16] 0.0, 128
      %1491 = vxpose.xlu0.b32.cont [15/16] 0.0, 128
      %1492 = vxpose.xlu0.b32.end [16/16] 0.0, 128
      %v1493 = vpop.trf.xlu0
      %v1494 = vpop.trf.xlu0
      %v1495 = vpop.trf.xlu0
      %v1496 = vpop.trf.xlu0
      %v1497 = vpop.trf.xlu0
      %v1498 = vpop.trf.xlu0
      %v1499 = vpop.trf.xlu0
      %v1500 = vpop.trf.xlu0
      %v1501 = vpop.trf.xlu0
      %v1502 = vpop.trf.xlu0
      %v1503 = vpop.trf.xlu0
      %v1504 = vpop.trf.xlu0
      %v1505 = vpop.trf.xlu0
      %v1506 = vpop.trf.xlu0
      %v1507 = vpop.trf.xlu0
      %v1508 = vpop.trf.xlu0
      %1510 = vset.pattern.permute.xlu0 0
      %1511 = vperm.xlu0 %1510, %v1183
      %v1512 = vpop.permute.xlu0 %1511
      %1515 = vset.pattern.permute.xlu0 0
      %1516 = vperm.xlu0 %1515, %v1184
      %v1517 = vpop.permute.xlu0 %1516
      %v1519 = vadd.f32 %v1461, %v1512
      %v1520 = vadd.f32 %v1462, %v1517
      %v1521 = vadd.f32 %v1493, %v1512
      %v1522 = vadd.f32 %v1494, %v1517
      %v1523 = vsub.f32 0.0, %v1519
      %v1524 = vsub.f32 0.0, %v1520
      %v1525 = vsub.f32 0.0, %v1521
      %v1526 = vsub.f32 0.0, %v1522
      %v1527 = vmul.f32 %v1523, 1.442695
      %v1528 = vpow.pop %v1527
      %v1529 = vmul.f32 %v1524, 1.442695
      %v1530 = vpow.pop %v1529
      %v1531 = vmul.f32 %v1525, 1.442695
      %v1532 = vpow.pop %v1531
      %v1533 = vmul.f32 %v1526, 1.442695
      %v1534 = vpow.pop %v1533
      %v1535 = vadd.f32 %v1528, 1.0
      %v1536 = vadd.f32 %v1530, 1.0
      %v1537 = vadd.f32 %v1532, 1.0
      %v1538 = vadd.f32 %v1534, 1.0
      %v1539 = vrcp.pop %v1535
      %v1540 = vmul.f32 1.0, %v1539
      %v1541 = vrcp.pop %v1536
      %v1542 = vmul.f32 1.0, %v1541
      %v1543 = vrcp.pop %v1537
      %v1544 = vmul.f32 1.0, %v1543
      %v1545 = vrcp.pop %v1538
      %v1546 = vmul.f32 1.0, %v1545
      %v1547 = vmul.f32 %v1519, %v1540
      %v1548 = vmul.f32 %v1520, %v1542
      %v1549 = vmul.f32 %v1521, %v1544
      %v1550 = vmul.f32 %v1522, %v1546
      %v1551 = vpack.c.bf16 %v1548, %v1547
      %v1552 = vpack.c.bf16 %v1550, %v1549
      %v1554 = vlaneseq
      %v1555 = vshrl.u32 %v1554, 7
      %v1556 = vsub.s32 0, %v1555
      %v1557 = vrot.slane %v1189, %v1556
      %v1561 = vunpack.c.l.b16 %v1186
      %v1562 = vunpack.c.l.b16 %v1187
      %v1563 = vpack.c.b16 %v1562, %v1561
      %v1566 = vsel %vm814, %v1551, 0
      %v1569 = vsel %vm814, %v1552, 0
      %1571 = vmatprep.subr.bf16.mxu0 0
      %1572 = vmatpush1.bf16.msra.mxu0 0
      %1573 = vmatprep.subr.bf16.mxu0 0
      %1574 = vmatpush1.bf16.msra.mxu0 0
      %1575 = vmatprep.subr.bf16.mxu0 0
      %1576 = vmatpush1.bf16.msra.mxu0 0
      %1577 = vmatprep.subr.bf16.mxu0 0
      %1578 = vmatpush1.bf16.msra.mxu0 0
      %1579 = vmatprep.subr.bf16.mxu0 0
      %1580 = vmatpush1.bf16.msra.mxu0 0
      %1581 = vmatprep.subr.bf16.mxu0 0
      %1582 = vmatpush1.bf16.msra.mxu0 0
      %1583 = vmatprep.subr.bf16.mxu0 0
      %1584 = vmatpush1.bf16.msra.mxu0 0
      %1585 = vmatprep.subr.bf16.mxu0 0
      %1586 = vmatpush1.bf16.msra.mxu0 %v1563
      %1587 = vmatprep.subr.bf16.mxu0 0
      %1588 = vmatpush2.bf16.msra.mxu0 0
      %1589 = vmatprep.subr.bf16.mxu0 0
      %1590 = vmatpush2.bf16.msra.mxu0 0
      %1591 = vmatprep.subr.bf16.mxu0 0
      %1592 = vmatpush2.bf16.msra.mxu0 0
      %1593 = vmatprep.subr.bf16.mxu0 0
      %1594 = vmatpush2.bf16.msra.mxu0 0
      %1595 = vmatprep.subr.bf16.mxu0 0
      %1596 = vmatpush2.bf16.msra.mxu0 0
      %1597 = vmatprep.subr.bf16.mxu0 0
      %1598 = vmatpush2.bf16.msra.mxu0 0
      %1599 = vmatprep.subr.bf16.mxu0 0
      %1600 = vmatpush2.bf16.msra.mxu0 0
      %1601 = vmatprep.subr.bf16.mxu0 0
      %1602 = vmatpush2.bf16.msra.mxu0 0
      %1603 = vmatprep.mubr.bf16.mxu0 0
      %1604 = vmatmul.mubr.bf16.gmra.mxu0 %v1566
      %v1605 = vpop.f32.mrf.mxu0
      %v1606 = vadd.f32 %v1557, %v1605
      %v1607 = vpop.f32.mrf.mxu0
      %v1608 = vpop.f32.mrf.mxu0
      %v1609 = vadd.f32 %v1557, %v1608
      %v1610 = vpop.f32.mrf.mxu0
      %1611 = vmatprep.mubr.bf16.mxu0 0
      %1612 = vmatmul.mubr.bf16.gmra.mxu0 %v1569
      %v1613 = vpop.f32.mrf.mxu0
      %v1614 = vadd.f32 %v1557, %v1613
      %v1615 = vpop.f32.mrf.mxu0
      %v1616 = vpop.f32.mrf.mxu0
      %v1617 = vadd.f32 %v1557, %v1616
      %v1618 = vpop.f32.mrf.mxu0
      %1619 = vdwg.mxu0
      %v1620 = vpack.c.bf16 %v1609, %v1606
      %v1621 = vpack.c.bf16 %v1617, %v1614
      %v1623 = vlaneseq
      %v1624 = vshrl.u32 %v1623, 7
      %v1625 = vsub.s32 0, %v1624
      %v1626 = vrot.slane %v1194, %v1625
      %v1630 = vunpack.c.l.b16 %v1191
      %v1631 = vunpack.c.l.b16 %v1192
      %v1632 = vpack.c.b16 %v1631, %v1630
      %v1635 = vsel %vm814, %v1620, 0
      %v1638 = vsel %vm814, %v1621, 0
      %1640 = vmatprep.subr.bf16.mxu0 0
      %1641 = vmatpush1.bf16.msra.mxu0 0
      %1642 = vmatprep.subr.bf16.mxu0 0
      %1643 = vmatpush1.bf16.msra.mxu0 0
      %1644 = vmatprep.subr.bf16.mxu0 0
      %1645 = vmatpush1.bf16.msra.mxu0 0
      %1646 = vmatprep.subr.bf16.mxu0 0
      %1647 = vmatpush1.bf16.msra.mxu0 0
      %1648 = vmatprep.subr.bf16.mxu0 0
      %1649 = vmatpush1.bf16.msra.mxu0 0
      %1650 = vmatprep.subr.bf16.mxu0 0
      %1651 = vmatpush1.bf16.msra.mxu0 0
      %1652 = vmatprep.subr.bf16.mxu0 0
      %1653 = vmatpush1.bf16.msra.mxu0 0
      %1654 = vmatprep.subr.bf16.mxu0 0
      %1655 = vmatpush1.bf16.msra.mxu0 %v1632
      %1656 = vmatprep.subr.bf16.mxu0 0
      %1657 = vmatpush2.bf16.msra.mxu0 0
      %1658 = vmatprep.subr.bf16.mxu0 0
      %1659 = vmatpush2.bf16.msra.mxu0 0
      %1660 = vmatprep.subr.bf16.mxu0 0
      %1661 = vmatpush2.bf16.msra.mxu0 0
      %1662 = vmatprep.subr.bf16.mxu0 0
      %1663 = vmatpush2.bf16.msra.mxu0 0
      %1664 = vmatprep.subr.bf16.mxu0 0
      %1665 = vmatpush2.bf16.msra.mxu0 0
      %1666 = vmatprep.subr.bf16.mxu0 0
      %1667 = vmatpush2.bf16.msra.mxu0 0
      %1668 = vmatprep.subr.bf16.mxu0 0
      %1669 = vmatpush2.bf16.msra.mxu0 0
      %1670 = vmatprep.subr.bf16.mxu0 0
      %1671 = vmatpush2.bf16.msra.mxu0 0
      %1672 = vmatprep.mubr.bf16.mxu0 0
      %1673 = vmatmul.mubr.bf16.gmra.mxu0 %v1635
      %v1674 = vpop.f32.mrf.mxu0
      %v1675 = vadd.f32 %v1626, %v1674
      %v1676 = vpop.f32.mrf.mxu0
      %v1677 = vpop.f32.mrf.mxu0
      %v1678 = vadd.f32 %v1626, %v1677
      %v1679 = vpop.f32.mrf.mxu0
      %1680 = vmatprep.mubr.bf16.mxu0 0
      %1681 = vmatmul.mubr.bf16.gmra.mxu0 %v1638
      %v1682 = vpop.f32.mrf.mxu0
      %v1683 = vadd.f32 %v1626, %v1682
      %v1684 = vpop.f32.mrf.mxu0
      %v1685 = vpop.f32.mrf.mxu0
      %v1686 = vadd.f32 %v1626, %v1685
      %v1687 = vpop.f32.mrf.mxu0
      %1688 = vdwg.mxu0
      %vm1689 = vcmp.gt.f32.partialorder %v1675, 20.0
      %vm1690 = vcmp.gt.f32.partialorder %v1678, 20.0
      %vm1691 = vcmp.gt.f32.partialorder %v1683, 20.0
      %vm1692 = vcmp.gt.f32.partialorder %v1686, 20.0
      %v1693 = vmin.f32 %v1675, 20.0
      %v1694 = vmin.f32 %v1678, 20.0
      %v1695 = vmin.f32 %v1683, 20.0
      %v1696 = vmin.f32 %v1686, 20.0
      %v1697 = vmul.f32 %v1693, 1.442695
      %v1698 = vpow.pop %v1697
      %v1699 = vmul.f32 %v1694, 1.442695
      %v1700 = vpow.pop %v1699
      %v1701 = vmul.f32 %v1695, 1.442695
      %v1702 = vpow.pop %v1701
      %v1703 = vmul.f32 %v1696, 1.442695
      %v1704 = vpow.pop %v1703
      %v1705 = vadd.f32 %v1698, 1.0
      %v1706 = vadd.f32 %v1700, 1.0
      %v1707 = vadd.f32 %v1702, 1.0
      %v1708 = vadd.f32 %v1704, 1.0
      %v1709 = vlog2.pop %v1705
      %v1710 = vmul.f32 %v1709, 0.6931472
      %v1711 = vlog2.pop %v1706
      %v1712 = vmul.f32 %v1711, 0.6931472
      %v1713 = vlog2.pop %v1707
      %v1714 = vmul.f32 %v1713, 0.6931472
      %v1715 = vlog2.pop %v1708
      %v1716 = vmul.f32 %v1715, 0.6931472
      %v1717 = vsel %vm1689, %v1675, %v1710
      %v1718 = vsel %vm1690, %v1678, %v1712
      %v1719 = vsel %vm1691, %v1683, %v1714
      %v1720 = vsel %vm1692, %v1686, %v1716
      %1725 = vrot.lane.b32.xlu0 %v1675, 32
      %v1726 = vpop.permute.xlu0 %1725
      %1727 = vrot.lane.b32.xlu0 %v1678, 32
      %v1728 = vpop.permute.xlu0 %1727
      %1729 = vrot.lane.b32.xlu0 %v1683, 32
      %v1730 = vpop.permute.xlu0 %1729
      %1731 = vrot.lane.b32.xlu0 %v1686, 32
      %v1732 = vpop.permute.xlu0 %1731
      %v1737 = vmul.f32 %v1675, %v1726
      %v1738 = vmul.f32 %v1678, %v1728
      %v1739 = vmul.f32 %v1683, %v1730
      %v1740 = vmul.f32 %v1686, %v1732
      %1745 = vrot.lane.b32.xlu0 %v1737, 80
      %v1746 = vpop.permute.xlu0 %1745
      %1747 = vrot.lane.b32.xlu0 %v1738, 80
      %v1748 = vpop.permute.xlu0 %1747
      %1749 = vrot.lane.b32.xlu0 %v1739, 80
      %v1750 = vpop.permute.xlu0 %1749
      %1751 = vrot.lane.b32.xlu0 %v1740, 80
      %v1752 = vpop.permute.xlu0 %1751
      %v1757 = vsel %vm1007, %v1746, 0.0
      %1758 = vadd.xlane.f32.xlu0 %v1757
      %v1759 = vpop.xlane.xlu0 %1758
      %v1760 = vsel %vm1007, %v1748, 0.0
      %1761 = vadd.xlane.f32.xlu0 %v1760
      %v1762 = vpop.xlane.xlu0 %1761
      %v1763 = vsel %vm1007, %v1750, 0.0
      %1764 = vadd.xlane.f32.xlu0 %v1763
      %v1765 = vpop.xlane.xlu0 %1764
      %v1766 = vsel %vm1007, %v1752, 0.0
      %1767 = vadd.xlane.f32.xlu0 %v1766
      %v1768 = vpop.xlane.xlu0 %1767
      %v1769 = vmul.f32 %v1606, %v1717
      %v1770 = vmul.f32 %v1609, %v1718
      %v1771 = vmul.f32 %v1614, %v1719
      %v1772 = vmul.f32 %v1617, %v1720
      %v1773 = vmul.f32 %v1769, %v1759
      %v1774 = vmul.f32 %v1770, %v1762
      %v1775 = vmul.f32 %v1771, %v1765
      %v1776 = vmul.f32 %v1772, %v1768
      %v1777 = vsub.f32 0.0, %v1773
      %v1778 = vsub.f32 0.0, %v1774
      %v1779 = vsub.f32 0.0, %v1775
      %v1780 = vsub.f32 0.0, %v1776
      %v1781 = vmul.f32 %v1777, 1.442695
      %v1782 = vpow.pop %v1781
      %v1783 = vmul.f32 %v1778, 1.442695
      %v1784 = vpow.pop %v1783
      %v1785 = vmul.f32 %v1779, 1.442695
      %v1786 = vpow.pop %v1785
      %v1787 = vmul.f32 %v1780, 1.442695
      %v1788 = vpow.pop %v1787
      %v1789 = vadd.f32 %v1782, 1.0
      %v1790 = vadd.f32 %v1784, 1.0
      %v1791 = vadd.f32 %v1786, 1.0
      %v1792 = vadd.f32 %v1788, 1.0
      %v1793 = vrcp.pop %v1789
      %v1794 = vmul.f32 1.0, %v1793
      %v1795 = vrcp.pop %v1790
      %v1796 = vmul.f32 1.0, %v1795
      %v1797 = vrcp.pop %v1791
      %v1798 = vmul.f32 1.0, %v1797
      %v1799 = vrcp.pop %v1792
      %v1800 = vmul.f32 1.0, %v1799
      %v1801 = vmul.f32 %v1773, %v1794
      %v1802 = vmul.f32 %v1774, %v1796
      %v1803 = vmul.f32 %v1775, %v1798
      %v1804 = vmul.f32 %v1776, %v1800
      %v1805 = vsub.f32 0.0, %v1294
      %v1806 = vsub.f32 0.0, %v1297
      %v1807 = vsub.f32 0.0, %v1302
      %v1808 = vsub.f32 0.0, %v1305
      %v1809 = vmul.f32 %v1805, 1.442695
      %v1810 = vpow.pop %v1809
      %v1811 = vmul.f32 %v1806, 1.442695
      %v1812 = vpow.pop %v1811
      %v1813 = vmul.f32 %v1807, 1.442695
      %v1814 = vpow.pop %v1813
      %v1815 = vmul.f32 %v1808, 1.442695
      %v1816 = vpow.pop %v1815
      %v1817 = vadd.f32 %v1810, 1.0
      %v1818 = vadd.f32 %v1812, 1.0
      %v1819 = vadd.f32 %v1814, 1.0
      %v1820 = vadd.f32 %v1816, 1.0
      %v1821 = vrcp.pop %v1817
      %v1822 = vmul.f32 1.0, %v1821
      %v1823 = vrcp.pop %v1818
      %v1824 = vmul.f32 1.0, %v1823
      %v1825 = vrcp.pop %v1819
      %v1826 = vmul.f32 1.0, %v1825
      %v1827 = vrcp.pop %v1820
      %v1828 = vmul.f32 1.0, %v1827
      %v1829 = vmul.f32 %v1294, %v1822
      %v1830 = vmul.f32 %v1297, %v1824
      %v1831 = vmul.f32 %v1302, %v1826
      %v1832 = vmul.f32 %v1305, %v1828
      %1837 = vrot.lane.b32.xlu0 %v1829, 112
      %v1838 = vpop.permute.xlu0 %1837
      %1839 = vrot.lane.b32.xlu0 %v1830, 112
      %v1840 = vpop.permute.xlu0 %1839
      %1841 = vrot.lane.b32.xlu0 %v1831, 112
      %v1842 = vpop.permute.xlu0 %1841
      %1843 = vrot.lane.b32.xlu0 %v1832, 112
      %v1844 = vpop.permute.xlu0 %1843
      %v1849 = vmul.f32 %v1801, %v1838
      %v1850 = vmul.f32 %v1802, %v1840
      %v1851 = vmul.f32 %v1803, %v1842
      %v1852 = vmul.f32 %v1804, %v1844
      %v1853 = vpack.c.bf16 %v1850, %v1849
      %v1854 = vpack.c.bf16 %v1852, %v1851
      %v1856 = vlaneseq
      %v1857 = vshrl.u32 %v1856, 7
      %v1858 = vsub.s32 0, %v1857
      %v1859 = vrot.slane %v1199, %v1858
      %v1863 = vunpack.c.l.b16 %v1196
      %v1864 = vunpack.c.l.b16 %v1197
      %v1865 = vpack.c.b16 %v1864, %v1863
      %v1868 = vsel %vm814, %v1853, 0
      %v1871 = vsel %vm814, %v1854, 0
      %1873 = vmatprep.subr.bf16.mxu0 0
      %1874 = vmatpush1.bf16.msra.mxu0 0
      %1875 = vmatprep.subr.bf16.mxu0 0
      %1876 = vmatpush1.bf16.msra.mxu0 0
      %1877 = vmatprep.subr.bf16.mxu0 0
      %1878 = vmatpush1.bf16.msra.mxu0 0
      %1879 = vmatprep.subr.bf16.mxu0 0
      %1880 = vmatpush1.bf16.msra.mxu0 0
      %1881 = vmatprep.subr.bf16.mxu0 0
      %1882 = vmatpush1.bf16.msra.mxu0 0
      %1883 = vmatprep.subr.bf16.mxu0 0
      %1884 = vmatpush1.bf16.msra.mxu0 0
      %1885 = vmatprep.subr.bf16.mxu0 0
      %1886 = vmatpush1.bf16.msra.mxu0 0
      %1887 = vmatprep.subr.bf16.mxu0 0
      %1888 = vmatpush1.bf16.msra.mxu0 %v1865
      %1889 = vmatprep.subr.bf16.mxu0 0
      %1890 = vmatpush2.bf16.msra.mxu0 0
      %1891 = vmatprep.subr.bf16.mxu0 0
      %1892 = vmatpush2.bf16.msra.mxu0 0
      %1893 = vmatprep.subr.bf16.mxu0 0
      %1894 = vmatpush2.bf16.msra.mxu0 0
      %1895 = vmatprep.subr.bf16.mxu0 0
      %1896 = vmatpush2.bf16.msra.mxu0 0
      %1897 = vmatprep.subr.bf16.mxu0 0
      %1898 = vmatpush2.bf16.msra.mxu0 0
      %1899 = vmatprep.subr.bf16.mxu0 0
      %1900 = vmatpush2.bf16.msra.mxu0 0
      %1901 = vmatprep.subr.bf16.mxu0 0
      %1902 = vmatpush2.bf16.msra.mxu0 0
      %1903 = vmatprep.subr.bf16.mxu0 0
      %1904 = vmatpush2.bf16.msra.mxu0 0
      %1905 = vmatprep.mubr.bf16.mxu0 0
      %1906 = vmatmul.mubr.bf16.gmra.mxu0 %v1868
      %v1907 = vpop.f32.mrf.mxu0
      %v1908 = vadd.f32 %v1859, %v1907
      %v1909 = vpop.f32.mrf.mxu0
      %v1910 = vpop.f32.mrf.mxu0
      %v1911 = vadd.f32 %v1859, %v1910
      %v1912 = vpop.f32.mrf.mxu0
      %1913 = vmatprep.mubr.bf16.mxu0 0
      %1914 = vmatmul.mubr.bf16.gmra.mxu0 %v1871
      %v1915 = vpop.f32.mrf.mxu0
      %v1916 = vadd.f32 %v1859, %v1915
      %v1917 = vpop.f32.mrf.mxu0
      %v1918 = vpop.f32.mrf.mxu0
      %v1919 = vadd.f32 %v1859, %v1918
      %v1920 = vpop.f32.mrf.mxu0
      %1921 = vdwg.mxu0
      %s1922 = scalar_lea.vmem %s1, 2
      %v1923 = vld [vmem:[%s1922] sm:$0x1]
      %s1924 = scalar_lea.vmem %s2, 8
      %v1925 = vld [vmem:[%s1924] sm:$0xf]
      %s1926 = scalar_lea.vmem %s3, 2
      %v1927 = vld [vmem:[%s1926] sm:$0x1]
      %s1928 = scalar_lea.vmem %s4, 16
      %v1929 = vld [vmem:[%s1928] sm:$0xf]
      %v1930 = vld [vmem:[%s1928 + $0x4] sm:$0xf]
      %s1931 = scalar_lea.vmem %s5, 32
      %v1932 = vld [vmem:[%s1931] sm:$0xff]
      %v1933 = vld [vmem:[%s1931 + $0x8] sm:$0xff]
      %s1934 = scalar_lea.vmem %s6, 16
      %v1935 = vld [vmem:[%s1934] sm:$0xf]
      %v1936 = vld [vmem:[%s1934 + $0x4] sm:$0xf]
      %s1937 = scalar_lea.vmem %s7, 2
      %v1938 = vld [vmem:[%s1937] sm:$0x1]
      %s1939 = scalar_lea.vmem %s8, 16
      %v1940 = vld [vmem:[%s1939] sm:$0xf]
      %v1941 = vld [vmem:[%s1939 + $0x4] sm:$0xf]
      %s1942 = scalar_lea.vmem %s9, 2
      %v1943 = vld [vmem:[%s1942] sm:$0x1]
      %s1944 = scalar_lea.vmem %s10, 16
      %v1945 = vld [vmem:[%s1944] sm:$0xf]
      %v1946 = vld [vmem:[%s1944 + $0x4] sm:$0xf]
      %s1947 = scalar_lea.vmem %s11, 2
      %v1948 = vld [vmem:[%s1947] sm:$0x1]
      %v1949 = vmul.f32 %v1908, %v1908
      %v1950 = vmul.f32 %v1911, %v1911
      %v1951 = vmul.f32 %v1916, %v1916
      %v1952 = vmul.f32 %v1919, %v1919
      %v1953 = vsel %vm447, %v1949, 0.0
      %1954 = vadd.xlane.f32.xlu0 %v1953
      %v1955 = vpop.xlane.xlu0 %1954
      %v1956 = vsel %vm447, %v1950, 0.0
      %1957 = vadd.xlane.f32.xlu0 %v1956
      %v1958 = vpop.xlane.xlu0 %1957
      %v1959 = vsel %vm447, %v1951, 0.0
      %1960 = vadd.xlane.f32.xlu0 %v1959
      %v1961 = vpop.xlane.xlu0 %1960
      %v1962 = vsel %vm447, %v1952, 0.0
      %1963 = vadd.xlane.f32.xlu0 %v1962
      %v1964 = vpop.xlane.xlu0 %1963
      %v1965 = vmul.f32 %v1955, %v460
      %v1966 = vmul.f32 %v1958, %v460
      %v1967 = vmul.f32 %v1961, %v460
      %v1968 = vmul.f32 %v1964, %v460
      %v1969 = vadd.f32 %v1965, 1e-05
      %v1970 = vadd.f32 %v1966, 1e-05
      %v1971 = vadd.f32 %v1967, 1e-05
      %v1972 = vadd.f32 %v1968, 1e-05
      %v1973 = vrsqrt.pop %v1969
      %v1974 = vrsqrt.pop %v1970
      %v1975 = vrsqrt.pop %v1971
      %v1976 = vrsqrt.pop %v1972
      %v1977 = vmul.f32 %v1908, %v1973
      %v1978 = vmul.f32 %v1911, %v1974
      %v1979 = vmul.f32 %v1916, %v1975
      %v1980 = vmul.f32 %v1919, %v1976
      %v1982 = vlaneseq
      %v1983 = vshrl.u32 %v1982, 7
      %v1984 = vsub.s32 0, %v1983
      %v1985 = vrot.slane %v1923, %v1984
      %v1987 = vmul.f32 %v1977, %v1985
      %v1988 = vmul.f32 %v1978, %v1985
      %v1989 = vmul.f32 %v1979, %v1985
      %v1990 = vmul.f32 %v1980, %v1985
      %v1991 = vpack.c.bf16 %v1988, %v1987
      %v1992 = vpack.c.bf16 %v1990, %v1989
      %v1994 = vlaneseq
      %v1995 = vshrl.u32 %v1994, 7
      %v1996 = vsub.s32 0, %v1995
      %v1997 = vrot.slane %v1927, %v1996
      %v2000 = vsel %vm447, %v1991, 0
      %v2003 = vsel %vm447, %v1992, 0
      %v2006 = vsel %vm501, %v1925, 0
      %2008 = vmatprep.subr.bf16.mxu0 0
      %2009 = vmatpush1.bf16.msra.mxu0 0
      %2010 = vmatprep.subr.bf16.mxu0 0
      %2011 = vmatpush1.bf16.msra.mxu0 0
      %2012 = vmatprep.subr.bf16.mxu0 0
      %2013 = vmatpush1.bf16.msra.mxu0 0
      %2014 = vmatprep.subr.bf16.mxu0 0
      %2015 = vmatpush1.bf16.msra.mxu0 0
      %2016 = vmatprep.subr.bf16.mxu0 0
      %2017 = vmatpush1.bf16.msra.mxu0 0
      %2018 = vmatprep.subr.bf16.mxu0 0
      %2019 = vmatpush1.bf16.msra.mxu0 0
      %2020 = vmatprep.subr.bf16.mxu0 0
      %2021 = vmatpush1.bf16.msra.mxu0 0
      %2022 = vmatprep.subr.bf16.mxu0 0
      %2023 = vmatpush1.bf16.msra.mxu0 %v2006
      %2024 = vmatprep.subr.bf16.mxu0 0
      %2025 = vmatpush2.bf16.msra.mxu0 0
      %2026 = vmatprep.subr.bf16.mxu0 0
      %2027 = vmatpush2.bf16.msra.mxu0 0
      %2028 = vmatprep.subr.bf16.mxu0 0
      %2029 = vmatpush2.bf16.msra.mxu0 0
      %2030 = vmatprep.subr.bf16.mxu0 0
      %2031 = vmatpush2.bf16.msra.mxu0 0
      %2032 = vmatprep.subr.bf16.mxu0 0
      %2033 = vmatpush2.bf16.msra.mxu0 0
      %2034 = vmatprep.subr.bf16.mxu0 0
      %2035 = vmatpush2.bf16.msra.mxu0 0
      %2036 = vmatprep.subr.bf16.mxu0 0
      %2037 = vmatpush2.bf16.msra.mxu0 0
      %2038 = vmatprep.subr.bf16.mxu0 0
      %2039 = vmatpush2.bf16.msra.mxu0 0
      %2040 = vmatprep.mubr.bf16.mxu0 0
      %2041 = vmatmul.mubr.bf16.gmra.mxu0 %v2000
      %v2042 = vpop.f32.mrf.mxu0
      %v2043 = vadd.f32 %v1997, %v2042
      %v2044 = vpop.f32.mrf.mxu0
      %v2045 = vpop.f32.mrf.mxu0
      %v2046 = vadd.f32 %v1997, %v2045
      %v2047 = vpop.f32.mrf.mxu0
      %2048 = vmatprep.mubr.bf16.mxu0 0
      %2049 = vmatmul.mubr.bf16.gmra.mxu0 %v2003
      %v2050 = vpop.f32.mrf.mxu0
      %v2051 = vadd.f32 %v1997, %v2050
      %v2052 = vpop.f32.mrf.mxu0
      %v2053 = vpop.f32.mrf.mxu0
      %v2054 = vadd.f32 %v1997, %v2053
      %v2055 = vpop.f32.mrf.mxu0
      %2056 = vdwg.mxu0
      %2061 = vrot.lane.b32.xlu0 %v2043, 1
      %v2062 = vpop.permute.xlu0 %2061
      %2063 = vrot.lane.b32.xlu0 %v2046, 1
      %v2064 = vpop.permute.xlu0 %2063
      %2065 = vrot.lane.b32.xlu0 %v2051, 1
      %v2066 = vpop.permute.xlu0 %2065
      %2067 = vrot.lane.b32.xlu0 %v2054, 1
      %v2068 = vpop.permute.xlu0 %2067
      %v2073 = vsel %vm570, 0.0, %v2062
      %v2074 = vsel %vm570, 0.0, %v2064
      %v2075 = vsel %vm570, 0.0, %v2066
      %v2076 = vsel %vm570, 0.0, %v2068
      %2077 = vrot.lane.b32.xlu0 %v2043, 127
      %v2078 = vpop.permute.xlu0 %2077
      %2079 = vrot.lane.b32.xlu0 %v2046, 127
      %v2080 = vpop.permute.xlu0 %2079
      %2081 = vrot.lane.b32.xlu0 %v2051, 127
      %v2082 = vpop.permute.xlu0 %2081
      %2083 = vrot.lane.b32.xlu0 %v2054, 127
      %v2084 = vpop.permute.xlu0 %2083
      %v2089 = vsel %vm587, %v2078, 0.0
      %v2090 = vsel %vm587, %v2080, 0.0
      %v2091 = vsel %vm587, %v2082, 0.0
      %v2092 = vsel %vm587, %v2084, 0.0
      %v2093 = vpack.c.bf16 %v2074, %v2073
      %v2094 = vpack.c.bf16 %v2046, %v2043
      %v2095 = vpack.c.bf16 %v2090, %v2089
      %v2096 = vpack.c.bf16 %v2076, %v2075
      %v2097 = vpack.c.bf16 %v2054, %v2051
      %v2098 = vpack.c.bf16 %v2092, %v2091
      %2099 = vxpose.xlu0.c.b16.start [1/8] %v2093, 128
      %2100 = vxpose.xlu0.c.b16.cont [2/8] %v2094, 128
      %2101 = vxpose.xlu0.c.b16.cont [3/8] %v2095, 128
      %2102 = vxpose.xlu0.c.b16.cont [4/8] 0, 128
      %2103 = vxpose.xlu0.c.b16.cont [5/8] 0, 128
      %2104 = vxpose.xlu0.c.b16.cont [6/8] 0, 128
      %2105 = vxpose.xlu0.c.b16.cont [7/8] 0, 128
      %2106 = vxpose.xlu0.c.b16.end [8/8] 0, 128
      %v2107 = vpop.trf.xlu0
      %v2108 = vpop.trf.xlu0
      %v2109 = vpop.trf.xlu0
      %v2110 = vpop.trf.xlu0
      %v2111 = vpop.trf.xlu0
      %v2112 = vpop.trf.xlu0
      %v2113 = vpop.trf.xlu0
      %v2114 = vpop.trf.xlu0
      %2115 = vxpose.xlu0.c.b16.start [1/8] %v2096, 128
      %2116 = vxpose.xlu0.c.b16.cont [2/8] %v2097, 128
      %2117 = vxpose.xlu0.c.b16.cont [3/8] %v2098, 128
      %2118 = vxpose.xlu0.c.b16.cont [4/8] 0, 128
      %2119 = vxpose.xlu0.c.b16.cont [5/8] 0, 128
      %2120 = vxpose.xlu0.c.b16.cont [6/8] 0, 128
      %2121 = vxpose.xlu0.c.b16.cont [7/8] 0, 128
      %2122 = vxpose.xlu0.c.b16.end [8/8] 0, 128
      %v2123 = vpop.trf.xlu0
      %v2124 = vpop.trf.xlu0
      %v2125 = vpop.trf.xlu0
      %v2126 = vpop.trf.xlu0
      %v2127 = vpop.trf.xlu0
      %v2128 = vpop.trf.xlu0
      %v2129 = vpop.trf.xlu0
      %v2130 = vpop.trf.xlu0
      %v2133 = vunpack.c.l.b16 %v1929
      %v2134 = vunpack.c.l.b16 %v1930
      %v2135 = vpack.c.b16 %v2134, %v2133
      %v2137 = vsel %vm635, %v2107, 0
      %v2140 = vsel %vm635, %v2123, 0
      %v2143 = vsel %vm635, %v2135, 0
      %2145 = vmatprep.subr.bf16.mxu0 0
      %2146 = vmatpush1.bf16.xpose.msra.mxu0 0
      %2147 = vmatprep.subr.bf16.mxu0 0
      %2148 = vmatpush1.bf16.xpose.msra.mxu0 0
      %2149 = vmatprep.subr.bf16.mxu0 0
      %2150 = vmatpush1.bf16.xpose.msra.mxu0 0
      %2151 = vmatprep.subr.bf16.mxu0 0
      %2152 = vmatpush1.bf16.xpose.msra.mxu0 0
      %2153 = vmatprep.subr.bf16.mxu0 0
      %2154 = vmatpush1.bf16.xpose.msra.mxu0 0
      %2155 = vmatprep.subr.bf16.mxu0 0
      %2156 = vmatpush1.bf16.xpose.msra.mxu0 0
      %2157 = vmatprep.subr.bf16.mxu0 0
      %2158 = vmatpush1.bf16.xpose.msra.mxu0 0
      %2159 = vmatprep.subr.bf16.mxu0 0
      %2160 = vmatpush1.bf16.xpose.msra.mxu0 %v2143
      %2161 = vmatprep.subr.bf16.mxu0 0
      %2162 = vmatpush2.bf16.xpose.msra.mxu0 0
      %2163 = vmatprep.subr.bf16.mxu0 0
      %2164 = vmatpush2.bf16.xpose.msra.mxu0 0
      %2165 = vmatprep.subr.bf16.mxu0 0
      %2166 = vmatpush2.bf16.xpose.msra.mxu0 0
      %2167 = vmatprep.subr.bf16.mxu0 0
      %2168 = vmatpush2.bf16.xpose.msra.mxu0 0
      %2169 = vmatprep.subr.bf16.mxu0 0
      %2170 = vmatpush2.bf16.xpose.msra.mxu0 0
      %2171 = vmatprep.subr.bf16.mxu0 0
      %2172 = vmatpush2.bf16.xpose.msra.mxu0 0
      %2173 = vmatprep.subr.bf16.mxu0 0
      %2174 = vmatpush2.bf16.xpose.msra.mxu0 0
      %2175 = vmatprep.subr.bf16.mxu0 0
      %2176 = vmatpush2.bf16.xpose.msra.mxu0 0
      %2177 = vmatprep.mubr.bf16.mxu0 0
      %2178 = vmatmul.mubr.bf16.gmra.mxu0 %v2137
      %v2179 = vpop.f32.mrf.mxu0
      %v2180 = vadd.f32 0.0, %v2179
      %v2181 = vpop.f32.mrf.mxu0
      %v2182 = vpop.f32.mrf.mxu0
      %v2183 = vadd.f32 0.0, %v2182
      %v2184 = vpop.f32.mrf.mxu0
      %2185 = vmatprep.mubr.bf16.mxu0 0
      %2186 = vmatmul.mubr.bf16.gmra.mxu0 %v2140
      %v2187 = vpop.f32.mrf.mxu0
      %v2188 = vadd.f32 0.0, %v2187
      %v2189 = vpop.f32.mrf.mxu0
      %v2190 = vpop.f32.mrf.mxu0
      %v2191 = vadd.f32 0.0, %v2190
      %v2192 = vpop.f32.mrf.mxu0
      %2193 = vdwg.mxu0
      %2194 = vxpose.xlu0.b32.start [1/16] %v2180, 128
      %2195 = vxpose.xlu0.b32.cont [2/16] %v2183, 128
      %2196 = vxpose.xlu0.b32.cont [3/16] 0.0, 128
      %2197 = vxpose.xlu0.b32.cont [4/16] 0.0, 128
      %2198 = vxpose.xlu0.b32.cont [5/16] 0.0, 128
      %2199 = vxpose.xlu0.b32.cont [6/16] 0.0, 128
      %2200 = vxpose.xlu0.b32.cont [7/16] 0.0, 128
      %2201 = vxpose.xlu0.b32.cont [8/16] 0.0, 128
      %2202 = vxpose.xlu0.b32.cont [9/16] 0.0, 128
      %2203 = vxpose.xlu0.b32.cont [10/16] 0.0, 128
      %2204 = vxpose.xlu0.b32.cont [11/16] 0.0, 128
      %2205 = vxpose.xlu0.b32.cont [12/16] 0.0, 128
      %2206 = vxpose.xlu0.b32.cont [13/16] 0.0, 128
      %2207 = vxpose.xlu0.b32.cont [14/16] 0.0, 128
      %2208 = vxpose.xlu0.b32.cont [15/16] 0.0, 128
      %2209 = vxpose.xlu0.b32.end [16/16] 0.0, 128
      %v2210 = vpop.trf.xlu0
      %v2211 = vpop.trf.xlu0
      %v2212 = vpop.trf.xlu0
      %v2213 = vpop.trf.xlu0
      %v2214 = vpop.trf.xlu0
      %v2215 = vpop.trf.xlu0
      %v2216 = vpop.trf.xlu0
      %v2217 = vpop.trf.xlu0
      %v2218 = vpop.trf.xlu0
      %v2219 = vpop.trf.xlu0
      %v2220 = vpop.trf.xlu0
      %v2221 = vpop.trf.xlu0
      %v2222 = vpop.trf.xlu0
      %v2223 = vpop.trf.xlu0
      %v2224 = vpop.trf.xlu0
      %v2225 = vpop.trf.xlu0
      %2226 = vxpose.xlu0.b32.start [1/16] %v2188, 128
      %2227 = vxpose.xlu0.b32.cont [2/16] %v2191, 128
      %2228 = vxpose.xlu0.b32.cont [3/16] 0.0, 128
      %2229 = vxpose.xlu0.b32.cont [4/16] 0.0, 128
      %2230 = vxpose.xlu0.b32.cont [5/16] 0.0, 128
      %2231 = vxpose.xlu0.b32.cont [6/16] 0.0, 128
      %2232 = vxpose.xlu0.b32.cont [7/16] 0.0, 128
      %2233 = vxpose.xlu0.b32.cont [8/16] 0.0, 128
      %2234 = vxpose.xlu0.b32.cont [9/16] 0.0, 128
      %2235 = vxpose.xlu0.b32.cont [10/16] 0.0, 128
      %2236 = vxpose.xlu0.b32.cont [11/16] 0.0, 128
      %2237 = vxpose.xlu0.b32.cont [12/16] 0.0, 128
      %2238 = vxpose.xlu0.b32.cont [13/16] 0.0, 128
      %2239 = vxpose.xlu0.b32.cont [14/16] 0.0, 128
      %2240 = vxpose.xlu0.b32.cont [15/16] 0.0, 128
      %2241 = vxpose.xlu0.b32.end [16/16] 0.0, 128
      %v2242 = vpop.trf.xlu0
      %v2243 = vpop.trf.xlu0
      %v2244 = vpop.trf.xlu0
      %v2245 = vpop.trf.xlu0
      %v2246 = vpop.trf.xlu0
      %v2247 = vpop.trf.xlu0
      %v2248 = vpop.trf.xlu0
      %v2249 = vpop.trf.xlu0
      %v2250 = vpop.trf.xlu0
      %v2251 = vpop.trf.xlu0
      %v2252 = vpop.trf.xlu0
      %v2253 = vpop.trf.xlu0
      %v2254 = vpop.trf.xlu0
      %v2255 = vpop.trf.xlu0
      %v2256 = vpop.trf.xlu0
      %v2257 = vpop.trf.xlu0
      %2259 = vset.pattern.permute.xlu0 0
      %2260 = vperm.xlu0 %2259, %v1932
      %v2261 = vpop.permute.xlu0 %2260
      %2264 = vset.pattern.permute.xlu0 0
      %2265 = vperm.xlu0 %2264, %v1933
      %v2266 = vpop.permute.xlu0 %2265
      %v2268 = vadd.f32 %v2210, %v2261
      %v2269 = vadd.f32 %v2211, %v2266
      %v2270 = vadd.f32 %v2242, %v2261
      %v2271 = vadd.f32 %v2243, %v2266
      %v2272 = vsub.f32 0.0, %v2268
      %v2273 = vsub.f32 0.0, %v2269
      %v2274 = vsub.f32 0.0, %v2270
      %v2275 = vsub.f32 0.0, %v2271
      %v2276 = vmul.f32 %v2272, 1.442695
      %v2277 = vpow.pop %v2276
      %v2278 = vmul.f32 %v2273, 1.442695
      %v2279 = vpow.pop %v2278
      %v2280 = vmul.f32 %v2274, 1.442695
      %v2281 = vpow.pop %v2280
      %v2282 = vmul.f32 %v2275, 1.442695
      %v2283 = vpow.pop %v2282
      %v2284 = vadd.f32 %v2277, 1.0
      %v2285 = vadd.f32 %v2279, 1.0
      %v2286 = vadd.f32 %v2281, 1.0
      %v2287 = vadd.f32 %v2283, 1.0
      %v2288 = vrcp.pop %v2284
      %v2289 = vmul.f32 1.0, %v2288
      %v2290 = vrcp.pop %v2285
      %v2291 = vmul.f32 1.0, %v2290
      %v2292 = vrcp.pop %v2286
      %v2293 = vmul.f32 1.0, %v2292
      %v2294 = vrcp.pop %v2287
      %v2295 = vmul.f32 1.0, %v2294
      %v2296 = vmul.f32 %v2268, %v2289
      %v2297 = vmul.f32 %v2269, %v2291
      %v2298 = vmul.f32 %v2270, %v2293
      %v2299 = vmul.f32 %v2271, %v2295
      %v2300 = vpack.c.bf16 %v2297, %v2296
      %v2301 = vpack.c.bf16 %v2299, %v2298
      %v2303 = vlaneseq
      %v2304 = vshrl.u32 %v2303, 7
      %v2305 = vsub.s32 0, %v2304
      %v2306 = vrot.slane %v1938, %v2305
      %v2310 = vunpack.c.l.b16 %v1935
      %v2311 = vunpack.c.l.b16 %v1936
      %v2312 = vpack.c.b16 %v2311, %v2310
      %v2315 = vsel %vm814, %v2300, 0
      %v2318 = vsel %vm814, %v2301, 0
      %2320 = vmatprep.subr.bf16.mxu0 0
      %2321 = vmatpush1.bf16.msra.mxu0 0
      %2322 = vmatprep.subr.bf16.mxu0 0
      %2323 = vmatpush1.bf16.msra.mxu0 0
      %2324 = vmatprep.subr.bf16.mxu0 0
      %2325 = vmatpush1.bf16.msra.mxu0 0
      %2326 = vmatprep.subr.bf16.mxu0 0
      %2327 = vmatpush1.bf16.msra.mxu0 0
      %2328 = vmatprep.subr.bf16.mxu0 0
      %2329 = vmatpush1.bf16.msra.mxu0 0
      %2330 = vmatprep.subr.bf16.mxu0 0
      %2331 = vmatpush1.bf16.msra.mxu0 0
      %2332 = vmatprep.subr.bf16.mxu0 0
      %2333 = vmatpush1.bf16.msra.mxu0 0
      %2334 = vmatprep.subr.bf16.mxu0 0
      %2335 = vmatpush1.bf16.msra.mxu0 %v2312
      %2336 = vmatprep.subr.bf16.mxu0 0
      %2337 = vmatpush2.bf16.msra.mxu0 0
      %2338 = vmatprep.subr.bf16.mxu0 0
      %2339 = vmatpush2.bf16.msra.mxu0 0
      %2340 = vmatprep.subr.bf16.mxu0 0
      %2341 = vmatpush2.bf16.msra.mxu0 0
      %2342 = vmatprep.subr.bf16.mxu0 0
      %2343 = vmatpush2.bf16.msra.mxu0 0
      %2344 = vmatprep.subr.bf16.mxu0 0
      %2345 = vmatpush2.bf16.msra.mxu0 0
      %2346 = vmatprep.subr.bf16.mxu0 0
      %2347 = vmatpush2.bf16.msra.mxu0 0
      %2348 = vmatprep.subr.bf16.mxu0 0
      %2349 = vmatpush2.bf16.msra.mxu0 0
      %2350 = vmatprep.subr.bf16.mxu0 0
      %2351 = vmatpush2.bf16.msra.mxu0 0
      %2352 = vmatprep.mubr.bf16.mxu0 0
      %2353 = vmatmul.mubr.bf16.gmra.mxu0 %v2315
      %v2354 = vpop.f32.mrf.mxu0
      %v2355 = vadd.f32 %v2306, %v2354
      %v2356 = vpop.f32.mrf.mxu0
      %v2357 = vpop.f32.mrf.mxu0
      %v2358 = vadd.f32 %v2306, %v2357
      %v2359 = vpop.f32.mrf.mxu0
      %2360 = vmatprep.mubr.bf16.mxu0 0
      %2361 = vmatmul.mubr.bf16.gmra.mxu0 %v2318
      %v2362 = vpop.f32.mrf.mxu0
      %v2363 = vadd.f32 %v2306, %v2362
      %v2364 = vpop.f32.mrf.mxu0
      %v2365 = vpop.f32.mrf.mxu0
      %v2366 = vadd.f32 %v2306, %v2365
      %v2367 = vpop.f32.mrf.mxu0
      %2368 = vdwg.mxu0
      %v2369 = vpack.c.bf16 %v2358, %v2355
      %v2370 = vpack.c.bf16 %v2366, %v2363
      %v2372 = vlaneseq
      %v2373 = vshrl.u32 %v2372, 7
      %v2374 = vsub.s32 0, %v2373
      %v2375 = vrot.slane %v1943, %v2374
      %v2379 = vunpack.c.l.b16 %v1940
      %v2380 = vunpack.c.l.b16 %v1941
      %v2381 = vpack.c.b16 %v2380, %v2379
      %v2384 = vsel %vm814, %v2369, 0
      %v2387 = vsel %vm814, %v2370, 0
      %2389 = vmatprep.subr.bf16.mxu0 0
      %2390 = vmatpush1.bf16.msra.mxu0 0
      %2391 = vmatprep.subr.bf16.mxu0 0
      %2392 = vmatpush1.bf16.msra.mxu0 0
      %2393 = vmatprep.subr.bf16.mxu0 0
      %2394 = vmatpush1.bf16.msra.mxu0 0
      %2395 = vmatprep.subr.bf16.mxu0 0
      %2396 = vmatpush1.bf16.msra.mxu0 0
      %2397 = vmatprep.subr.bf16.mxu0 0
      %2398 = vmatpush1.bf16.msra.mxu0 0
      %2399 = vmatprep.subr.bf16.mxu0 0
      %2400 = vmatpush1.bf16.msra.mxu0 0
      %2401 = vmatprep.subr.bf16.mxu0 0
      %2402 = vmatpush1.bf16.msra.mxu0 0
      %2403 = vmatprep.subr.bf16.mxu0 0
      %2404 = vmatpush1.bf16.msra.mxu0 %v2381
      %2405 = vmatprep.subr.bf16.mxu0 0
      %2406 = vmatpush2.bf16.msra.mxu0 0
      %2407 = vmatprep.subr.bf16.mxu0 0
      %2408 = vmatpush2.bf16.msra.mxu0 0
      %2409 = vmatprep.subr.bf16.mxu0 0
      %2410 = vmatpush2.bf16.msra.mxu0 0
      %2411 = vmatprep.subr.bf16.mxu0 0
      %2412 = vmatpush2.bf16.msra.mxu0 0
      %2413 = vmatprep.subr.bf16.mxu0 0
      %2414 = vmatpush2.bf16.msra.mxu0 0
      %2415 = vmatprep.subr.bf16.mxu0 0
      %2416 = vmatpush2.bf16.msra.mxu0 0
      %2417 = vmatprep.subr.bf16.mxu0 0
      %2418 = vmatpush2.bf16.msra.mxu0 0
      %2419 = vmatprep.subr.bf16.mxu0 0
      %2420 = vmatpush2.bf16.msra.mxu0 0
      %2421 = vmatprep.mubr.bf16.mxu0 0
      %2422 = vmatmul.mubr.bf16.gmra.mxu0 %v2384
      %v2423 = vpop.f32.mrf.mxu0
      %v2424 = vadd.f32 %v2375, %v2423
      %v2425 = vpop.f32.mrf.mxu0
      %v2426 = vpop.f32.mrf.mxu0
      %v2427 = vadd.f32 %v2375, %v2426
      %v2428 = vpop.f32.mrf.mxu0
      %2429 = vmatprep.mubr.bf16.mxu0 0
      %2430 = vmatmul.mubr.bf16.gmra.mxu0 %v2387
      %v2431 = vpop.f32.mrf.mxu0
      %v2432 = vadd.f32 %v2375, %v2431
      %v2433 = vpop.f32.mrf.mxu0
      %v2434 = vpop.f32.mrf.mxu0
      %v2435 = vadd.f32 %v2375, %v2434
      %v2436 = vpop.f32.mrf.mxu0
      %2437 = vdwg.mxu0
      %vm2438 = vcmp.gt.f32.partialorder %v2424, 20.0
      %vm2439 = vcmp.gt.f32.partialorder %v2427, 20.0
      %vm2440 = vcmp.gt.f32.partialorder %v2432, 20.0
      %vm2441 = vcmp.gt.f32.partialorder %v2435, 20.0
      %v2442 = vmin.f32 %v2424, 20.0
      %v2443 = vmin.f32 %v2427, 20.0
      %v2444 = vmin.f32 %v2432, 20.0
      %v2445 = vmin.f32 %v2435, 20.0
      %v2446 = vmul.f32 %v2442, 1.442695
      %v2447 = vpow.pop %v2446
      %v2448 = vmul.f32 %v2443, 1.442695
      %v2449 = vpow.pop %v2448
      %v2450 = vmul.f32 %v2444, 1.442695
      %v2451 = vpow.pop %v2450
      %v2452 = vmul.f32 %v2445, 1.442695
      %v2453 = vpow.pop %v2452
      %v2454 = vadd.f32 %v2447, 1.0
      %v2455 = vadd.f32 %v2449, 1.0
      %v2456 = vadd.f32 %v2451, 1.0
      %v2457 = vadd.f32 %v2453, 1.0
      %v2458 = vlog2.pop %v2454
      %v2459 = vmul.f32 %v2458, 0.6931472
      %v2460 = vlog2.pop %v2455
      %v2461 = vmul.f32 %v2460, 0.6931472
      %v2462 = vlog2.pop %v2456
      %v2463 = vmul.f32 %v2462, 0.6931472
      %v2464 = vlog2.pop %v2457
      %v2465 = vmul.f32 %v2464, 0.6931472
      %v2466 = vsel %vm2438, %v2424, %v2459
      %v2467 = vsel %vm2439, %v2427, %v2461
      %v2468 = vsel %vm2440, %v2432, %v2463
      %v2469 = vsel %vm2441, %v2435, %v2465
      %2474 = vrot.lane.b32.xlu0 %v2424, 32
      %v2475 = vpop.permute.xlu0 %2474
      %2476 = vrot.lane.b32.xlu0 %v2427, 32
      %v2477 = vpop.permute.xlu0 %2476
      %2478 = vrot.lane.b32.xlu0 %v2432, 32
      %v2479 = vpop.permute.xlu0 %2478
      %2480 = vrot.lane.b32.xlu0 %v2435, 32
      %v2481 = vpop.permute.xlu0 %2480
      %v2486 = vmul.f32 %v2424, %v2475
      %v2487 = vmul.f32 %v2427, %v2477
      %v2488 = vmul.f32 %v2432, %v2479
      %v2489 = vmul.f32 %v2435, %v2481
      %2494 = vrot.lane.b32.xlu0 %v2486, 80
      %v2495 = vpop.permute.xlu0 %2494
      %2496 = vrot.lane.b32.xlu0 %v2487, 80
      %v2497 = vpop.permute.xlu0 %2496
      %2498 = vrot.lane.b32.xlu0 %v2488, 80
      %v2499 = vpop.permute.xlu0 %2498
      %2500 = vrot.lane.b32.xlu0 %v2489, 80
      %v2501 = vpop.permute.xlu0 %2500
      %v2506 = vsel %vm1007, %v2495, 0.0
      %2507 = vadd.xlane.f32.xlu0 %v2506
      %v2508 = vpop.xlane.xlu0 %2507
      %v2509 = vsel %vm1007, %v2497, 0.0
      %2510 = vadd.xlane.f32.xlu0 %v2509
      %v2511 = vpop.xlane.xlu0 %2510
      %v2512 = vsel %vm1007, %v2499, 0.0
      %2513 = vadd.xlane.f32.xlu0 %v2512
      %v2514 = vpop.xlane.xlu0 %2513
      %v2515 = vsel %vm1007, %v2501, 0.0
      %2516 = vadd.xlane.f32.xlu0 %v2515
      %v2517 = vpop.xlane.xlu0 %2516
      %v2518 = vmul.f32 %v2355, %v2466
      %v2519 = vmul.f32 %v2358, %v2467
      %v2520 = vmul.f32 %v2363, %v2468
      %v2521 = vmul.f32 %v2366, %v2469
      %v2522 = vmul.f32 %v2518, %v2508
      %v2523 = vmul.f32 %v2519, %v2511
      %v2524 = vmul.f32 %v2520, %v2514
      %v2525 = vmul.f32 %v2521, %v2517
      %v2526 = vsub.f32 0.0, %v2522
      %v2527 = vsub.f32 0.0, %v2523
      %v2528 = vsub.f32 0.0, %v2524
      %v2529 = vsub.f32 0.0, %v2525
      %v2530 = vmul.f32 %v2526, 1.442695
      %v2531 = vpow.pop %v2530
      %v2532 = vmul.f32 %v2527, 1.442695
      %v2533 = vpow.pop %v2532
      %v2534 = vmul.f32 %v2528, 1.442695
      %v2535 = vpow.pop %v2534
      %v2536 = vmul.f32 %v2529, 1.442695
      %v2537 = vpow.pop %v2536
      %v2538 = vadd.f32 %v2531, 1.0
      %v2539 = vadd.f32 %v2533, 1.0
      %v2540 = vadd.f32 %v2535, 1.0
      %v2541 = vadd.f32 %v2537, 1.0
      %v2542 = vrcp.pop %v2538
      %v2543 = vmul.f32 1.0, %v2542
      %v2544 = vrcp.pop %v2539
      %v2545 = vmul.f32 1.0, %v2544
      %v2546 = vrcp.pop %v2540
      %v2547 = vmul.f32 1.0, %v2546
      %v2548 = vrcp.pop %v2541
      %v2549 = vmul.f32 1.0, %v2548
      %v2550 = vmul.f32 %v2522, %v2543
      %v2551 = vmul.f32 %v2523, %v2545
      %v2552 = vmul.f32 %v2524, %v2547
      %v2553 = vmul.f32 %v2525, %v2549
      %v2554 = vsub.f32 0.0, %v2043
      %v2555 = vsub.f32 0.0, %v2046
      %v2556 = vsub.f32 0.0, %v2051
      %v2557 = vsub.f32 0.0, %v2054
      %v2558 = vmul.f32 %v2554, 1.442695
      %v2559 = vpow.pop %v2558
      %v2560 = vmul.f32 %v2555, 1.442695
      %v2561 = vpow.pop %v2560
      %v2562 = vmul.f32 %v2556, 1.442695
      %v2563 = vpow.pop %v2562
      %v2564 = vmul.f32 %v2557, 1.442695
      %v2565 = vpow.pop %v2564
      %v2566 = vadd.f32 %v2559, 1.0
      %v2567 = vadd.f32 %v2561, 1.0
      %v2568 = vadd.f32 %v2563, 1.0
      %v2569 = vadd.f32 %v2565, 1.0
      %v2570 = vrcp.pop %v2566
      %v2571 = vmul.f32 1.0, %v2570
      %v2572 = vrcp.pop %v2567
      %v2573 = vmul.f32 1.0, %v2572
      %v2574 = vrcp.pop %v2568
      %v2575 = vmul.f32 1.0, %v2574
      %v2576 = vrcp.pop %v2569
      %v2577 = vmul.f32 1.0, %v2576
      %v2578 = vmul.f32 %v2043, %v2571
      %v2579 = vmul.f32 %v2046, %v2573
      %v2580 = vmul.f32 %v2051, %v2575
      %v2581 = vmul.f32 %v2054, %v2577
      %2586 = vrot.lane.b32.xlu0 %v2578, 112
      %v2587 = vpop.permute.xlu0 %2586
      %2588 = vrot.lane.b32.xlu0 %v2579, 112
      %v2589 = vpop.permute.xlu0 %2588
      %2590 = vrot.lane.b32.xlu0 %v2580, 112
      %v2591 = vpop.permute.xlu0 %2590
      %2592 = vrot.lane.b32.xlu0 %v2581, 112
      %v2593 = vpop.permute.xlu0 %2592
      %v2598 = vmul.f32 %v2550, %v2587
      %v2599 = vmul.f32 %v2551, %v2589
      %v2600 = vmul.f32 %v2552, %v2591
      %v2601 = vmul.f32 %v2553, %v2593
      %v2602 = vpack.c.bf16 %v2599, %v2598
      %v2603 = vpack.c.bf16 %v2601, %v2600
      %v2605 = vlaneseq
      %v2606 = vshrl.u32 %v2605, 7
      %v2607 = vsub.s32 0, %v2606
      %v2608 = vrot.slane %v1948, %v2607
      %v2612 = vunpack.c.l.b16 %v1945
      %v2613 = vunpack.c.l.b16 %v1946
      %v2614 = vpack.c.b16 %v2613, %v2612
      %v2617 = vsel %vm814, %v2602, 0
      %v2620 = vsel %vm814, %v2603, 0
      %2622 = vmatprep.subr.bf16.mxu0 0
      %2623 = vmatpush1.bf16.msra.mxu0 0
      %2624 = vmatprep.subr.bf16.mxu0 0
      %2625 = vmatpush1.bf16.msra.mxu0 0
      %2626 = vmatprep.subr.bf16.mxu0 0
      %2627 = vmatpush1.bf16.msra.mxu0 0
      %2628 = vmatprep.subr.bf16.mxu0 0
      %2629 = vmatpush1.bf16.msra.mxu0 0
      %2630 = vmatprep.subr.bf16.mxu0 0
      %2631 = vmatpush1.bf16.msra.mxu0 0
      %2632 = vmatprep.subr.bf16.mxu0 0
      %2633 = vmatpush1.bf16.msra.mxu0 0
      %2634 = vmatprep.subr.bf16.mxu0 0
      %2635 = vmatpush1.bf16.msra.mxu0 0
      %2636 = vmatprep.subr.bf16.mxu0 0
      %2637 = vmatpush1.bf16.msra.mxu0 %v2614
      %2638 = vmatprep.subr.bf16.mxu0 0
      %2639 = vmatpush2.bf16.msra.mxu0 0
      %2640 = vmatprep.subr.bf16.mxu0 0
      %2641 = vmatpush2.bf16.msra.mxu0 0
      %2642 = vmatprep.subr.bf16.mxu0 0
      %2643 = vmatpush2.bf16.msra.mxu0 0
      %2644 = vmatprep.subr.bf16.mxu0 0
      %2645 = vmatpush2.bf16.msra.mxu0 0
      %2646 = vmatprep.subr.bf16.mxu0 0
      %2647 = vmatpush2.bf16.msra.mxu0 0
      %2648 = vmatprep.subr.bf16.mxu0 0
      %2649 = vmatpush2.bf16.msra.mxu0 0
      %2650 = vmatprep.subr.bf16.mxu0 0
      %2651 = vmatpush2.bf16.msra.mxu0 0
      %2652 = vmatprep.subr.bf16.mxu0 0
      %2653 = vmatpush2.bf16.msra.mxu0 0
      %2654 = vmatprep.mubr.bf16.mxu0 0
      %2655 = vmatmul.mubr.bf16.gmra.mxu0 %v2617
      %v2656 = vpop.f32.mrf.mxu0
      %v2657 = vadd.f32 %v2608, %v2656
      %v2658 = vpop.f32.mrf.mxu0
      %v2659 = vpop.f32.mrf.mxu0
      %v2660 = vadd.f32 %v2608, %v2659
      %v2661 = vpop.f32.mrf.mxu0
      %2662 = vmatprep.mubr.bf16.mxu0 0
      %2663 = vmatmul.mubr.bf16.gmra.mxu0 %v2620
      %v2664 = vpop.f32.mrf.mxu0
      %v2665 = vadd.f32 %v2608, %v2664
      %v2666 = vpop.f32.mrf.mxu0
      %v2667 = vpop.f32.mrf.mxu0
      %v2668 = vadd.f32 %v2608, %v2667
      %v2669 = vpop.f32.mrf.mxu0
      %2670 = vdwg.mxu0
      %2671 = vst.msk [vmem:[%s420] sm:$0xff] %vm447, %v2657
      %2672 = vst.msk [vmem:[%s420 + $0x8] sm:$0xff] %vm447, %v2660
      %2673 = vst.msk [vmem:[%s420 + $0x10] sm:$0xff] %vm447, %v2665
      %2674 = vst.msk [vmem:[%s420 + $0x18] sm:$0xff] %vm447, %v2668
      %s2675 = smul.u32 2, %s23
      %p2676 = scmp.lt.s32.totalorder %s2675, 3
      %s2677 = scalar_select %p2676, %s2675, 3
      %s2678 = smul.addr %s2677, 2
      %s2679 = smul.addr %s2678, 8
      %s2680 = scalar_lea.vmem %s12, %s2679
      // Predicated region
      $region69: #{tpu_custom_call.1} parent=67 // pred_check
        %p2681 = pneg %p298
      $region70: #{tpu_custom_call.1} parent=67 // pred_check_branch
        %2683 = sbr.rel (%p2681) target = $region72
      $region71: #{tpu_custom_call.1} parent=67 // pred_region
        %s2684 = smul.u32 2, %s23
      $region72: #{tpu_custom_call.1} parent=67 // pred_fallthru
        _
    $region68: #{tpu_custom_call.1} parent=5 // pred_fallthru
      _
    %p2685 = scmp.le.s32.totalorder 2, %s18
    // Predicated region
    $region73: #{tpu_custom_call.1} parent=5 // pred_check
      %p2686 = pneg %p2685
    $region74: #{tpu_custom_call.1} parent=5 // pred_check_branch
      %2688 = sbr.rel (%p2686) target = $region76
    $region75: #{tpu_custom_call.1} parent=5 // pred_region
      %s2689 = ssub.s32 %s18, 2
      // Predicated region
      $region77: #{tpu_custom_call.1} parent=75 // pred_check
        %p2690 = pneg %p304
      $region78: #{tpu_custom_call.1} parent=75 // pred_check_branch
        %2692 = sbr.rel (%p2690) target = $region80
      $region79: #{tpu_custom_call.1} parent=75 // pred_region
        %s2693 = smul.u32 2, %s24
        %p2694 = scmp.lt.s32.totalorder %s2693, 3
        %s2695 = scalar_select %p2694, %s2693, 3
        %s2696 = smul.addr %s2695, 2
        %s2697 = smul.addr %s2696, 8
        %s2698 = scalar_lea.vmem %s12, %s2697
      $region80: #{tpu_custom_call.1} parent=75 // pred_fallthru
        _
    $region76: #{tpu_custom_call.1} parent=5 // pred_fallthru
      _
  $region6: #{tpu_custom_call.1} parent=0 // loop_footer
    %s22 = sadd.s32 1, %s18
  $region7: #{tpu_custom_call.1} parent=0 // loop_footer_branch
    %17 = sbr.rel target = $region3
  $region8: #{tpu_custom_call.1} parent=0 // loop_exit
    _

</llo_original>
